<compile_context>
chip_gen: v7x
topology: tpu7x:2x2x1
jax: 0.10.0
libtpu: 0.0.40
codegen_flags: <defaults>
</compile_context>

<pallas_src>
import jax
import jax.numpy as jnp
import numpy as np
from jax import lax
from jax.experimental import pallas as pl
from jax.experimental.pallas import tpu as pltpu


def _mxu(a, b):
    """MXU matmul: bf16 operands, f32 accumulation."""
    return jnp.dot(a.astype(jnp.bfloat16), b.astype(jnp.bfloat16),
                   preferred_element_type=jnp.float32)


def bigru_head_kernel(xemb_ref,                            # (1, T*bt, E) f32, t-major rows
                      wih_f, bih_f, whrz_f, whn_f, bhn_f,  # fwd GRU (lane-packed)
                      wih_b, bih_b, whrz_b, whn_b, bhn_b,  # bwd GRU (lane-packed)
                      w1a, b1a, w2a, b2a,                  # LinBlock 0 (on h_n[0])
                      w1b, b1b, w2b, b2b,                  # LinBlock 1 (on h_n[1])
                      wf0, wf1, bf,                        # final linear, split + lane padded
                      out_ref,                             # (bt, C_pad)
                      gi_f_scr, gi_b_scr):                 # (T*bt, G_pad) f32 scratch
    bt = out_ref.shape[0]                  # batch tile (multiple of 8)
    Tn = gi_f_scr.shape[0] // bt           # sequence length
    H = whn_f.shape[0]

    # ---- 1) Lane-packed input-side gate pre-activations for ALL timesteps ----
    # gate lanes: [0:H)=r  [H:2H)=z  [2H:3H)=n  [3H:G_pad)=zero pad
    # (r/z halves of b_hh are folded into bih_* by the wrapper; b_hn stays
    #  inside the r*(...) term per PyTorch GRU semantics.)
    embeds = xemb_ref[0]                                        # (T*bt, E)
    gi_f_scr[...] = _mxu(embeds, wih_f[...]) + bih_f[...]
    gi_b_scr[...] = _mxu(embeds, wih_b[...]) + bih_b[...]

    # ---- 2) Bidirectional GRU recurrence (fused r/z hidden matmul) ------------
    w_rz_f = whrz_f[...].astype(jnp.bfloat16)    # (H, 2H)  [W_hr | W_hz]
    w_n_f = whn_f[...].astype(jnp.bfloat16)      # (H, H)
    b_n_f = bhn_f[...]                           # (1, H) f32
    w_rz_b = whrz_b[...].astype(jnp.bfloat16)
    w_n_b = whn_b[...].astype(jnp.bfloat16)
    b_n_b = bhn_b[...]

    def cell(h, gi, w_rz, w_n, b_n):
        rz = jax.nn.sigmoid(gi[:, :2 * H] + _mxu(h, w_rz))      # (bt, 2H) one slab
        r = rz[:, :H]
        z = rz[:, H:2 * H]
        n = jnp.tanh(gi[:, 2 * H:3 * H] + r * (_mxu(h, w_n) + b_n))
        return (1.0 - z) * n + z * h

    def step(t, carry):
        h_f, h_b = carry
        rf = pl.multiple_of(t * bt, 8)                          # fwd: time t
        rb = pl.multiple_of((Tn - 1 - t) * bt, 8)               # bwd: reversed time
        h_f = cell(h_f, gi_f_scr[pl.ds(rf, bt), :], w_rz_f, w_n_f, b_n_f)
        h_b = cell(h_b, gi_b_scr[pl.ds(rb, bt), :], w_rz_b, w_n_b, b_n_b)
        return h_f, h_b

    h0 = (jnp.zeros((bt, H), jnp.float32), jnp.zeros((bt, H), jnp.float32))
    h_f, h_b = lax.fori_loop(0, Tn, step, h0, unroll=(Tn <= 32))

    # ---- 3) LinBlocks (Dropout = identity in eval) + final linear + logsoftmax
    a0 = jnp.maximum(_mxu(h_f, w1a[...]) + b1a[...], 0.0)
    o0 = _mxu(a0, w2a[...]) + b2a[...]
    a1 = jnp.maximum(_mxu(h_b, w1b[...]) + b1b[...], 0.0)
    o1 = _mxu(a1, w2b[...]) + b2b[...]

    # concat([o0, o1], dim=1) @ Wf.T  ==  o0 @ Wf0 + o1 @ Wf1   (no lane concat)
    logits = _mxu(o0, wf0[...]) + _mxu(o1, wf1[...]) + bf[...]  # (bt, C_pad) f32
    m = jnp.max(logits, axis=1, keepdims=True)
    lse = jnp.log(jnp.sum(jnp.exp(logits - m), axis=1, keepdims=True)) + m
    out_ref[...] = logits - lse


def _round_up(a, b):
    return (a + b - 1) // b * b


def seq_to_label_forward(x, p):
    """x: (B, T) int token ids; p: dict of PyTorch-layout f32 parameters."""
    B, T = x.shape
    V, E = p["emb"].shape
    H = p["w_hh_f"].shape[1]
    LIN_OUT = p["lb0_w2"].shape[0]
    C = p["w_final"].shape[0]
    f32 = jnp.float32

    # Lane/sublane friendly sizes.
    C_pad = _round_up(C, 128)
    G_pad = _round_up(3 * H, 128)          # packed [r|z|n] gate lanes per direction
    B_pad8 = _round_up(B, 8)
    if B_pad8 <= 128:
        B_TILE = B_pad8
    else:
        # >=2 grid steps so v7x's second TensorCore gets work; keep tiles >=128 rows.
        B_TILE = min(256, max(128, _round_up((B_pad8 + 1) // 2, 8)))
    B_pad = _round_up(B_pad8, B_TILE)
    nb = B_pad // B_TILE

    # ---- Embedding lookup in the wrapper (XLA gather); stream activations in.
    x_ids = jnp.clip(x.astype(jnp.int32), 0, V - 1)             # guard OOB token ids
    x_emb = p["emb"].astype(f32)[x_ids]                         # (B, T, E)
    x_emb = jnp.transpose(x_emb, (1, 0, 2))                     # (T, B, E)
    x_emb = jnp.pad(x_emb, ((0, 0), (0, B_pad - B), (0, 0)))    # (T, B_pad, E)
    # t-major rows per batch tile: (nb, T*B_TILE, E), row = t*B_TILE + b.
    x_emb = (x_emb.reshape(T, nb, B_TILE, E)
             .transpose(1, 0, 2, 3)
             .reshape(nb, T * B_TILE, E))

    def pack_dir(w_ih, w_hh, b_ih, b_hh):
        """Per-direction packed GRU weights (PyTorch gate order r, z, n)."""
        wih = jnp.concatenate(
            [w_ih[0:H].T, w_ih[H:2 * H].T, w_ih[2 * H:3 * H].T], axis=1)
        wih = jnp.pad(wih, ((0, 0), (0, G_pad - 3 * H))).astype(f32)      # (E, G_pad)
        bih = jnp.concatenate([b_ih[0:H] + b_hh[0:H],
                               b_ih[H:2 * H] + b_hh[H:2 * H],
                               b_ih[2 * H:3 * H],
                               jnp.zeros((G_pad - 3 * H,), f32)])[None, :].astype(f32)
        whrz = jnp.concatenate([w_hh[0:H].T, w_hh[H:2 * H].T], axis=1).astype(f32)
        whn = w_hh[2 * H:3 * H].T.astype(f32)                              # (H, H)
        bhn = b_hh[2 * H:3 * H][None, :].astype(f32)                       # (1, H)
        return wih, bih, whrz, whn, bhn

    wf_t = p["w_final"].T.astype(f32)                            # (2*LIN_OUT, C)
    wf0 = jnp.pad(wf_t[:LIN_OUT], ((0, 0), (0, C_pad - C)))
    wf1 = jnp.pad(wf_t[LIN_OUT:], ((0, 0), (0, C_pad - C)))
    bf = jnp.concatenate([p["b_final"].astype(f32),
                          jnp.full((C_pad - C,), -1e9, f32)])[None, :]

    weight_args = (
        *pack_dir(p["w_ih_f"], p["w_hh_f"], p["b_ih_f"], p["b_hh_f"]),
        *pack_dir(p["w_ih_b"], p["w_hh_b"], p["b_ih_b"], p["b_hh_b"]),
        p["lb0_w1"].T.astype(f32), p["lb0_b1"].astype(f32)[None, :],
        p["lb0_w2"].T.astype(f32), p["lb0_b2"].astype(f32)[None, :],
        p["lb1_w1"].T.astype(f32), p["lb1_b1"].astype(f32)[None, :],
        p["lb1_w2"].T.astype(f32), p["lb1_b2"].astype(f32)[None, :],
        wf0, wf1, bf,
    )

    def full_spec(a):       # whole array resident in VMEM, same block every grid step
        nd = a.ndim
        return pl.BlockSpec(a.shape, lambda *_: (0,) * nd)

    in_specs = ([pl.BlockSpec((1, T * B_TILE, E), lambda i: (i, 0, 0))]
                + [full_spec(a) for a in weight_args])

    scratch_shapes = [pltpu.VMEM((T * B_TILE, G_pad), f32),
                      pltpu.VMEM((T * B_TILE, G_pad), f32)]

    # Explicit scoped-VMEM budget (pipeline double-buffers each input block).
    in_bytes = sum(int(np.prod(a.shape)) * 4 for a in weight_args) + T * B_TILE * E * 4
    out_bytes = B_TILE * C_pad * 4
    scr_bytes = 2 * T * B_TILE * G_pad * 4
    vmem_limit = int(min(max(2 * (2 * (in_bytes + out_bytes) + scr_bytes), 16 * 2**20),
                         48 * 2**20))

    out = pl.pallas_call(
        bigru_head_kernel,
        out_shape=jax.ShapeDtypeStruct((B_pad, C_pad), f32),
        grid_spec=pltpu.PrefetchScalarGridSpec(
            num_scalar_prefetch=0,
            grid=(nb,),
            in_specs=in_specs,
            out_specs=pl.BlockSpec((B_TILE, C_pad), lambda i: (i, 0)),
            scratch_shapes=scratch_shapes,
        ),
        compiler_params=pltpu.CompilerParams(
            dimension_semantics=("parallel",),
            vmem_limit_bytes=vmem_limit),
    )(x_emb, *weight_args)
    return out[:B, :C]


# ----------------------------------------------------------------------------
# Pure-JAX f32 mirror of the PyTorch module (num_gru_layers=1, eval mode).
# ----------------------------------------------------------------------------
def _mm_f32(a, b):
    return jnp.dot(a, b, precision=lax.Precision.HIGHEST,
                   preferred_element_type=jnp.float32)


def reference_forward(x, p):
    H = p["w_hh_f"].shape[1]
    embeds = p["emb"][x].astype(jnp.float32)          # (B, T, E)
    tm = jnp.swapaxes(embeds, 0, 1)                   # (T, B, E)

    def run_dir(seq, w_ih, w_hh, b_ih, b_hh):
        def step(h, x_t):
            gi = _mm_f32(x_t, w_ih.T) + b_ih
            gh = _mm_f32(h, w_hh.T) + b_hh
            r = jax.nn.sigmoid(gi[:, :H] + gh[:, :H])
            z = jax.nn.sigmoid(gi[:, H:2 * H] + gh[:, H:2 * H])
            n = jnp.tanh(gi[:, 2 * H:] + r * gh[:, 2 * H:])
            return (1.0 - z) * n + z * h, None
        h0 = jnp.zeros((seq.shape[1], H), jnp.float32)
        h_n, _ = lax.scan(step, h0, seq)
        return h_n

    h_fwd = run_dir(tm, p["w_ih_f"], p["w_hh_f"], p["b_ih_f"], p["b_hh_f"])
    h_bwd = run_dir(tm[::-1], p["w_ih_b"], p["w_hh_b"], p["b_ih_b"], p["b_hh_b"])

    def linblock(h, w1, b1, w2, b2):  # Dropout->Linear->ReLU->Dropout->Linear (eval)
        return _mm_f32(jnp.maximum(_mm_f32(h, w1.T) + b1, 0.0), w2.T) + b2

    o0 = linblock(h_fwd, p["lb0_w1"], p["lb0_b1"], p["lb0_w2"], p["lb0_b2"])
    o1 = linblock(h_bwd, p["lb1_w1"], p["lb1_b1"], p["lb1_w2"], p["lb1_b2"])
    logits = _mm_f32(jnp.concatenate([o0, o1], axis=1), p["w_final"].T) + p["b_final"]
    return jax.nn.log_softmax(logits, axis=1)


if __name__ == "__main__":
    # Small, module-consistent shapes (num_gru_layers = 1).
    V, E, H, C = 20, 16, 32, 5            # vocab, embedding_dim, hidden_gru_size, num_classes
    LIN_OUT = H // 2 if H > 100 else 50   # LinBlock output size per the module rule
    B, T = 4, 8                           # batch, sequence length

    key = jax.random.PRNGKey(0)
    ks = jax.random.split(key, 20)
    gb = 1.0 / np.sqrt(H)
    lb = 1.0 / np.sqrt(H)
    fb = 1.0 / np.sqrt(2 * LIN_OUT)

    def u(k, shape, bound):
        return jax.random.uniform(k, shape, jnp.float32, -bound, bound)

    p = dict(
        emb=jax.random.normal(ks[0], (V, E), jnp.float32),
        # forward direction (h_n[0])
        w_ih_f=u(ks[1], (3 * H, E), gb), w_hh_f=u(ks[2], (3 * H, H), gb),
        b_ih_f=u(ks[3], (3 * H,), gb), b_hh_f=u(ks[4], (3 * H,), gb),
        # reverse direction (h_n[1])
        w_ih_b=u(ks[5], (3 * H, E), gb), w_hh_b=u(ks[6], (3 * H, H), gb),
        b_ih_b=u(ks[7], (3 * H,), gb), b_hh_b=u(ks[8], (3 * H,), gb),
        # LinBlock 0 / 1
        lb0_w1=u(ks[9], (H, H), lb), lb0_b1=u(ks[10], (H,), lb),
        lb0_w2=u(ks[11], (LIN_OUT, H), lb), lb0_b2=u(ks[12], (LIN_OUT,), lb),
        lb1_w1=u(ks[13], (H, H), lb), lb1_b1=u(ks[14], (H,), lb),
        lb1_w2=u(ks[15], (LIN_OUT, H), lb), lb1_b2=u(ks[16], (LIN_OUT,), lb),
        # final Linear(2*LIN_OUT, C)
        w_final=u(ks[17], (C, 2 * LIN_OUT), fb), b_final=u(ks[18], (C,), fb),
    )
    x = jax.random.randint(ks[19], (B, T), 0, V, jnp.int32)

    out = jax.block_until_ready(seq_to_label_forward(x, p))
    ref = reference_forward(x, p)

    # The kernel feeds bf16 operands to the MXU (f32 accumulation / f32
    # element-wise math); tolerance accounts for bf16 operand rounding vs. the
    # full-f32 reference (observed error is ~1e-2 worst case at these scales).
    np.testing.assert_allclose(np.asarray(out), np.asarray(ref),
                               rtol=5e-2, atol=5e-2)

    print("KERNEL_OK")
</pallas_src>

<mosaic_0001>
module attributes {stable_mosaic.version = 11 : i64} {
  func.func @bigru_head_kernel(%arg0: i32, %arg1: memref<1x64x16xf32, #tpu.memory_space<vmem>>, %arg2: memref<16x128xf32, #tpu.memory_space<vmem>>, %arg3: memref<1x128xf32, #tpu.memory_space<vmem>>, %arg4: memref<32x64xf32, #tpu.memory_space<vmem>>, %arg5: memref<32x32xf32, #tpu.memory_space<vmem>>, %arg6: memref<1x32xf32, #tpu.memory_space<vmem>>, %arg7: memref<16x128xf32, #tpu.memory_space<vmem>>, %arg8: memref<1x128xf32, #tpu.memory_space<vmem>>, %arg9: memref<32x64xf32, #tpu.memory_space<vmem>>, %arg10: memref<32x32xf32, #tpu.memory_space<vmem>>, %arg11: memref<1x32xf32, #tpu.memory_space<vmem>>, %arg12: memref<32x32xf32, #tpu.memory_space<vmem>>, %arg13: memref<1x32xf32, #tpu.memory_space<vmem>>, %arg14: memref<32x50xf32, #tpu.memory_space<vmem>>, %arg15: memref<1x50xf32, #tpu.memory_space<vmem>>, %arg16: memref<32x32xf32, #tpu.memory_space<vmem>>, %arg17: memref<1x32xf32, #tpu.memory_space<vmem>>, %arg18: memref<32x50xf32, #tpu.memory_space<vmem>>, %arg19: memref<1x50xf32, #tpu.memory_space<vmem>>, %arg20: memref<50x128xf32, #tpu.memory_space<vmem>>, %arg21: memref<50x128xf32, #tpu.memory_space<vmem>>, %arg22: memref<1x128xf32, #tpu.memory_space<vmem>>, %arg23: memref<8x128xf32, #tpu.memory_space<vmem>>, %arg24: memref<64x128xf32, #tpu.memory_space<vmem>>, %arg25: memref<64x128xf32, #tpu.memory_space<vmem>>) attributes {dimension_semantics = [#tpu.dimension_semantics<parallel>], iteration_bounds = array<i64: 1>, scalar_prefetch = 0 : i64, scratch_operands = 2 : i64, tpu.core_type = #tpu.core_type<tc>, window_params = [{transform_indices = @transform_0, window_bounds = array<i64: 1, 64, 16>}, {pipeline_mode = #tpu.pipeline_mode<synchronous>, transform_indices = @transform_1, window_bounds = array<i64: 16, 128>}, {pipeline_mode = #tpu.pipeline_mode<synchronous>, transform_indices = @transform_2, window_bounds = array<i64: 1, 128>}, {pipeline_mode = #tpu.pipeline_mode<synchronous>, transform_indices = @transform_3, window_bounds = array<i64: 32, 64>}, {pipeline_mode = #tpu.pipeline_mode<synchronous>, transform_indices = @transform_4, window_bounds = array<i64: 32, 32>}, {pipeline_mode = #tpu.pipeline_mode<synchronous>, transform_indices = @transform_5, window_bounds = array<i64: 1, 32>}, {pipeline_mode = #tpu.pipeline_mode<synchronous>, transform_indices = @transform_6, window_bounds = array<i64: 16, 128>}, {pipeline_mode = #tpu.pipeline_mode<synchronous>, transform_indices = @transform_7, window_bounds = array<i64: 1, 128>}, {pipeline_mode = #tpu.pipeline_mode<synchronous>, transform_indices = @transform_8, window_bounds = array<i64: 32, 64>}, {pipeline_mode = #tpu.pipeline_mode<synchronous>, transform_indices = @transform_9, window_bounds = array<i64: 32, 32>}, {pipeline_mode = #tpu.pipeline_mode<synchronous>, transform_indices = @transform_10, window_bounds = array<i64: 1, 32>}, {pipeline_mode = #tpu.pipeline_mode<synchronous>, transform_indices = @transform_11, window_bounds = array<i64: 32, 32>}, {pipeline_mode = #tpu.pipeline_mode<synchronous>, transform_indices = @transform_12, window_bounds = array<i64: 1, 32>}, {pipeline_mode = #tpu.pipeline_mode<synchronous>, transform_indices = @transform_13, window_bounds = array<i64: 32, 50>}, {pipeline_mode = #tpu.pipeline_mode<synchronous>, transform_indices = @transform_14, window_bounds = array<i64: 1, 50>}, {pipeline_mode = #tpu.pipeline_mode<synchronous>, transform_indices = @transform_15, window_bounds = array<i64: 32, 32>}, {pipeline_mode = #tpu.pipeline_mode<synchronous>, transform_indices = @transform_16, window_bounds = array<i64: 1, 32>}, {pipeline_mode = #tpu.pipeline_mode<synchronous>, transform_indices = @transform_17, window_bounds = array<i64: 32, 50>}, {pipeline_mode = #tpu.pipeline_mode<synchronous>, transform_indices = @transform_18, window_bounds = array<i64: 1, 50>}, {pipeline_mode = #tpu.pipeline_mode<synchronous>, transform_indices = @transform_19, window_bounds = array<i64: 50, 128>}, {pipeline_mode = #tpu.pipeline_mode<synchronous>, transform_indices = @transform_20, window_bounds = array<i64: 50, 128>}, {pipeline_mode = #tpu.pipeline_mode<synchronous>, transform_indices = @transform_21, window_bounds = array<i64: 1, 128>}, {transform_indices = @transform_22, window_bounds = array<i64: 8, 128>}]} {
    %c0 = arith.constant 0 : index
    %c0_0 = arith.constant 0 : index
    %c0_1 = arith.constant 0 : index
    %0 = vector.load %arg1[%c0, %c0_0, %c0_1] : memref<1x64x16xf32, #tpu.memory_space<vmem>>, vector<1x64x16xf32>
    %1 = vector.shape_cast %0 : vector<1x64x16xf32> to vector<64x16xf32>
    %c0_2 = arith.constant 0 : index
    %c0_3 = arith.constant 0 : index
    %2 = vector.load %arg2[%c0_2, %c0_3] : memref<16x128xf32, #tpu.memory_space<vmem>>, vector<16x128xf32>
    %3 = arith.truncf %1 : vector<64x16xf32> to vector<64x16xbf16>
    %4 = arith.truncf %2 : vector<16x128xf32> to vector<16x128xbf16>
    %cst = arith.constant dense<0.000000e+00> : vector<64x128xf32>
    %5 = tpu.matmul %3, %4, %cst {dimension_numbers = #tpu.dot_dimension_numbers<[1], [0], [0], [1], [0, 0, 1, 1], [], []>} : vector<64x16xbf16>, vector<16x128xbf16>, vector<64x128xf32> -> vector<64x128xf32>
    %c0_4 = arith.constant 0 : index
    %c0_5 = arith.constant 0 : index
    %6 = vector.load %arg3[%c0_4, %c0_5] : memref<1x128xf32, #tpu.memory_space<vmem>>, vector<1x128xf32>
    %7 = vector.broadcast %6 : vector<1x128xf32> to vector<64x128xf32>
    %8 = arith.addf %5, %7 : vector<64x128xf32>
    %c0_6 = arith.constant 0 : index
    %c0_7 = arith.constant 0 : index
    %9 = vector.load %arg24[%c0_6, %c0_7] : memref<64x128xf32, #tpu.memory_space<vmem>>, vector<64x128xf32>
    tpu.vector_store %arg24[%c0_6, %c0_7], %8 {strides = array<i32>} : memref<64x128xf32, #tpu.memory_space<vmem>>, vector<64x128xf32>,
    %c0_8 = arith.constant 0 : index
    %c0_9 = arith.constant 0 : index
    %10 = vector.load %arg7[%c0_8, %c0_9] : memref<16x128xf32, #tpu.memory_space<vmem>>, vector<16x128xf32>
    %11 = arith.truncf %1 : vector<64x16xf32> to vector<64x16xbf16>
    %12 = arith.truncf %10 : vector<16x128xf32> to vector<16x128xbf16>
    %cst_10 = arith.constant dense<0.000000e+00> : vector<64x128xf32>
    %13 = tpu.matmul %11, %12, %cst_10 {dimension_numbers = #tpu.dot_dimension_numbers<[1], [0], [0], [1], [0, 0, 1, 1], [], []>} : vector<64x16xbf16>, vector<16x128xbf16>, vector<64x128xf32> -> vector<64x128xf32>
    %c0_11 = arith.constant 0 : index
    %c0_12 = arith.constant 0 : index
    %14 = vector.load %arg8[%c0_11, %c0_12] : memref<1x128xf32, #tpu.memory_space<vmem>>, vector<1x128xf32>
    %15 = vector.broadcast %14 : vector<1x128xf32> to vector<64x128xf32>
    %16 = arith.addf %13, %15 : vector<64x128xf32>
    %c0_13 = arith.constant 0 : index
    %c0_14 = arith.constant 0 : index
    %17 = vector.load %arg25[%c0_13, %c0_14] : memref<64x128xf32, #tpu.memory_space<vmem>>, vector<64x128xf32>
    tpu.vector_store %arg25[%c0_13, %c0_14], %16 {strides = array<i32>} : memref<64x128xf32, #tpu.memory_space<vmem>>, vector<64x128xf32>,
    %c0_15 = arith.constant 0 : index
    %c0_16 = arith.constant 0 : index
    %18 = vector.load %arg4[%c0_15, %c0_16] : memref<32x64xf32, #tpu.memory_space<vmem>>, vector<32x64xf32>
    %19 = arith.truncf %18 : vector<32x64xf32> to vector<32x64xbf16>
    %c0_17 = arith.constant 0 : index
    %c0_18 = arith.constant 0 : index
    %20 = vector.load %arg5[%c0_17, %c0_18] : memref<32x32xf32, #tpu.memory_space<vmem>>, vector<32x32xf32>
    %21 = arith.truncf %20 : vector<32x32xf32> to vector<32x32xbf16>
    %c0_19 = arith.constant 0 : index
    %c0_20 = arith.constant 0 : index
    %22 = vector.load %arg6[%c0_19, %c0_20] : memref<1x32xf32, #tpu.memory_space<vmem>>, vector<1x32xf32>
    %c0_21 = arith.constant 0 : index
    %c0_22 = arith.constant 0 : index
    %23 = vector.load %arg9[%c0_21, %c0_22] : memref<32x64xf32, #tpu.memory_space<vmem>>, vector<32x64xf32>
    %24 = arith.truncf %23 : vector<32x64xf32> to vector<32x64xbf16>
    %c0_23 = arith.constant 0 : index
    %c0_24 = arith.constant 0 : index
    %25 = vector.load %arg10[%c0_23, %c0_24] : memref<32x32xf32, #tpu.memory_space<vmem>>, vector<32x32xf32>
    %26 = arith.truncf %25 : vector<32x32xf32> to vector<32x32xbf16>
    %c0_25 = arith.constant 0 : index
    %c0_26 = arith.constant 0 : index
    %27 = vector.load %arg11[%c0_25, %c0_26] : memref<1x32xf32, #tpu.memory_space<vmem>>, vector<1x32xf32>
    %cst_27 = arith.constant 0.000000e+00 : f32
    %28 = vector.broadcast %cst_27 : f32 to vector<8x32xf32>
    %cst_28 = arith.constant 0.000000e+00 : f32
    %29 = vector.broadcast %cst_28 : f32 to vector<8x32xf32>
    %c0_i32 = arith.constant 0 : i32
    %c8_i32 = arith.constant 8 : i32
    %30 = arith.muli %c0_i32, %c8_i32 : i32
    %31 = tpu.assume_multiple %30, 8 : i32
    %c7_i32 = arith.constant 7 : i32
    %32 = arith.subi %c7_i32, %c0_i32 : i32
    %c8_i32_29 = arith.constant 8 : i32
    %33 = arith.muli %32, %c8_i32_29 : i32
    %34 = tpu.assume_multiple %33, 8 : i32
    %35 = arith.index_cast %31 : i32 to index
    %c0_30 = arith.constant 0 : index
    %36 = vector.load %arg24[%35, %c0_30] : memref<64x128xf32, #tpu.memory_space<vmem>>, vector<8x128xf32>
    %37 = vector.extract_strided_slice %36 {offsets = [0, 0], sizes = [8, 64], strides = [1, 1]} : vector<8x128xf32> to vector<8x64xf32>
    %38 = arith.truncf %28 : vector<8x32xf32> to vector<8x32xbf16>
    %cst_31 = arith.constant dense<0.000000e+00> : vector<8x64xf32>
    %39 = tpu.matmul %38, %19, %cst_31 {dimension_numbers = #tpu.dot_dimension_numbers<[1], [0], [0], [1], [0, 0, 1, 1], [], []>} : vector<8x32xbf16>, vector<32x64xbf16>, vector<8x64xf32> -> vector<8x64xf32>
    %40 = arith.addf %37, %39 : vector<8x64xf32>
    %41 = arith.negf %40 : vector<8x64xf32>
    %42 = math.exp %41 : vector<8x64xf32>
    %cst_32 = arith.constant 1.000000e+00 : f32
    %43 = vector.broadcast %cst_32 : f32 to vector<8x64xf32>
    %44 = arith.addf %43, %42 : vector<8x64xf32>
    %45 = arith.divf %43, %44 : vector<8x64xf32>
    %46 = vector.extract_strided_slice %45 {offsets = [0, 0], sizes = [8, 32], strides = [1, 1]} : vector<8x64xf32> to vector<8x32xf32>
    %47 = vector.extract_strided_slice %45 {offsets = [0, 32], sizes = [8, 32], strides = [1, 1]} : vector<8x64xf32> to vector<8x32xf32>
    %48 = vector.extract_strided_slice %36 {offsets = [0, 64], sizes = [8, 32], strides = [1, 1]} : vector<8x128xf32> to vector<8x32xf32>
    %49 = arith.truncf %28 : vector<8x32xf32> to vector<8x32xbf16>
    %cst_33 = arith.constant dense<0.000000e+00> : vector<8x32xf32>
    %50 = tpu.matmul %49, %21, %cst_33 {dimension_numbers = #tpu.dot_dimension_numbers<[1], [0], [0], [1], [0, 0, 1, 1], [], []>} : vector<8x32xbf16>, vector<32x32xbf16>, vector<8x32xf32> -> vector<8x32xf32>
    %51 = vector.broadcast %22 : vector<1x32xf32> to vector<8x32xf32>
    %52 = arith.addf %50, %51 : vector<8x32xf32>
    %53 = arith.mulf %46, %52 : vector<8x32xf32>
    %54 = arith.addf %48, %53 : vector<8x32xf32>
    %55 = math.tanh %54 : vector<8x32xf32>
    %cst_34 = arith.constant 1.000000e+00 : f32
    %56 = vector.broadcast %cst_34 : f32 to vector<8x32xf32>
    %57 = arith.subf %56, %47 : vector<8x32xf32>
    %58 = arith.mulf %57, %55 : vector<8x32xf32>
    %59 = arith.mulf %47, %28 : vector<8x32xf32>
    %60 = arith.addf %58, %59 : vector<8x32xf32>
    %61 = arith.index_cast %34 : i32 to index
    %c0_35 = arith.constant 0 : index
    %62 = vector.load %arg25[%61, %c0_35] : memref<64x128xf32, #tpu.memory_space<vmem>>, vector<8x128xf32>
    %63 = vector.extract_strided_slice %62 {offsets = [0, 0], sizes = [8, 64], strides = [1, 1]} : vector<8x128xf32> to vector<8x64xf32>
    %64 = arith.truncf %29 : vector<8x32xf32> to vector<8x32xbf16>
    %cst_36 = arith.constant dense<0.000000e+00> : vector<8x64xf32>
    %65 = tpu.matmul %64, %24, %cst_36 {dimension_numbers = #tpu.dot_dimension_numbers<[1], [0], [0], [1], [0, 0, 1, 1], [], []>} : vector<8x32xbf16>, vector<32x64xbf16>, vector<8x64xf32> -> vector<8x64xf32>
    %66 = arith.addf %63, %65 : vector<8x64xf32>
    %67 = arith.negf %66 : vector<8x64xf32>
    %68 = math.exp %67 : vector<8x64xf32>
    %cst_37 = arith.constant 1.000000e+00 : f32
    %69 = vector.broadcast %cst_37 : f32 to vector<8x64xf32>
    %70 = arith.addf %69, %68 : vector<8x64xf32>
    %71 = arith.divf %69, %70 : vector<8x64xf32>
    %72 = vector.extract_strided_slice %71 {offsets = [0, 0], sizes = [8, 32], strides = [1, 1]} : vector<8x64xf32> to vector<8x32xf32>
    %73 = vector.extract_strided_slice %71 {offsets = [0, 32], sizes = [8, 32], strides = [1, 1]} : vector<8x64xf32> to vector<8x32xf32>
    %74 = vector.extract_strided_slice %62 {offsets = [0, 64], sizes = [8, 32], strides = [1, 1]} : vector<8x128xf32> to vector<8x32xf32>
    %75 = arith.truncf %29 : vector<8x32xf32> to vector<8x32xbf16>
    %cst_38 = arith.constant dense<0.000000e+00> : vector<8x32xf32>
    %76 = tpu.matmul %75, %26, %cst_38 {dimension_numbers = #tpu.dot_dimension_numbers<[1], [0], [0], [1], [0, 0, 1, 1], [], []>} : vector<8x32xbf16>, vector<32x32xbf16>, vector<8x32xf32> -> vector<8x32xf32>
    %77 = vector.broadcast %27 : vector<1x32xf32> to vector<8x32xf32>
    %78 = arith.addf %76, %77 : vector<8x32xf32>
    %79 = arith.mulf %72, %78 : vector<8x32xf32>
    %80 = arith.addf %74, %79 : vector<8x32xf32>
    %81 = math.tanh %80 : vector<8x32xf32>
    %cst_39 = arith.constant 1.000000e+00 : f32
    %82 = vector.broadcast %cst_39 : f32 to vector<8x32xf32>
    %83 = arith.subf %82, %73 : vector<8x32xf32>
    %84 = arith.mulf %83, %81 : vector<8x32xf32>
    %85 = arith.mulf %73, %29 : vector<8x32xf32>
    %86 = arith.addf %84, %85 : vector<8x32xf32>
    %c1_i32 = arith.constant 1 : i32
    %c8_i32_40 = arith.constant 8 : i32
    %87 = arith.muli %c1_i32, %c8_i32_40 : i32
    %88 = tpu.assume_multiple %87, 8 : i32
    %c7_i32_41 = arith.constant 7 : i32
    %89 = arith.subi %c7_i32_41, %c1_i32 : i32
    %c8_i32_42 = arith.constant 8 : i32
    %90 = arith.muli %89, %c8_i32_42 : i32
    %91 = tpu.assume_multiple %90, 8 : i32
    %92 = arith.index_cast %88 : i32 to index
    %c0_43 = arith.constant 0 : index
    %93 = vector.load %arg24[%92, %c0_43] : memref<64x128xf32, #tpu.memory_space<vmem>>, vector<8x128xf32>
    %94 = vector.extract_strided_slice %93 {offsets = [0, 0], sizes = [8, 64], strides = [1, 1]} : vector<8x128xf32> to vector<8x64xf32>
    %95 = arith.truncf %60 : vector<8x32xf32> to vector<8x32xbf16>
    %cst_44 = arith.constant dense<0.000000e+00> : vector<8x64xf32>
    %96 = tpu.matmul %95, %19, %cst_44 {dimension_numbers = #tpu.dot_dimension_numbers<[1], [0], [0], [1], [0, 0, 1, 1], [], []>} : vector<8x32xbf16>, vector<32x64xbf16>, vector<8x64xf32> -> vector<8x64xf32>
    %97 = arith.addf %94, %96 : vector<8x64xf32>
    %98 = arith.negf %97 : vector<8x64xf32>
    %99 = math.exp %98 : vector<8x64xf32>
    %cst_45 = arith.constant 1.000000e+00 : f32
    %100 = vector.broadcast %cst_45 : f32 to vector<8x64xf32>
    %101 = arith.addf %100, %99 : vector<8x64xf32>
    %102 = arith.divf %100, %101 : vector<8x64xf32>
    %103 = vector.extract_strided_slice %102 {offsets = [0, 0], sizes = [8, 32], strides = [1, 1]} : vector<8x64xf32> to vector<8x32xf32>
    %104 = vector.extract_strided_slice %102 {offsets = [0, 32], sizes = [8, 32], strides = [1, 1]} : vector<8x64xf32> to vector<8x32xf32>
    %105 = vector.extract_strided_slice %93 {offsets = [0, 64], sizes = [8, 32], strides = [1, 1]} : vector<8x128xf32> to vector<8x32xf32>
    %106 = arith.truncf %60 : vector<8x32xf32> to vector<8x32xbf16>
    %cst_46 = arith.constant dense<0.000000e+00> : vector<8x32xf32>
    %107 = tpu.matmul %106, %21, %cst_46 {dimension_numbers = #tpu.dot_dimension_numbers<[1], [0], [0], [1], [0, 0, 1, 1], [], []>} : vector<8x32xbf16>, vector<32x32xbf16>, vector<8x32xf32> -> vector<8x32xf32>
    %108 = vector.broadcast %22 : vector<1x32xf32> to vector<8x32xf32>
    %109 = arith.addf %107, %108 : vector<8x32xf32>
    %110 = arith.mulf %103, %109 : vector<8x32xf32>
    %111 = arith.addf %105, %110 : vector<8x32xf32>
    %112 = math.tanh %111 : vector<8x32xf32>
    %cst_47 = arith.constant 1.000000e+00 : f32
    %113 = vector.broadcast %cst_47 : f32 to vector<8x32xf32>
    %114 = arith.subf %113, %104 : vector<8x32xf32>
    %115 = arith.mulf %114, %112 : vector<8x32xf32>
    %116 = arith.mulf %104, %60 : vector<8x32xf32>
    %117 = arith.addf %115, %116 : vector<8x32xf32>
    %118 = arith.index_cast %91 : i32 to index
    %c0_48 = arith.constant 0 : index
    %119 = vector.load %arg25[%118, %c0_48] : memref<64x128xf32, #tpu.memory_space<vmem>>, vector<8x128xf32>
    %120 = vector.extract_strided_slice %119 {offsets = [0, 0], sizes = [8, 64], strides = [1, 1]} : vector<8x128xf32> to vector<8x64xf32>
    %121 = arith.truncf %86 : vector<8x32xf32> to vector<8x32xbf16>
    %cst_49 = arith.constant dense<0.000000e+00> : vector<8x64xf32>
    %122 = tpu.matmul %121, %24, %cst_49 {dimension_numbers = #tpu.dot_dimension_numbers<[1], [0], [0], [1], [0, 0, 1, 1], [], []>} : vector<8x32xbf16>, vector<32x64xbf16>, vector<8x64xf32> -> vector<8x64xf32>
    %123 = arith.addf %120, %122 : vector<8x64xf32>
    %124 = arith.negf %123 : vector<8x64xf32>
    %125 = math.exp %124 : vector<8x64xf32>
    %cst_50 = arith.constant 1.000000e+00 : f32
    %126 = vector.broadcast %cst_50 : f32 to vector<8x64xf32>
    %127 = arith.addf %126, %125 : vector<8x64xf32>
    %128 = arith.divf %126, %127 : vector<8x64xf32>
    %129 = vector.extract_strided_slice %128 {offsets = [0, 0], sizes = [8, 32], strides = [1, 1]} : vector<8x64xf32> to vector<8x32xf32>
    %130 = vector.extract_strided_slice %128 {offsets = [0, 32], sizes = [8, 32], strides = [1, 1]} : vector<8x64xf32> to vector<8x32xf32>
    %131 = vector.extract_strided_slice %119 {offsets = [0, 64], sizes = [8, 32], strides = [1, 1]} : vector<8x128xf32> to vector<8x32xf32>
    %132 = arith.truncf %86 : vector<8x32xf32> to vector<8x32xbf16>
    %cst_51 = arith.constant dense<0.000000e+00> : vector<8x32xf32>
    %133 = tpu.matmul %132, %26, %cst_51 {dimension_numbers = #tpu.dot_dimension_numbers<[1], [0], [0], [1], [0, 0, 1, 1], [], []>} : vector<8x32xbf16>, vector<32x32xbf16>, vector<8x32xf32> -> vector<8x32xf32>
    %134 = vector.broadcast %27 : vector<1x32xf32> to vector<8x32xf32>
    %135 = arith.addf %133, %134 : vector<8x32xf32>
    %136 = arith.mulf %129, %135 : vector<8x32xf32>
    %137 = arith.addf %131, %136 : vector<8x32xf32>
    %138 = math.tanh %137 : vector<8x32xf32>
    %cst_52 = arith.constant 1.000000e+00 : f32
    %139 = vector.broadcast %cst_52 : f32 to vector<8x32xf32>
    %140 = arith.subf %139, %130 : vector<8x32xf32>
    %141 = arith.mulf %140, %138 : vector<8x32xf32>
    %142 = arith.mulf %130, %86 : vector<8x32xf32>
    %143 = arith.addf %141, %142 : vector<8x32xf32>
    %c2_i32 = arith.constant 2 : i32
    %c8_i32_53 = arith.constant 8 : i32
    %144 = arith.muli %c2_i32, %c8_i32_53 : i32
    %145 = tpu.assume_multiple %144, 8 : i32
    %c7_i32_54 = arith.constant 7 : i32
    %146 = arith.subi %c7_i32_54, %c2_i32 : i32
    %c8_i32_55 = arith.constant 8 : i32
    %147 = arith.muli %146, %c8_i32_55 : i32
    %148 = tpu.assume_multiple %147, 8 : i32
    %149 = arith.index_cast %145 : i32 to index
    %c0_56 = arith.constant 0 : index
    %150 = vector.load %arg24[%149, %c0_56] : memref<64x128xf32, #tpu.memory_space<vmem>>, vector<8x128xf32>
    %151 = vector.extract_strided_slice %150 {offsets = [0, 0], sizes = [8, 64], strides = [1, 1]} : vector<8x128xf32> to vector<8x64xf32>
    %152 = arith.truncf %117 : vector<8x32xf32> to vector<8x32xbf16>
    %cst_57 = arith.constant dense<0.000000e+00> : vector<8x64xf32>
    %153 = tpu.matmul %152, %19, %cst_57 {dimension_numbers = #tpu.dot_dimension_numbers<[1], [0], [0], [1], [0, 0, 1, 1], [], []>} : vector<8x32xbf16>, vector<32x64xbf16>, vector<8x64xf32> -> vector<8x64xf32>
    %154 = arith.addf %151, %153 : vector<8x64xf32>
    %155 = arith.negf %154 : vector<8x64xf32>
    %156 = math.exp %155 : vector<8x64xf32>
    %cst_58 = arith.constant 1.000000e+00 : f32
    %157 = vector.broadcast %cst_58 : f32 to vector<8x64xf32>
    %158 = arith.addf %157, %156 : vector<8x64xf32>
    %159 = arith.divf %157, %158 : vector<8x64xf32>
    %160 = vector.extract_strided_slice %159 {offsets = [0, 0], sizes = [8, 32], strides = [1, 1]} : vector<8x64xf32> to vector<8x32xf32>
    %161 = vector.extract_strided_slice %159 {offsets = [0, 32], sizes = [8, 32], strides = [1, 1]} : vector<8x64xf32> to vector<8x32xf32>
    %162 = vector.extract_strided_slice %150 {offsets = [0, 64], sizes = [8, 32], strides = [1, 1]} : vector<8x128xf32> to vector<8x32xf32>
    %163 = arith.truncf %117 : vector<8x32xf32> to vector<8x32xbf16>
    %cst_59 = arith.constant dense<0.000000e+00> : vector<8x32xf32>
    %164 = tpu.matmul %163, %21, %cst_59 {dimension_numbers = #tpu.dot_dimension_numbers<[1], [0], [0], [1], [0, 0, 1, 1], [], []>} : vector<8x32xbf16>, vector<32x32xbf16>, vector<8x32xf32> -> vector<8x32xf32>
    %165 = vector.broadcast %22 : vector<1x32xf32> to vector<8x32xf32>
    %166 = arith.addf %164, %165 : vector<8x32xf32>
    %167 = arith.mulf %160, %166 : vector<8x32xf32>
    %168 = arith.addf %162, %167 : vector<8x32xf32>
    %169 = math.tanh %168 : vector<8x32xf32>
    %cst_60 = arith.constant 1.000000e+00 : f32
    %170 = vector.broadcast %cst_60 : f32 to vector<8x32xf32>
    %171 = arith.subf %170, %161 : vector<8x32xf32>
    %172 = arith.mulf %171, %169 : vector<8x32xf32>
    %173 = arith.mulf %161, %117 : vector<8x32xf32>
    %174 = arith.addf %172, %173 : vector<8x32xf32>
    %175 = arith.index_cast %148 : i32 to index
    %c0_61 = arith.constant 0 : index
    %176 = vector.load %arg25[%175, %c0_61] : memref<64x128xf32, #tpu.memory_space<vmem>>, vector<8x128xf32>
    %177 = vector.extract_strided_slice %176 {offsets = [0, 0], sizes = [8, 64], strides = [1, 1]} : vector<8x128xf32> to vector<8x64xf32>
    %178 = arith.truncf %143 : vector<8x32xf32> to vector<8x32xbf16>
    %cst_62 = arith.constant dense<0.000000e+00> : vector<8x64xf32>
    %179 = tpu.matmul %178, %24, %cst_62 {dimension_numbers = #tpu.dot_dimension_numbers<[1], [0], [0], [1], [0, 0, 1, 1], [], []>} : vector<8x32xbf16>, vector<32x64xbf16>, vector<8x64xf32> -> vector<8x64xf32>
    %180 = arith.addf %177, %179 : vector<8x64xf32>
    %181 = arith.negf %180 : vector<8x64xf32>
    %182 = math.exp %181 : vector<8x64xf32>
    %cst_63 = arith.constant 1.000000e+00 : f32
    %183 = vector.broadcast %cst_63 : f32 to vector<8x64xf32>
    %184 = arith.addf %183, %182 : vector<8x64xf32>
    %185 = arith.divf %183, %184 : vector<8x64xf32>
    %186 = vector.extract_strided_slice %185 {offsets = [0, 0], sizes = [8, 32], strides = [1, 1]} : vector<8x64xf32> to vector<8x32xf32>
    %187 = vector.extract_strided_slice %185 {offsets = [0, 32], sizes = [8, 32], strides = [1, 1]} : vector<8x64xf32> to vector<8x32xf32>
    %188 = vector.extract_strided_slice %176 {offsets = [0, 64], sizes = [8, 32], strides = [1, 1]} : vector<8x128xf32> to vector<8x32xf32>
    %189 = arith.truncf %143 : vector<8x32xf32> to vector<8x32xbf16>
    %cst_64 = arith.constant dense<0.000000e+00> : vector<8x32xf32>
    %190 = tpu.matmul %189, %26, %cst_64 {dimension_numbers = #tpu.dot_dimension_numbers<[1], [0], [0], [1], [0, 0, 1, 1], [], []>} : vector<8x32xbf16>, vector<32x32xbf16>, vector<8x32xf32> -> vector<8x32xf32>
    %191 = vector.broadcast %27 : vector<1x32xf32> to vector<8x32xf32>
    %192 = arith.addf %190, %191 : vector<8x32xf32>
    %193 = arith.mulf %186, %192 : vector<8x32xf32>
    %194 = arith.addf %188, %193 : vector<8x32xf32>
    %195 = math.tanh %194 : vector<8x32xf32>
    %cst_65 = arith.constant 1.000000e+00 : f32
    %196 = vector.broadcast %cst_65 : f32 to vector<8x32xf32>
    %197 = arith.subf %196, %187 : vector<8x32xf32>
    %198 = arith.mulf %197, %195 : vector<8x32xf32>
    %199 = arith.mulf %187, %143 : vector<8x32xf32>
    %200 = arith.addf %198, %199 : vector<8x32xf32>
    %c3_i32 = arith.constant 3 : i32
    %c8_i32_66 = arith.constant 8 : i32
    %201 = arith.muli %c3_i32, %c8_i32_66 : i32
    %202 = tpu.assume_multiple %201, 8 : i32
    %c7_i32_67 = arith.constant 7 : i32
    %203 = arith.subi %c7_i32_67, %c3_i32 : i32
    %c8_i32_68 = arith.constant 8 : i32
    %204 = arith.muli %203, %c8_i32_68 : i32
    %205 = tpu.assume_multiple %204, 8 : i32
    %206 = arith.index_cast %202 : i32 to index
    %c0_69 = arith.constant 0 : index
    %207 = vector.load %arg24[%206, %c0_69] : memref<64x128xf32, #tpu.memory_space<vmem>>, vector<8x128xf32>
    %208 = vector.extract_strided_slice %207 {offsets = [0, 0], sizes = [8, 64], strides = [1, 1]} : vector<8x128xf32> to vector<8x64xf32>
    %209 = arith.truncf %174 : vector<8x32xf32> to vector<8x32xbf16>
    %cst_70 = arith.constant dense<0.000000e+00> : vector<8x64xf32>
    %210 = tpu.matmul %209, %19, %cst_70 {dimension_numbers = #tpu.dot_dimension_numbers<[1], [0], [0], [1], [0, 0, 1, 1], [], []>} : vector<8x32xbf16>, vector<32x64xbf16>, vector<8x64xf32> -> vector<8x64xf32>
    %211 = arith.addf %208, %210 : vector<8x64xf32>
    %212 = arith.negf %211 : vector<8x64xf32>
    %213 = math.exp %212 : vector<8x64xf32>
    %cst_71 = arith.constant 1.000000e+00 : f32
    %214 = vector.broadcast %cst_71 : f32 to vector<8x64xf32>
    %215 = arith.addf %214, %213 : vector<8x64xf32>
    %216 = arith.divf %214, %215 : vector<8x64xf32>
    %217 = vector.extract_strided_slice %216 {offsets = [0, 0], sizes = [8, 32], strides = [1, 1]} : vector<8x64xf32> to vector<8x32xf32>
    %218 = vector.extract_strided_slice %216 {offsets = [0, 32], sizes = [8, 32], strides = [1, 1]} : vector<8x64xf32> to vector<8x32xf32>
    %219 = vector.extract_strided_slice %207 {offsets = [0, 64], sizes = [8, 32], strides = [1, 1]} : vector<8x128xf32> to vector<8x32xf32>
    %220 = arith.truncf %174 : vector<8x32xf32> to vector<8x32xbf16>
    %cst_72 = arith.constant dense<0.000000e+00> : vector<8x32xf32>
    %221 = tpu.matmul %220, %21, %cst_72 {dimension_numbers = #tpu.dot_dimension_numbers<[1], [0], [0], [1], [0, 0, 1, 1], [], []>} : vector<8x32xbf16>, vector<32x32xbf16>, vector<8x32xf32> -> vector<8x32xf32>
    %222 = vector.broadcast %22 : vector<1x32xf32> to vector<8x32xf32>
    %223 = arith.addf %221, %222 : vector<8x32xf32>
    %224 = arith.mulf %217, %223 : vector<8x32xf32>
    %225 = arith.addf %219, %224 : vector<8x32xf32>
    %226 = math.tanh %225 : vector<8x32xf32>
    %cst_73 = arith.constant 1.000000e+00 : f32
    %227 = vector.broadcast %cst_73 : f32 to vector<8x32xf32>
    %228 = arith.subf %227, %218 : vector<8x32xf32>
    %229 = arith.mulf %228, %226 : vector<8x32xf32>
    %230 = arith.mulf %218, %174 : vector<8x32xf32>
    %231 = arith.addf %229, %230 : vector<8x32xf32>
    %232 = arith.index_cast %205 : i32 to index
    %c0_74 = arith.constant 0 : index
    %233 = vector.load %arg25[%232, %c0_74] : memref<64x128xf32, #tpu.memory_space<vmem>>, vector<8x128xf32>
    %234 = vector.extract_strided_slice %233 {offsets = [0, 0], sizes = [8, 64], strides = [1, 1]} : vector<8x128xf32> to vector<8x64xf32>
    %235 = arith.truncf %200 : vector<8x32xf32> to vector<8x32xbf16>
    %cst_75 = arith.constant dense<0.000000e+00> : vector<8x64xf32>
    %236 = tpu.matmul %235, %24, %cst_75 {dimension_numbers = #tpu.dot_dimension_numbers<[1], [0], [0], [1], [0, 0, 1, 1], [], []>} : vector<8x32xbf16>, vector<32x64xbf16>, vector<8x64xf32> -> vector<8x64xf32>
    %237 = arith.addf %234, %236 : vector<8x64xf32>
    %238 = arith.negf %237 : vector<8x64xf32>
    %239 = math.exp %238 : vector<8x64xf32>
    %cst_76 = arith.constant 1.000000e+00 : f32
    %240 = vector.broadcast %cst_76 : f32 to vector<8x64xf32>
    %241 = arith.addf %240, %239 : vector<8x64xf32>
    %242 = arith.divf %240, %241 : vector<8x64xf32>
    %243 = vector.extract_strided_slice %242 {offsets = [0, 0], sizes = [8, 32], strides = [1, 1]} : vector<8x64xf32> to vector<8x32xf32>
    %244 = vector.extract_strided_slice %242 {offsets = [0, 32], sizes = [8, 32], strides = [1, 1]} : vector<8x64xf32> to vector<8x32xf32>
    %245 = vector.extract_strided_slice %233 {offsets = [0, 64], sizes = [8, 32], strides = [1, 1]} : vector<8x128xf32> to vector<8x32xf32>
    %246 = arith.truncf %200 : vector<8x32xf32> to vector<8x32xbf16>
    %cst_77 = arith.constant dense<0.000000e+00> : vector<8x32xf32>
    %247 = tpu.matmul %246, %26, %cst_77 {dimension_numbers = #tpu.dot_dimension_numbers<[1], [0], [0], [1], [0, 0, 1, 1], [], []>} : vector<8x32xbf16>, vector<32x32xbf16>, vector<8x32xf32> -> vector<8x32xf32>
    %248 = vector.broadcast %27 : vector<1x32xf32> to vector<8x32xf32>
    %249 = arith.addf %247, %248 : vector<8x32xf32>
    %250 = arith.mulf %243, %249 : vector<8x32xf32>
    %251 = arith.addf %245, %250 : vector<8x32xf32>
    %252 = math.tanh %251 : vector<8x32xf32>
    %cst_78 = arith.constant 1.000000e+00 : f32
    %253 = vector.broadcast %cst_78 : f32 to vector<8x32xf32>
    %254 = arith.subf %253, %244 : vector<8x32xf32>
    %255 = arith.mulf %254, %252 : vector<8x32xf32>
    %256 = arith.mulf %244, %200 : vector<8x32xf32>
    %257 = arith.addf %255, %256 : vector<8x32xf32>
    %c4_i32 = arith.constant 4 : i32
    %c8_i32_79 = arith.constant 8 : i32
    %258 = arith.muli %c4_i32, %c8_i32_79 : i32
    %259 = tpu.assume_multiple %258, 8 : i32
    %c7_i32_80 = arith.constant 7 : i32
    %260 = arith.subi %c7_i32_80, %c4_i32 : i32
    %c8_i32_81 = arith.constant 8 : i32
    %261 = arith.muli %260, %c8_i32_81 : i32
    %262 = tpu.assume_multiple %261, 8 : i32
    %263 = arith.index_cast %259 : i32 to index
    %c0_82 = arith.constant 0 : index
    %264 = vector.load %arg24[%263, %c0_82] : memref<64x128xf32, #tpu.memory_space<vmem>>, vector<8x128xf32>
    %265 = vector.extract_strided_slice %264 {offsets = [0, 0], sizes = [8, 64], strides = [1, 1]} : vector<8x128xf32> to vector<8x64xf32>
    %266 = arith.truncf %231 : vector<8x32xf32> to vector<8x32xbf16>
    %cst_83 = arith.constant dense<0.000000e+00> : vector<8x64xf32>
    %267 = tpu.matmul %266, %19, %cst_83 {dimension_numbers = #tpu.dot_dimension_numbers<[1], [0], [0], [1], [0, 0, 1, 1], [], []>} : vector<8x32xbf16>, vector<32x64xbf16>, vector<8x64xf32> -> vector<8x64xf32>
    %268 = arith.addf %265, %267 : vector<8x64xf32>
    %269 = arith.negf %268 : vector<8x64xf32>
    %270 = math.exp %269 : vector<8x64xf32>
    %cst_84 = arith.constant 1.000000e+00 : f32
    %271 = vector.broadcast %cst_84 : f32 to vector<8x64xf32>
    %272 = arith.addf %271, %270 : vector<8x64xf32>
    %273 = arith.divf %271, %272 : vector<8x64xf32>
    %274 = vector.extract_strided_slice %273 {offsets = [0, 0], sizes = [8, 32], strides = [1, 1]} : vector<8x64xf32> to vector<8x32xf32>
    %275 = vector.extract_strided_slice %273 {offsets = [0, 32], sizes = [8, 32], strides = [1, 1]} : vector<8x64xf32> to vector<8x32xf32>
    %276 = vector.extract_strided_slice %264 {offsets = [0, 64], sizes = [8, 32], strides = [1, 1]} : vector<8x128xf32> to vector<8x32xf32>
    %277 = arith.truncf %231 : vector<8x32xf32> to vector<8x32xbf16>
    %cst_85 = arith.constant dense<0.000000e+00> : vector<8x32xf32>
    %278 = tpu.matmul %277, %21, %cst_85 {dimension_numbers = #tpu.dot_dimension_numbers<[1], [0], [0], [1], [0, 0, 1, 1], [], []>} : vector<8x32xbf16>, vector<32x32xbf16>, vector<8x32xf32> -> vector<8x32xf32>
    %279 = vector.broadcast %22 : vector<1x32xf32> to vector<8x32xf32>
    %280 = arith.addf %278, %279 : vector<8x32xf32>
    %281 = arith.mulf %274, %280 : vector<8x32xf32>
    %282 = arith.addf %276, %281 : vector<8x32xf32>
    %283 = math.tanh %282 : vector<8x32xf32>
    %cst_86 = arith.constant 1.000000e+00 : f32
    %284 = vector.broadcast %cst_86 : f32 to vector<8x32xf32>
    %285 = arith.subf %284, %275 : vector<8x32xf32>
    %286 = arith.mulf %285, %283 : vector<8x32xf32>
    %287 = arith.mulf %275, %231 : vector<8x32xf32>
    %288 = arith.addf %286, %287 : vector<8x32xf32>
    %289 = arith.index_cast %262 : i32 to index
    %c0_87 = arith.constant 0 : index
    %290 = vector.load %arg25[%289, %c0_87] : memref<64x128xf32, #tpu.memory_space<vmem>>, vector<8x128xf32>
    %291 = vector.extract_strided_slice %290 {offsets = [0, 0], sizes = [8, 64], strides = [1, 1]} : vector<8x128xf32> to vector<8x64xf32>
    %292 = arith.truncf %257 : vector<8x32xf32> to vector<8x32xbf16>
    %cst_88 = arith.constant dense<0.000000e+00> : vector<8x64xf32>
    %293 = tpu.matmul %292, %24, %cst_88 {dimension_numbers = #tpu.dot_dimension_numbers<[1], [0], [0], [1], [0, 0, 1, 1], [], []>} : vector<8x32xbf16>, vector<32x64xbf16>, vector<8x64xf32> -> vector<8x64xf32>
    %294 = arith.addf %291, %293 : vector<8x64xf32>
    %295 = arith.negf %294 : vector<8x64xf32>
    %296 = math.exp %295 : vector<8x64xf32>
    %cst_89 = arith.constant 1.000000e+00 : f32
    %297 = vector.broadcast %cst_89 : f32 to vector<8x64xf32>
    %298 = arith.addf %297, %296 : vector<8x64xf32>
    %299 = arith.divf %297, %298 : vector<8x64xf32>
    %300 = vector.extract_strided_slice %299 {offsets = [0, 0], sizes = [8, 32], strides = [1, 1]} : vector<8x64xf32> to vector<8x32xf32>
    %301 = vector.extract_strided_slice %299 {offsets = [0, 32], sizes = [8, 32], strides = [1, 1]} : vector<8x64xf32> to vector<8x32xf32>
    %302 = vector.extract_strided_slice %290 {offsets = [0, 64], sizes = [8, 32], strides = [1, 1]} : vector<8x128xf32> to vector<8x32xf32>
    %303 = arith.truncf %257 : vector<8x32xf32> to vector<8x32xbf16>
    %cst_90 = arith.constant dense<0.000000e+00> : vector<8x32xf32>
    %304 = tpu.matmul %303, %26, %cst_90 {dimension_numbers = #tpu.dot_dimension_numbers<[1], [0], [0], [1], [0, 0, 1, 1], [], []>} : vector<8x32xbf16>, vector<32x32xbf16>, vector<8x32xf32> -> vector<8x32xf32>
    %305 = vector.broadcast %27 : vector<1x32xf32> to vector<8x32xf32>
    %306 = arith.addf %304, %305 : vector<8x32xf32>
    %307 = arith.mulf %300, %306 : vector<8x32xf32>
    %308 = arith.addf %302, %307 : vector<8x32xf32>
    %309 = math.tanh %308 : vector<8x32xf32>
    %cst_91 = arith.constant 1.000000e+00 : f32
    %310 = vector.broadcast %cst_91 : f32 to vector<8x32xf32>
    %311 = arith.subf %310, %301 : vector<8x32xf32>
    %312 = arith.mulf %311, %309 : vector<8x32xf32>
    %313 = arith.mulf %301, %257 : vector<8x32xf32>
    %314 = arith.addf %312, %313 : vector<8x32xf32>
    %c5_i32 = arith.constant 5 : i32
    %c8_i32_92 = arith.constant 8 : i32
    %315 = arith.muli %c5_i32, %c8_i32_92 : i32
    %316 = tpu.assume_multiple %315, 8 : i32
    %c7_i32_93 = arith.constant 7 : i32
    %317 = arith.subi %c7_i32_93, %c5_i32 : i32
    %c8_i32_94 = arith.constant 8 : i32
    %318 = arith.muli %317, %c8_i32_94 : i32
    %319 = tpu.assume_multiple %318, 8 : i32
    %320 = arith.index_cast %316 : i32 to index
    %c0_95 = arith.constant 0 : index
    %321 = vector.load %arg24[%320, %c0_95] : memref<64x128xf32, #tpu.memory_space<vmem>>, vector<8x128xf32>
    %322 = vector.extract_strided_slice %321 {offsets = [0, 0], sizes = [8, 64], strides = [1, 1]} : vector<8x128xf32> to vector<8x64xf32>
    %323 = arith.truncf %288 : vector<8x32xf32> to vector<8x32xbf16>
    %cst_96 = arith.constant dense<0.000000e+00> : vector<8x64xf32>
    %324 = tpu.matmul %323, %19, %cst_96 {dimension_numbers = #tpu.dot_dimension_numbers<[1], [0], [0], [1], [0, 0, 1, 1], [], []>} : vector<8x32xbf16>, vector<32x64xbf16>, vector<8x64xf32> -> vector<8x64xf32>
    %325 = arith.addf %322, %324 : vector<8x64xf32>
    %326 = arith.negf %325 : vector<8x64xf32>
    %327 = math.exp %326 : vector<8x64xf32>
    %cst_97 = arith.constant 1.000000e+00 : f32
    %328 = vector.broadcast %cst_97 : f32 to vector<8x64xf32>
    %329 = arith.addf %328, %327 : vector<8x64xf32>
    %330 = arith.divf %328, %329 : vector<8x64xf32>
    %331 = vector.extract_strided_slice %330 {offsets = [0, 0], sizes = [8, 32], strides = [1, 1]} : vector<8x64xf32> to vector<8x32xf32>
    %332 = vector.extract_strided_slice %330 {offsets = [0, 32], sizes = [8, 32], strides = [1, 1]} : vector<8x64xf32> to vector<8x32xf32>
    %333 = vector.extract_strided_slice %321 {offsets = [0, 64], sizes = [8, 32], strides = [1, 1]} : vector<8x128xf32> to vector<8x32xf32>
    %334 = arith.truncf %288 : vector<8x32xf32> to vector<8x32xbf16>
    %cst_98 = arith.constant dense<0.000000e+00> : vector<8x32xf32>
    %335 = tpu.matmul %334, %21, %cst_98 {dimension_numbers = #tpu.dot_dimension_numbers<[1], [0], [0], [1], [0, 0, 1, 1], [], []>} : vector<8x32xbf16>, vector<32x32xbf16>, vector<8x32xf32> -> vector<8x32xf32>
    %336 = vector.broadcast %22 : vector<1x32xf32> to vector<8x32xf32>
    %337 = arith.addf %335, %336 : vector<8x32xf32>
    %338 = arith.mulf %331, %337 : vector<8x32xf32>
    %339 = arith.addf %333, %338 : vector<8x32xf32>
    %340 = math.tanh %339 : vector<8x32xf32>
    %cst_99 = arith.constant 1.000000e+00 : f32
    %341 = vector.broadcast %cst_99 : f32 to vector<8x32xf32>
    %342 = arith.subf %341, %332 : vector<8x32xf32>
    %343 = arith.mulf %342, %340 : vector<8x32xf32>
    %344 = arith.mulf %332, %288 : vector<8x32xf32>
    %345 = arith.addf %343, %344 : vector<8x32xf32>
    %346 = arith.index_cast %319 : i32 to index
    %c0_100 = arith.constant 0 : index
    %347 = vector.load %arg25[%346, %c0_100] : memref<64x128xf32, #tpu.memory_space<vmem>>, vector<8x128xf32>
    %348 = vector.extract_strided_slice %347 {offsets = [0, 0], sizes = [8, 64], strides = [1, 1]} : vector<8x128xf32> to vector<8x64xf32>
    %349 = arith.truncf %314 : vector<8x32xf32> to vector<8x32xbf16>
    %cst_101 = arith.constant dense<0.000000e+00> : vector<8x64xf32>
    %350 = tpu.matmul %349, %24, %cst_101 {dimension_numbers = #tpu.dot_dimension_numbers<[1], [0], [0], [1], [0, 0, 1, 1], [], []>} : vector<8x32xbf16>, vector<32x64xbf16>, vector<8x64xf32> -> vector<8x64xf32>
    %351 = arith.addf %348, %350 : vector<8x64xf32>
    %352 = arith.negf %351 : vector<8x64xf32>
    %353 = math.exp %352 : vector<8x64xf32>
    %cst_102 = arith.constant 1.000000e+00 : f32
    %354 = vector.broadcast %cst_102 : f32 to vector<8x64xf32>
    %355 = arith.addf %354, %353 : vector<8x64xf32>
    %356 = arith.divf %354, %355 : vector<8x64xf32>
    %357 = vector.extract_strided_slice %356 {offsets = [0, 0], sizes = [8, 32], strides = [1, 1]} : vector<8x64xf32> to vector<8x32xf32>
    %358 = vector.extract_strided_slice %356 {offsets = [0, 32], sizes = [8, 32], strides = [1, 1]} : vector<8x64xf32> to vector<8x32xf32>
    %359 = vector.extract_strided_slice %347 {offsets = [0, 64], sizes = [8, 32], strides = [1, 1]} : vector<8x128xf32> to vector<8x32xf32>
    %360 = arith.truncf %314 : vector<8x32xf32> to vector<8x32xbf16>
    %cst_103 = arith.constant dense<0.000000e+00> : vector<8x32xf32>
    %361 = tpu.matmul %360, %26, %cst_103 {dimension_numbers = #tpu.dot_dimension_numbers<[1], [0], [0], [1], [0, 0, 1, 1], [], []>} : vector<8x32xbf16>, vector<32x32xbf16>, vector<8x32xf32> -> vector<8x32xf32>
    %362 = vector.broadcast %27 : vector<1x32xf32> to vector<8x32xf32>
    %363 = arith.addf %361, %362 : vector<8x32xf32>
    %364 = arith.mulf %357, %363 : vector<8x32xf32>
    %365 = arith.addf %359, %364 : vector<8x32xf32>
    %366 = math.tanh %365 : vector<8x32xf32>
    %cst_104 = arith.constant 1.000000e+00 : f32
    %367 = vector.broadcast %cst_104 : f32 to vector<8x32xf32>
    %368 = arith.subf %367, %358 : vector<8x32xf32>
    %369 = arith.mulf %368, %366 : vector<8x32xf32>
    %370 = arith.mulf %358, %314 : vector<8x32xf32>
    %371 = arith.addf %369, %370 : vector<8x32xf32>
    %c6_i32 = arith.constant 6 : i32
    %c8_i32_105 = arith.constant 8 : i32
    %372 = arith.muli %c6_i32, %c8_i32_105 : i32
    %373 = tpu.assume_multiple %372, 8 : i32
    %c7_i32_106 = arith.constant 7 : i32
    %374 = arith.subi %c7_i32_106, %c6_i32 : i32
    %c8_i32_107 = arith.constant 8 : i32
    %375 = arith.muli %374, %c8_i32_107 : i32
    %376 = tpu.assume_multiple %375, 8 : i32
    %377 = arith.index_cast %373 : i32 to index
    %c0_108 = arith.constant 0 : index
    %378 = vector.load %arg24[%377, %c0_108] : memref<64x128xf32, #tpu.memory_space<vmem>>, vector<8x128xf32>
    %379 = vector.extract_strided_slice %378 {offsets = [0, 0], sizes = [8, 64], strides = [1, 1]} : vector<8x128xf32> to vector<8x64xf32>
    %380 = arith.truncf %345 : vector<8x32xf32> to vector<8x32xbf16>
    %cst_109 = arith.constant dense<0.000000e+00> : vector<8x64xf32>
    %381 = tpu.matmul %380, %19, %cst_109 {dimension_numbers = #tpu.dot_dimension_numbers<[1], [0], [0], [1], [0, 0, 1, 1], [], []>} : vector<8x32xbf16>, vector<32x64xbf16>, vector<8x64xf32> -> vector<8x64xf32>
    %382 = arith.addf %379, %381 : vector<8x64xf32>
    %383 = arith.negf %382 : vector<8x64xf32>
    %384 = math.exp %383 : vector<8x64xf32>
    %cst_110 = arith.constant 1.000000e+00 : f32
    %385 = vector.broadcast %cst_110 : f32 to vector<8x64xf32>
    %386 = arith.addf %385, %384 : vector<8x64xf32>
    %387 = arith.divf %385, %386 : vector<8x64xf32>
    %388 = vector.extract_strided_slice %387 {offsets = [0, 0], sizes = [8, 32], strides = [1, 1]} : vector<8x64xf32> to vector<8x32xf32>
    %389 = vector.extract_strided_slice %387 {offsets = [0, 32], sizes = [8, 32], strides = [1, 1]} : vector<8x64xf32> to vector<8x32xf32>
    %390 = vector.extract_strided_slice %378 {offsets = [0, 64], sizes = [8, 32], strides = [1, 1]} : vector<8x128xf32> to vector<8x32xf32>
    %391 = arith.truncf %345 : vector<8x32xf32> to vector<8x32xbf16>
    %cst_111 = arith.constant dense<0.000000e+00> : vector<8x32xf32>
    %392 = tpu.matmul %391, %21, %cst_111 {dimension_numbers = #tpu.dot_dimension_numbers<[1], [0], [0], [1], [0, 0, 1, 1], [], []>} : vector<8x32xbf16>, vector<32x32xbf16>, vector<8x32xf32> -> vector<8x32xf32>
    %393 = vector.broadcast %22 : vector<1x32xf32> to vector<8x32xf32>
    %394 = arith.addf %392, %393 : vector<8x32xf32>
    %395 = arith.mulf %388, %394 : vector<8x32xf32>
    %396 = arith.addf %390, %395 : vector<8x32xf32>
    %397 = math.tanh %396 : vector<8x32xf32>
    %cst_112 = arith.constant 1.000000e+00 : f32
    %398 = vector.broadcast %cst_112 : f32 to vector<8x32xf32>
    %399 = arith.subf %398, %389 : vector<8x32xf32>
    %400 = arith.mulf %399, %397 : vector<8x32xf32>
    %401 = arith.mulf %389, %345 : vector<8x32xf32>
    %402 = arith.addf %400, %401 : vector<8x32xf32>
    %403 = arith.index_cast %376 : i32 to index
    %c0_113 = arith.constant 0 : index
    %404 = vector.load %arg25[%403, %c0_113] : memref<64x128xf32, #tpu.memory_space<vmem>>, vector<8x128xf32>
    %405 = vector.extract_strided_slice %404 {offsets = [0, 0], sizes = [8, 64], strides = [1, 1]} : vector<8x128xf32> to vector<8x64xf32>
    %406 = arith.truncf %371 : vector<8x32xf32> to vector<8x32xbf16>
    %cst_114 = arith.constant dense<0.000000e+00> : vector<8x64xf32>
    %407 = tpu.matmul %406, %24, %cst_114 {dimension_numbers = #tpu.dot_dimension_numbers<[1], [0], [0], [1], [0, 0, 1, 1], [], []>} : vector<8x32xbf16>, vector<32x64xbf16>, vector<8x64xf32> -> vector<8x64xf32>
    %408 = arith.addf %405, %407 : vector<8x64xf32>
    %409 = arith.negf %408 : vector<8x64xf32>
    %410 = math.exp %409 : vector<8x64xf32>
    %cst_115 = arith.constant 1.000000e+00 : f32
    %411 = vector.broadcast %cst_115 : f32 to vector<8x64xf32>
    %412 = arith.addf %411, %410 : vector<8x64xf32>
    %413 = arith.divf %411, %412 : vector<8x64xf32>
    %414 = vector.extract_strided_slice %413 {offsets = [0, 0], sizes = [8, 32], strides = [1, 1]} : vector<8x64xf32> to vector<8x32xf32>
    %415 = vector.extract_strided_slice %413 {offsets = [0, 32], sizes = [8, 32], strides = [1, 1]} : vector<8x64xf32> to vector<8x32xf32>
    %416 = vector.extract_strided_slice %404 {offsets = [0, 64], sizes = [8, 32], strides = [1, 1]} : vector<8x128xf32> to vector<8x32xf32>
    %417 = arith.truncf %371 : vector<8x32xf32> to vector<8x32xbf16>
    %cst_116 = arith.constant dense<0.000000e+00> : vector<8x32xf32>
    %418 = tpu.matmul %417, %26, %cst_116 {dimension_numbers = #tpu.dot_dimension_numbers<[1], [0], [0], [1], [0, 0, 1, 1], [], []>} : vector<8x32xbf16>, vector<32x32xbf16>, vector<8x32xf32> -> vector<8x32xf32>
    %419 = vector.broadcast %27 : vector<1x32xf32> to vector<8x32xf32>
    %420 = arith.addf %418, %419 : vector<8x32xf32>
    %421 = arith.mulf %414, %420 : vector<8x32xf32>
    %422 = arith.addf %416, %421 : vector<8x32xf32>
    %423 = math.tanh %422 : vector<8x32xf32>
    %cst_117 = arith.constant 1.000000e+00 : f32
    %424 = vector.broadcast %cst_117 : f32 to vector<8x32xf32>
    %425 = arith.subf %424, %415 : vector<8x32xf32>
    %426 = arith.mulf %425, %423 : vector<8x32xf32>
    %427 = arith.mulf %415, %371 : vector<8x32xf32>
    %428 = arith.addf %426, %427 : vector<8x32xf32>
    %c7_i32_118 = arith.constant 7 : i32
    %c8_i32_119 = arith.constant 8 : i32
    %429 = arith.muli %c7_i32_118, %c8_i32_119 : i32
    %430 = tpu.assume_multiple %429, 8 : i32
    %c7_i32_120 = arith.constant 7 : i32
    %431 = arith.subi %c7_i32_120, %c7_i32_118 : i32
    %c8_i32_121 = arith.constant 8 : i32
    %432 = arith.muli %431, %c8_i32_121 : i32
    %433 = tpu.assume_multiple %432, 8 : i32
    %434 = arith.index_cast %430 : i32 to index
    %c0_122 = arith.constant 0 : index
    %435 = vector.load %arg24[%434, %c0_122] : memref<64x128xf32, #tpu.memory_space<vmem>>, vector<8x128xf32>
    %436 = vector.extract_strided_slice %435 {offsets = [0, 0], sizes = [8, 64], strides = [1, 1]} : vector<8x128xf32> to vector<8x64xf32>
    %437 = arith.truncf %402 : vector<8x32xf32> to vector<8x32xbf16>
    %cst_123 = arith.constant dense<0.000000e+00> : vector<8x64xf32>
    %438 = tpu.matmul %437, %19, %cst_123 {dimension_numbers = #tpu.dot_dimension_numbers<[1], [0], [0], [1], [0, 0, 1, 1], [], []>} : vector<8x32xbf16>, vector<32x64xbf16>, vector<8x64xf32> -> vector<8x64xf32>
    %439 = arith.addf %436, %438 : vector<8x64xf32>
    %440 = arith.negf %439 : vector<8x64xf32>
    %441 = math.exp %440 : vector<8x64xf32>
    %cst_124 = arith.constant 1.000000e+00 : f32
    %442 = vector.broadcast %cst_124 : f32 to vector<8x64xf32>
    %443 = arith.addf %442, %441 : vector<8x64xf32>
    %444 = arith.divf %442, %443 : vector<8x64xf32>
    %445 = vector.extract_strided_slice %444 {offsets = [0, 0], sizes = [8, 32], strides = [1, 1]} : vector<8x64xf32> to vector<8x32xf32>
    %446 = vector.extract_strided_slice %444 {offsets = [0, 32], sizes = [8, 32], strides = [1, 1]} : vector<8x64xf32> to vector<8x32xf32>
    %447 = vector.extract_strided_slice %435 {offsets = [0, 64], sizes = [8, 32], strides = [1, 1]} : vector<8x128xf32> to vector<8x32xf32>
    %448 = arith.truncf %402 : vector<8x32xf32> to vector<8x32xbf16>
    %cst_125 = arith.constant dense<0.000000e+00> : vector<8x32xf32>
    %449 = tpu.matmul %448, %21, %cst_125 {dimension_numbers = #tpu.dot_dimension_numbers<[1], [0], [0], [1], [0, 0, 1, 1], [], []>} : vector<8x32xbf16>, vector<32x32xbf16>, vector<8x32xf32> -> vector<8x32xf32>
    %450 = vector.broadcast %22 : vector<1x32xf32> to vector<8x32xf32>
    %451 = arith.addf %449, %450 : vector<8x32xf32>
    %452 = arith.mulf %445, %451 : vector<8x32xf32>
    %453 = arith.addf %447, %452 : vector<8x32xf32>
    %454 = math.tanh %453 : vector<8x32xf32>
    %cst_126 = arith.constant 1.000000e+00 : f32
    %455 = vector.broadcast %cst_126 : f32 to vector<8x32xf32>
    %456 = arith.subf %455, %446 : vector<8x32xf32>
    %457 = arith.mulf %456, %454 : vector<8x32xf32>
    %458 = arith.mulf %446, %402 : vector<8x32xf32>
    %459 = arith.addf %457, %458 : vector<8x32xf32>
    %460 = arith.index_cast %433 : i32 to index
    %c0_127 = arith.constant 0 : index
    %461 = vector.load %arg25[%460, %c0_127] : memref<64x128xf32, #tpu.memory_space<vmem>>, vector<8x128xf32>
    %462 = vector.extract_strided_slice %461 {offsets = [0, 0], sizes = [8, 64], strides = [1, 1]} : vector<8x128xf32> to vector<8x64xf32>
    %463 = arith.truncf %428 : vector<8x32xf32> to vector<8x32xbf16>
    %cst_128 = arith.constant dense<0.000000e+00> : vector<8x64xf32>
    %464 = tpu.matmul %463, %24, %cst_128 {dimension_numbers = #tpu.dot_dimension_numbers<[1], [0], [0], [1], [0, 0, 1, 1], [], []>} : vector<8x32xbf16>, vector<32x64xbf16>, vector<8x64xf32> -> vector<8x64xf32>
    %465 = arith.addf %462, %464 : vector<8x64xf32>
    %466 = arith.negf %465 : vector<8x64xf32>
    %467 = math.exp %466 : vector<8x64xf32>
    %cst_129 = arith.constant 1.000000e+00 : f32
    %468 = vector.broadcast %cst_129 : f32 to vector<8x64xf32>
    %469 = arith.addf %468, %467 : vector<8x64xf32>
    %470 = arith.divf %468, %469 : vector<8x64xf32>
    %471 = vector.extract_strided_slice %470 {offsets = [0, 0], sizes = [8, 32], strides = [1, 1]} : vector<8x64xf32> to vector<8x32xf32>
    %472 = vector.extract_strided_slice %470 {offsets = [0, 32], sizes = [8, 32], strides = [1, 1]} : vector<8x64xf32> to vector<8x32xf32>
    %473 = vector.extract_strided_slice %461 {offsets = [0, 64], sizes = [8, 32], strides = [1, 1]} : vector<8x128xf32> to vector<8x32xf32>
    %474 = arith.truncf %428 : vector<8x32xf32> to vector<8x32xbf16>
    %cst_130 = arith.constant dense<0.000000e+00> : vector<8x32xf32>
    %475 = tpu.matmul %474, %26, %cst_130 {dimension_numbers = #tpu.dot_dimension_numbers<[1], [0], [0], [1], [0, 0, 1, 1], [], []>} : vector<8x32xbf16>, vector<32x32xbf16>, vector<8x32xf32> -> vector<8x32xf32>
    %476 = vector.broadcast %27 : vector<1x32xf32> to vector<8x32xf32>
    %477 = arith.addf %475, %476 : vector<8x32xf32>
    %478 = arith.mulf %471, %477 : vector<8x32xf32>
    %479 = arith.addf %473, %478 : vector<8x32xf32>
    %480 = math.tanh %479 : vector<8x32xf32>
    %cst_131 = arith.constant 1.000000e+00 : f32
    %481 = vector.broadcast %cst_131 : f32 to vector<8x32xf32>
    %482 = arith.subf %481, %472 : vector<8x32xf32>
    %483 = arith.mulf %482, %480 : vector<8x32xf32>
    %484 = arith.mulf %472, %428 : vector<8x32xf32>
    %485 = arith.addf %483, %484 : vector<8x32xf32>
    %c8_i32_132 = arith.constant 8 : i32
    %c0_133 = arith.constant 0 : index
    %c0_134 = arith.constant 0 : index
    %486 = vector.load %arg12[%c0_133, %c0_134] : memref<32x32xf32, #tpu.memory_space<vmem>>, vector<32x32xf32>
    %487 = arith.truncf %459 : vector<8x32xf32> to vector<8x32xbf16>
    %488 = arith.truncf %486 : vector<32x32xf32> to vector<32x32xbf16>
    %cst_135 = arith.constant dense<0.000000e+00> : vector<8x32xf32>
    %489 = tpu.matmul %487, %488, %cst_135 {dimension_numbers = #tpu.dot_dimension_numbers<[1], [0], [0], [1], [0, 0, 1, 1], [], []>} : vector<8x32xbf16>, vector<32x32xbf16>, vector<8x32xf32> -> vector<8x32xf32>
    %c0_136 = arith.constant 0 : index
    %c0_137 = arith.constant 0 : index
    %490 = vector.load %arg13[%c0_136, %c0_137] : memref<1x32xf32, #tpu.memory_space<vmem>>, vector<1x32xf32>
    %491 = vector.broadcast %490 : vector<1x32xf32> to vector<8x32xf32>
    %492 = arith.addf %489, %491 : vector<8x32xf32>
    %cst_138 = arith.constant 0.000000e+00 : f32
    %493 = vector.broadcast %cst_138 : f32 to vector<8x32xf32>
    %494 = arith.maximumf %492, %493 : vector<8x32xf32>
    %c0_139 = arith.constant 0 : index
    %c0_140 = arith.constant 0 : index
    %495 = vector.load %arg14[%c0_139, %c0_140] : memref<32x50xf32, #tpu.memory_space<vmem>>, vector<32x50xf32>
    %496 = arith.truncf %494 : vector<8x32xf32> to vector<8x32xbf16>
    %497 = arith.truncf %495 : vector<32x50xf32> to vector<32x50xbf16>
    %cst_141 = arith.constant dense<0.000000e+00> : vector<8x50xf32>
    %498 = tpu.matmul %496, %497, %cst_141 {dimension_numbers = #tpu.dot_dimension_numbers<[1], [0], [0], [1], [0, 0, 1, 1], [], []>} : vector<8x32xbf16>, vector<32x50xbf16>, vector<8x50xf32> -> vector<8x50xf32>
    %c0_142 = arith.constant 0 : index
    %c0_143 = arith.constant 0 : index
    %499 = vector.load %arg15[%c0_142, %c0_143] : memref<1x50xf32, #tpu.memory_space<vmem>>, vector<1x50xf32>
    %500 = vector.broadcast %499 : vector<1x50xf32> to vector<8x50xf32>
    %501 = arith.addf %498, %500 : vector<8x50xf32>
    %c0_144 = arith.constant 0 : index
    %c0_145 = arith.constant 0 : index
    %502 = vector.load %arg16[%c0_144, %c0_145] : memref<32x32xf32, #tpu.memory_space<vmem>>, vector<32x32xf32>
    %503 = arith.truncf %485 : vector<8x32xf32> to vector<8x32xbf16>
    %504 = arith.truncf %502 : vector<32x32xf32> to vector<32x32xbf16>
    %cst_146 = arith.constant dense<0.000000e+00> : vector<8x32xf32>
    %505 = tpu.matmul %503, %504, %cst_146 {dimension_numbers = #tpu.dot_dimension_numbers<[1], [0], [0], [1], [0, 0, 1, 1], [], []>} : vector<8x32xbf16>, vector<32x32xbf16>, vector<8x32xf32> -> vector<8x32xf32>
    %c0_147 = arith.constant 0 : index
    %c0_148 = arith.constant 0 : index
    %506 = vector.load %arg17[%c0_147, %c0_148] : memref<1x32xf32, #tpu.memory_space<vmem>>, vector<1x32xf32>
    %507 = vector.broadcast %506 : vector<1x32xf32> to vector<8x32xf32>
    %508 = arith.addf %505, %507 : vector<8x32xf32>
    %cst_149 = arith.constant 0.000000e+00 : f32
    %509 = vector.broadcast %cst_149 : f32 to vector<8x32xf32>
    %510 = arith.maximumf %508, %509 : vector<8x32xf32>
    %c0_150 = arith.constant 0 : index
    %c0_151 = arith.constant 0 : index
    %511 = vector.load %arg18[%c0_150, %c0_151] : memref<32x50xf32, #tpu.memory_space<vmem>>, vector<32x50xf32>
    %512 = arith.truncf %510 : vector<8x32xf32> to vector<8x32xbf16>
    %513 = arith.truncf %511 : vector<32x50xf32> to vector<32x50xbf16>
    %cst_152 = arith.constant dense<0.000000e+00> : vector<8x50xf32>
    %514 = tpu.matmul %512, %513, %cst_152 {dimension_numbers = #tpu.dot_dimension_numbers<[1], [0], [0], [1], [0, 0, 1, 1], [], []>} : vector<8x32xbf16>, vector<32x50xbf16>, vector<8x50xf32> -> vector<8x50xf32>
    %c0_153 = arith.constant 0 : index
    %c0_154 = arith.constant 0 : index
    %515 = vector.load %arg19[%c0_153, %c0_154] : memref<1x50xf32, #tpu.memory_space<vmem>>, vector<1x50xf32>
    %516 = vector.broadcast %515 : vector<1x50xf32> to vector<8x50xf32>
    %517 = arith.addf %514, %516 : vector<8x50xf32>
    %c0_155 = arith.constant 0 : index
    %c0_156 = arith.constant 0 : index
    %518 = vector.load %arg20[%c0_155, %c0_156] : memref<50x128xf32, #tpu.memory_space<vmem>>, vector<50x128xf32>
    %519 = arith.truncf %501 : vector<8x50xf32> to vector<8x50xbf16>
    %520 = arith.truncf %518 : vector<50x128xf32> to vector<50x128xbf16>
    %cst_157 = arith.constant dense<0.000000e+00> : vector<8x128xf32>
    %521 = tpu.matmul %519, %520, %cst_157 {dimension_numbers = #tpu.dot_dimension_numbers<[1], [0], [0], [1], [0, 0, 1, 1], [], []>} : vector<8x50xbf16>, vector<50x128xbf16>, vector<8x128xf32> -> vector<8x128xf32>
    %c0_158 = arith.constant 0 : index
    %c0_159 = arith.constant 0 : index
    %522 = vector.load %arg21[%c0_158, %c0_159] : memref<50x128xf32, #tpu.memory_space<vmem>>, vector<50x128xf32>
    %523 = arith.truncf %517 : vector<8x50xf32> to vector<8x50xbf16>
    %524 = arith.truncf %522 : vector<50x128xf32> to vector<50x128xbf16>
    %cst_160 = arith.constant dense<0.000000e+00> : vector<8x128xf32>
    %525 = tpu.matmul %523, %524, %cst_160 {dimension_numbers = #tpu.dot_dimension_numbers<[1], [0], [0], [1], [0, 0, 1, 1], [], []>} : vector<8x50xbf16>, vector<50x128xbf16>, vector<8x128xf32> -> vector<8x128xf32>
    %526 = arith.addf %521, %525 : vector<8x128xf32>
    %c0_161 = arith.constant 0 : index
    %c0_162 = arith.constant 0 : index
    %527 = vector.load %arg22[%c0_161, %c0_162] : memref<1x128xf32, #tpu.memory_space<vmem>>, vector<1x128xf32>
    %528 = vector.broadcast %527 : vector<1x128xf32> to vector<8x128xf32>
    %529 = arith.addf %526, %528 : vector<8x128xf32>
    %cst_163 = arith.constant dense<0xFF800000> : vector<8xf32>
    %530 = vector.multi_reduction <maximumf>, %529, %cst_163 [1] : vector<8x128xf32> to vector<8xf32>
    %531 = vector.shape_cast %530 : vector<8xf32> to vector<8x1xf32>
    %532 = vector.broadcast %531 : vector<8x1xf32> to vector<8x128xf32>
    %533 = arith.subf %529, %532 : vector<8x128xf32>
    %534 = math.exp %533 : vector<8x128xf32>
    %cst_164 = arith.constant dense<0.000000e+00> : vector<8xf32>
    %535 = vector.multi_reduction <add>, %534, %cst_164 [1] : vector<8x128xf32> to vector<8xf32>
    %536 = vector.shape_cast %535 : vector<8xf32> to vector<8x1xf32>
    %537 = math.log %536 : vector<8x1xf32>
    %538 = arith.addf %537, %531 : vector<8x1xf32>
    %539 = vector.broadcast %538 : vector<8x1xf32> to vector<8x128xf32>
    %540 = arith.subf %529, %539 : vector<8x128xf32>
    %c0_165 = arith.constant 0 : index
    %c0_166 = arith.constant 0 : index
    %541 = vector.load %arg23[%c0_165, %c0_166] : memref<8x128xf32, #tpu.memory_space<vmem>>, vector<8x128xf32>
    tpu.vector_store %arg23[%c0_165, %c0_166], %540 {strides = array<i32>} : memref<8x128xf32, #tpu.memory_space<vmem>>, vector<8x128xf32>,
    return
  }
  func.func @transform_0(%arg0: i32) -> (i32, i32, i32) {
    %c0_i32 = arith.constant 0 : i32
    %c0_i32_0 = arith.constant 0 : i32
    %c0_i32_1 = arith.constant 0 : i32
    return %arg0, %c0_i32, %c0_i32_0 : i32, i32, i32
  }
  func.func @transform_1(%arg0: i32) -> (i32, i32) {
    %c0_i32 = arith.constant 0 : i32
    %c0_i32_0 = arith.constant 0 : i32
    %c0_i32_1 = arith.constant 0 : i32
    return %c0_i32, %c0_i32_0 : i32, i32
  }
  func.func @transform_2(%arg0: i32) -> (i32, i32) {
    %c0_i32 = arith.constant 0 : i32
    %c0_i32_0 = arith.constant 0 : i32
    %c0_i32_1 = arith.constant 0 : i32
    return %c0_i32, %c0_i32_0 : i32, i32
  }
  func.func @transform_3(%arg0: i32) -> (i32, i32) {
    %c0_i32 = arith.constant 0 : i32
    %c0_i32_0 = arith.constant 0 : i32
    %c0_i32_1 = arith.constant 0 : i32
    return %c0_i32, %c0_i32_0 : i32, i32
  }
  func.func @transform_4(%arg0: i32) -> (i32, i32) {
    %c0_i32 = arith.constant 0 : i32
    %c0_i32_0 = arith.constant 0 : i32
    %c0_i32_1 = arith.constant 0 : i32
    return %c0_i32, %c0_i32_0 : i32, i32
  }
  func.func @transform_5(%arg0: i32) -> (i32, i32) {
    %c0_i32 = arith.constant 0 : i32
    %c0_i32_0 = arith.constant 0 : i32
    %c0_i32_1 = arith.constant 0 : i32
    return %c0_i32, %c0_i32_0 : i32, i32
  }
  func.func @transform_6(%arg0: i32) -> (i32, i32) {
    %c0_i32 = arith.constant 0 : i32
    %c0_i32_0 = arith.constant 0 : i32
    %c0_i32_1 = arith.constant 0 : i32
    return %c0_i32, %c0_i32_0 : i32, i32
  }
  func.func @transform_7(%arg0: i32) -> (i32, i32) {
    %c0_i32 = arith.constant 0 : i32
    %c0_i32_0 = arith.constant 0 : i32
    %c0_i32_1 = arith.constant 0 : i32
    return %c0_i32, %c0_i32_0 : i32, i32
  }
  func.func @transform_8(%arg0: i32) -> (i32, i32) {
    %c0_i32 = arith.constant 0 : i32
    %c0_i32_0 = arith.constant 0 : i32
    %c0_i32_1 = arith.constant 0 : i32
    return %c0_i32, %c0_i32_0 : i32, i32
  }
  func.func @transform_9(%arg0: i32) -> (i32, i32) {
    %c0_i32 = arith.constant 0 : i32
    %c0_i32_0 = arith.constant 0 : i32
    %c0_i32_1 = arith.constant 0 : i32
    return %c0_i32, %c0_i32_0 : i32, i32
  }
  func.func @transform_10(%arg0: i32) -> (i32, i32) {
    %c0_i32 = arith.constant 0 : i32
    %c0_i32_0 = arith.constant 0 : i32
    %c0_i32_1 = arith.constant 0 : i32
    return %c0_i32, %c0_i32_0 : i32, i32
  }
  func.func @transform_11(%arg0: i32) -> (i32, i32) {
    %c0_i32 = arith.constant 0 : i32
    %c0_i32_0 = arith.constant 0 : i32
    %c0_i32_1 = arith.constant 0 : i32
    return %c0_i32, %c0_i32_0 : i32, i32
  }
  func.func @transform_12(%arg0: i32) -> (i32, i32) {
    %c0_i32 = arith.constant 0 : i32
    %c0_i32_0 = arith.constant 0 : i32
    %c0_i32_1 = arith.constant 0 : i32
    return %c0_i32, %c0_i32_0 : i32, i32
  }
  func.func @transform_13(%arg0: i32) -> (i32, i32) {
    %c0_i32 = arith.constant 0 : i32
    %c0_i32_0 = arith.constant 0 : i32
    %c0_i32_1 = arith.constant 0 : i32
    return %c0_i32, %c0_i32_0 : i32, i32
  }
  func.func @transform_14(%arg0: i32) -> (i32, i32) {
    %c0_i32 = arith.constant 0 : i32
    %c0_i32_0 = arith.constant 0 : i32
    %c0_i32_1 = arith.constant 0 : i32
    return %c0_i32, %c0_i32_0 : i32, i32
  }
  func.func @transform_15(%arg0: i32) -> (i32, i32) {
    %c0_i32 = arith.constant 0 : i32
    %c0_i32_0 = arith.constant 0 : i32
    %c0_i32_1 = arith.constant 0 : i32
    return %c0_i32, %c0_i32_0 : i32, i32
  }
  func.func @transform_16(%arg0: i32) -> (i32, i32) {
    %c0_i32 = arith.constant 0 : i32
    %c0_i32_0 = arith.constant 0 : i32
    %c0_i32_1 = arith.constant 0 : i32
    return %c0_i32, %c0_i32_0 : i32, i32
  }
  func.func @transform_17(%arg0: i32) -> (i32, i32) {
    %c0_i32 = arith.constant 0 : i32
    %c0_i32_0 = arith.constant 0 : i32
    %c0_i32_1 = arith.constant 0 : i32
    return %c0_i32, %c0_i32_0 : i32, i32
  }
  func.func @transform_18(%arg0: i32) -> (i32, i32) {
    %c0_i32 = arith.constant 0 : i32
    %c0_i32_0 = arith.constant 0 : i32
    %c0_i32_1 = arith.constant 0 : i32
    return %c0_i32, %c0_i32_0 : i32, i32
  }
  func.func @transform_19(%arg0: i32) -> (i32, i32) {
    %c0_i32 = arith.constant 0 : i32
    %c0_i32_0 = arith.constant 0 : i32
    %c0_i32_1 = arith.constant 0 : i32
    return %c0_i32, %c0_i32_0 : i32, i32
  }
  func.func @transform_20(%arg0: i32) -> (i32, i32) {
    %c0_i32 = arith.constant 0 : i32
    %c0_i32_0 = arith.constant 0 : i32
    %c0_i32_1 = arith.constant 0 : i32
    return %c0_i32, %c0_i32_0 : i32, i32
  }
  func.func @transform_21(%arg0: i32) -> (i32, i32) {
    %c0_i32 = arith.constant 0 : i32
    %c0_i32_0 = arith.constant 0 : i32
    %c0_i32_1 = arith.constant 0 : i32
    return %c0_i32, %c0_i32_0 : i32, i32
  }
  func.func @transform_22(%arg0: i32) -> (i32, i32) {
    %c0_i32 = arith.constant 0 : i32
    %c0_i32_0 = arith.constant 0 : i32
    return %arg0, %c0_i32 : i32, i32
  }
}

</mosaic_0001>

<llo_original>
// kernel: tpu_custom_call.1
$region0: #{tpu_custom_call.1}
  #allocation0 [shape = 'u32[]', space=smem, size = 0x4, offset = 0x4, fixed_abs, tag = 'smem constant byte address 0x4 - core index']
  #allocation1 [shape = 'u32[144,128]{1,0:T(1,128)}', space=vmem, size = 0x12000, scoped, tag = 'internal scratch']
  #allocation2 [shape = 'f32[64,128]{1,0:T(8,128)}', space=vmem, size = 0x8000, scoped, tag = 'scratch operand']
  #allocation3 [shape = 'f32[64,128]{1,0:T(8,128)}', space=vmem, size = 0x8000, scoped, tag = 'scratch operand']
  %s0 = inlined_call_operand.vmem [shape: f32[1,64,16], index: 0, kind: input, shape index: {}]
  %s1 = inlined_call_operand.hbm [shape: f32[16,128], index: 1, kind: input, shape index: {}]
  %s2 = inlined_call_operand.hbm [shape: f32[1,128], index: 2, kind: input, shape index: {}]
  %s3 = inlined_call_operand.hbm [shape: f32[32,64], index: 3, kind: input, shape index: {}]
  %s4 = inlined_call_operand.hbm [shape: f32[32,32], index: 4, kind: input, shape index: {}]
  %s5 = inlined_call_operand.hbm [shape: f32[1,32], index: 5, kind: input, shape index: {}]
  %s6 = inlined_call_operand.hbm [shape: f32[16,128], index: 6, kind: input, shape index: {}]
  %s7 = inlined_call_operand.hbm [shape: f32[1,128], index: 7, kind: input, shape index: {}]
  %s8 = inlined_call_operand.hbm [shape: f32[32,64], index: 8, kind: input, shape index: {}]
  %s9 = inlined_call_operand.hbm [shape: f32[32,32], index: 9, kind: input, shape index: {}]
  %s10 = inlined_call_operand.hbm [shape: f32[1,32], index: 10, kind: input, shape index: {}]
  %s11 = inlined_call_operand.hbm [shape: f32[32,32], index: 11, kind: input, shape index: {}]
  %s12 = inlined_call_operand.hbm [shape: f32[1,32], index: 12, kind: input, shape index: {}]
  %s13 = inlined_call_operand.hbm [shape: f32[32,50], index: 13, kind: input, shape index: {}]
  %s14 = inlined_call_operand.hbm [shape: f32[1,50], index: 14, kind: input, shape index: {}]
  %s15 = inlined_call_operand.hbm [shape: f32[32,32], index: 15, kind: input, shape index: {}]
  %s16 = inlined_call_operand.hbm [shape: f32[1,32], index: 16, kind: input, shape index: {}]
  %s17 = inlined_call_operand.vmem [shape: f32[32,50], index: 17, kind: input, shape index: {}]
  %s18 = inlined_call_operand.vmem [shape: f32[1,50], index: 18, kind: input, shape index: {}]
  %s19 = inlined_call_operand.vmem [shape: f32[50,128], index: 19, kind: input, shape index: {}]
  %s20 = inlined_call_operand.vmem [shape: f32[50,128], index: 20, kind: input, shape index: {}]
  %s21 = inlined_call_operand.vmem [shape: f32[1,128], index: 21, kind: input, shape index: {}]
  %s22 = inlined_call_operand.hbm [shape: f32[8,128], index: 22, kind: output, shape index: {}]
  %s23 = sld [smem:[#allocation0]]
  $region162: #{tpu_custom_call.1} parent=0
    _
  %s25 = ssub.s32 1, %s23
  %s26 = scalar_select 0, %s25, %s23
  $region1: #{tpu_custom_call.1} parent=0
    #allocation4 [shape = 'u8[8192]{0}', space=vmem, size = 0x2000, scoped, tag = 'input window, operand 1, single buffered']
    #allocation5 [shape = 's32[1]{0}', space=sflag, size = 0x4, scoped, tag = 'scoped memory for tpu_custom_call.1']
    #allocation6 [shape = 's32[1]{0}', space=sflag, size = 0x4, scoped, tag = 'scoped memory for tpu_custom_call.1']
    #allocation7 [shape = 'u8[512]{0}', space=vmem, size = 0x400, scoped, tag = 'input window, operand 2, single buffered']
    #allocation8 [shape = 's32[1]{0}', space=sflag, size = 0x4, scoped, tag = 'scoped memory for tpu_custom_call.1']
    #allocation9 [shape = 'u8[16384]{0}', space=vmem, size = 0x4000, scoped, tag = 'input window, operand 3, single buffered']
    #allocation10 [shape = 'u8[16384]{0}', space=vmem, size = 0x4000, scoped, tag = 'input window, operand 4, single buffered']
    #allocation11 [shape = 's32[1]{0}', space=sflag, size = 0x4, scoped, tag = 'scoped memory for tpu_custom_call.1']
    #allocation12 [shape = 'u8[512]{0}', space=vmem, size = 0x400, scoped, tag = 'input window, operand 5, single buffered']
    #allocation13 [shape = 'u8[8192]{0}', space=vmem, size = 0x2000, scoped, tag = 'input window, operand 6, single buffered']
    #allocation14 [shape = 's32[1]{0}', space=sflag, size = 0x4, scoped, tag = 'scoped memory for tpu_custom_call.1']
    #allocation15 [shape = 'u8[512]{0}', space=vmem, size = 0x400, scoped, tag = 'input window, operand 7, single buffered']
    #allocation16 [shape = 'u8[16384]{0}', space=vmem, size = 0x4000, scoped, tag = 'input window, operand 8, single buffered']
    #allocation17 [shape = 's32[1]{0}', space=sflag, size = 0x4, scoped, tag = 'scoped memory for tpu_custom_call.1']
    #allocation18 [shape = 'u8[16384]{0}', space=vmem, size = 0x4000, scoped, tag = 'input window, operand 9, single buffered']
    #allocation19 [shape = 'u8[512]{0}', space=vmem, size = 0x400, scoped, tag = 'input window, operand 10, single buffered']
    #allocation20 [shape = 's32[1]{0}', space=sflag, size = 0x4, scoped, tag = 'scoped memory for tpu_custom_call.1']
    #allocation21 [shape = 'u8[16384]{0}', space=vmem, size = 0x4000, scoped, tag = 'input window, operand 11, single buffered']
    #allocation22 [shape = 'u8[512]{0}', space=vmem, size = 0x400, scoped, tag = 'input window, operand 12, single buffered']
    #allocation23 [shape = 's32[1]{0}', space=sflag, size = 0x4, scoped, tag = 'scoped memory for tpu_custom_call.1']
    #allocation24 [shape = 'u8[16384]{0}', space=vmem, size = 0x4000, scoped, tag = 'input window, operand 13, single buffered']
    #allocation25 [shape = 'u8[512]{0}', space=vmem, size = 0x400, scoped, tag = 'input window, operand 14, single buffered']
    #allocation26 [shape = 's32[1]{0}', space=sflag, size = 0x4, scoped, tag = 'scoped memory for tpu_custom_call.1']
    #allocation27 [shape = 'u8[16384]{0}', space=vmem, size = 0x4000, scoped, tag = 'input window, operand 15, single buffered']
    #allocation28 [shape = 'u8[512]{0}', space=vmem, size = 0x400, scoped, tag = 'input window, operand 16, single buffered']
    #allocation29 [shape = 's32[1]{0}', space=sflag, size = 0x4, scoped, tag = 'scoped memory for tpu_custom_call.1']
    #allocation30 [shape = 'u8[4096]{0}', space=vmem, size = 0x1000, scoped, tag = 'output window, operand 0, single buffered']
    %27 = vsyncpa [#allocation5], 0
    %28 = vsyncpa [#allocation8], 0
    %29 = vsyncpa [#allocation11], 0
    %30 = vsyncpa [#allocation14], 0
    %31 = vsyncpa [#allocation17], 0
    %32 = vsyncpa [#allocation20], 0
    %33 = vsyncpa [#allocation23], 0
    %34 = vsyncpa [#allocation26], 0
    %35 = vsyncpa [#allocation29], 0
    %36 = vsyncpa [#allocation6], 0
    // Predicated region
    $region2: #{tpu_custom_call.1} parent=1 // pred_check
      _
    $region3: #{tpu_custom_call.1} parent=1 // pred_check_branch
      %38 = sbr.rel (0) target = $region5
    $region4: #{tpu_custom_call.1} parent=1 // pred_region
      _
    $region5: #{tpu_custom_call.1} parent=1 // pred_fallthru
      _
    // Predicated region
    $region6: #{tpu_custom_call.1} parent=1 // pred_check
      _
    $region7: #{tpu_custom_call.1} parent=1 // pred_check_branch
      %40 = sbr.rel (0) target = $region9
    $region8: #{tpu_custom_call.1} parent=1 // pred_region
      %s42 = ssub.s32 256, 256
      %43 = vsyncadd [#allocation5], %s42
      %s44 = sshll.u32 [#allocation4], 4
      %s45 = int_to_ptr.vmem [resolvable:$true] %s44
      %50 = dma.hbm_to_vmem [thread:$0]  %s1, 256, %s45, [#allocation5], 128, 128, 8
    $region9: #{tpu_custom_call.1} parent=1 // pred_fallthru
      _
    // Predicated region
    $region10: #{tpu_custom_call.1} parent=1 // pred_check
      _
    $region11: #{tpu_custom_call.1} parent=1 // pred_check_branch
      %52 = sbr.rel (0) target = $region13
    $region12: #{tpu_custom_call.1} parent=1 // pred_region
      %s54 = ssub.s32 16, 16
      %55 = vsyncadd [#allocation8], %s54
      %s57 = sshll.u32 [#allocation7], 4
      %s58 = int_to_ptr.vmem [resolvable:$true] %s57
      %60 = dma.hbm_to_vmem [thread:$0]  %s2, 16, %s58, [#allocation8]
    $region13: #{tpu_custom_call.1} parent=1 // pred_fallthru
      _
    // Predicated region
    $region14: #{tpu_custom_call.1} parent=1 // pred_check
      _
    $region15: #{tpu_custom_call.1} parent=1 // pred_check_branch
      %62 = sbr.rel (0) target = $region17
    $region16: #{tpu_custom_call.1} parent=1 // pred_region
      %s64 = ssub.s32 512, 512
      %65 = vsyncadd [#allocation8], %s64
      %s66 = sshll.u32 [#allocation9], 4
      %s67 = int_to_ptr.vmem [resolvable:$true] %s66
      %72 = dma.hbm_to_vmem [thread:$0]  %s3, 512, %s67, [#allocation8], 128, 128, 8
    $region17: #{tpu_custom_call.1} parent=1 // pred_fallthru
      _
    // Predicated region
    $region18: #{tpu_custom_call.1} parent=1 // pred_check
      _
    $region19: #{tpu_custom_call.1} parent=1 // pred_check_branch
      %74 = sbr.rel (0) target = $region21
    $region20: #{tpu_custom_call.1} parent=1 // pred_region
      %s76 = ssub.s32 512, 512
      %77 = vsyncadd [#allocation11], %s76
      %s78 = sshll.u32 [#allocation10], 4
      %s79 = int_to_ptr.vmem [resolvable:$true] %s78
      %84 = dma.hbm_to_vmem [thread:$0]  %s4, 512, %s79, [#allocation11], 128, 128, 8
    $region21: #{tpu_custom_call.1} parent=1 // pred_fallthru
      _
    // Predicated region
    $region22: #{tpu_custom_call.1} parent=1 // pred_check
      _
    $region23: #{tpu_custom_call.1} parent=1 // pred_check_branch
      %86 = sbr.rel (0) target = $region25
    $region24: #{tpu_custom_call.1} parent=1 // pred_region
      %s88 = ssub.s32 16, 16
      %89 = vsyncadd [#allocation11], %s88
      %s91 = sshll.u32 [#allocation12], 4
      %s92 = int_to_ptr.vmem [resolvable:$true] %s91
      %94 = dma.hbm_to_vmem [thread:$0]  %s5, 16, %s92, [#allocation11]
    $region25: #{tpu_custom_call.1} parent=1 // pred_fallthru
      _
    // Predicated region
    $region26: #{tpu_custom_call.1} parent=1 // pred_check
      _
    $region27: #{tpu_custom_call.1} parent=1 // pred_check_branch
      %96 = sbr.rel (0) target = $region29
    $region28: #{tpu_custom_call.1} parent=1 // pred_region
      %s98 = ssub.s32 256, 256
      %99 = vsyncadd [#allocation14], %s98
      %s100 = sshll.u32 [#allocation13], 4
      %s101 = int_to_ptr.vmem [resolvable:$true] %s100
      %106 = dma.hbm_to_vmem [thread:$0]  %s6, 256, %s101, [#allocation14], 128, 128, 8
    $region29: #{tpu_custom_call.1} parent=1 // pred_fallthru
      _
    // Predicated region
    $region30: #{tpu_custom_call.1} parent=1 // pred_check
      _
    $region31: #{tpu_custom_call.1} parent=1 // pred_check_branch
      %108 = sbr.rel (0) target = $region33
    $region32: #{tpu_custom_call.1} parent=1 // pred_region
      %s110 = ssub.s32 16, 16
      %111 = vsyncadd [#allocation14], %s110
      %s113 = sshll.u32 [#allocation15], 4
      %s114 = int_to_ptr.vmem [resolvable:$true] %s113
      %116 = dma.hbm_to_vmem [thread:$0]  %s7, 16, %s114, [#allocation14]
    $region33: #{tpu_custom_call.1} parent=1 // pred_fallthru
      _
    // Predicated region
    $region34: #{tpu_custom_call.1} parent=1 // pred_check
      _
    $region35: #{tpu_custom_call.1} parent=1 // pred_check_branch
      %118 = sbr.rel (0) target = $region37
    $region36: #{tpu_custom_call.1} parent=1 // pred_region
      %s120 = ssub.s32 512, 512
      %121 = vsyncadd [#allocation17], %s120
      %s122 = sshll.u32 [#allocation16], 4
      %s123 = int_to_ptr.vmem [resolvable:$true] %s122
      %128 = dma.hbm_to_vmem [thread:$0]  %s8, 512, %s123, [#allocation17], 128, 128, 8
    $region37: #{tpu_custom_call.1} parent=1 // pred_fallthru
      _
    // Predicated region
    $region38: #{tpu_custom_call.1} parent=1 // pred_check
      _
    $region39: #{tpu_custom_call.1} parent=1 // pred_check_branch
      %130 = sbr.rel (0) target = $region41
    $region40: #{tpu_custom_call.1} parent=1 // pred_region
      %s132 = ssub.s32 512, 512
      %133 = vsyncadd [#allocation17], %s132
      %s134 = sshll.u32 [#allocation18], 4
      %s135 = int_to_ptr.vmem [resolvable:$true] %s134
      %140 = dma.hbm_to_vmem [thread:$0]  %s9, 512, %s135, [#allocation17], 128, 128, 8
    $region41: #{tpu_custom_call.1} parent=1 // pred_fallthru
      _
    // Predicated region
    $region42: #{tpu_custom_call.1} parent=1 // pred_check
      _
    $region43: #{tpu_custom_call.1} parent=1 // pred_check_branch
      %142 = sbr.rel (0) target = $region45
    $region44: #{tpu_custom_call.1} parent=1 // pred_region
      %s144 = ssub.s32 16, 16
      %145 = vsyncadd [#allocation20], %s144
      %s147 = sshll.u32 [#allocation19], 4
      %s148 = int_to_ptr.vmem [resolvable:$true] %s147
      %150 = dma.hbm_to_vmem [thread:$0]  %s10, 16, %s148, [#allocation20]
    $region45: #{tpu_custom_call.1} parent=1 // pred_fallthru
      _
    // Predicated region
    $region46: #{tpu_custom_call.1} parent=1 // pred_check
      _
    $region47: #{tpu_custom_call.1} parent=1 // pred_check_branch
      %152 = sbr.rel (0) target = $region49
    $region48: #{tpu_custom_call.1} parent=1 // pred_region
      %s154 = ssub.s32 512, 512
      %155 = vsyncadd [#allocation20], %s154
      %s156 = sshll.u32 [#allocation21], 4
      %s157 = int_to_ptr.vmem [resolvable:$true] %s156
      %162 = dma.hbm_to_vmem [thread:$0]  %s11, 512, %s157, [#allocation20], 128, 128, 8
    $region49: #{tpu_custom_call.1} parent=1 // pred_fallthru
      _
    // Predicated region
    $region50: #{tpu_custom_call.1} parent=1 // pred_check
      _
    $region51: #{tpu_custom_call.1} parent=1 // pred_check_branch
      %164 = sbr.rel (0) target = $region53
    $region52: #{tpu_custom_call.1} parent=1 // pred_region
      %s166 = ssub.s32 16, 16
      %167 = vsyncadd [#allocation23], %s166
      %s169 = sshll.u32 [#allocation22], 4
      %s170 = int_to_ptr.vmem [resolvable:$true] %s169
      %172 = dma.hbm_to_vmem [thread:$0]  %s12, 16, %s170, [#allocation23]
    $region53: #{tpu_custom_call.1} parent=1 // pred_fallthru
      _
    // Predicated region
    $region54: #{tpu_custom_call.1} parent=1 // pred_check
      _
    $region55: #{tpu_custom_call.1} parent=1 // pred_check_branch
      %174 = sbr.rel (0) target = $region57
    $region56: #{tpu_custom_call.1} parent=1 // pred_region
      %s176 = ssub.s32 512, 512
      %177 = vsyncadd [#allocation23], %s176
      %s178 = sshll.u32 [#allocation24], 4
      %s179 = int_to_ptr.vmem [resolvable:$true] %s178
      %184 = dma.hbm_to_vmem [thread:$0]  %s13, 512, %s179, [#allocation23], 128, 128, 8
    $region57: #{tpu_custom_call.1} parent=1 // pred_fallthru
      _
    // Predicated region
    $region58: #{tpu_custom_call.1} parent=1 // pred_check
      _
    $region59: #{tpu_custom_call.1} parent=1 // pred_check_branch
      %186 = sbr.rel (0) target = $region61
    $region60: #{tpu_custom_call.1} parent=1 // pred_region
      %s188 = ssub.s32 16, 16
      %189 = vsyncadd [#allocation26], %s188
      %s191 = sshll.u32 [#allocation25], 4
      %s192 = int_to_ptr.vmem [resolvable:$true] %s191
      %194 = dma.hbm_to_vmem [thread:$0]  %s14, 16, %s192, [#allocation26]
    $region61: #{tpu_custom_call.1} parent=1 // pred_fallthru
      _
    // Predicated region
    $region62: #{tpu_custom_call.1} parent=1 // pred_check
      _
    $region63: #{tpu_custom_call.1} parent=1 // pred_check_branch
      %196 = sbr.rel (0) target = $region65
    $region64: #{tpu_custom_call.1} parent=1 // pred_region
      %s198 = ssub.s32 512, 512
      %199 = vsyncadd [#allocation26], %s198
      %s200 = sshll.u32 [#allocation27], 4
      %s201 = int_to_ptr.vmem [resolvable:$true] %s200
      %206 = dma.hbm_to_vmem [thread:$0]  %s15, 512, %s201, [#allocation26], 128, 128, 8
    $region65: #{tpu_custom_call.1} parent=1 // pred_fallthru
      _
    // Predicated region
    $region66: #{tpu_custom_call.1} parent=1 // pred_check
      _
    $region67: #{tpu_custom_call.1} parent=1 // pred_check_branch
      %208 = sbr.rel (0) target = $region69
    $region68: #{tpu_custom_call.1} parent=1 // pred_region
      %s210 = ssub.s32 16, 16
      %211 = vsyncadd [#allocation29], %s210
      %s213 = sshll.u32 [#allocation28], 4
      %s214 = int_to_ptr.vmem [resolvable:$true] %s213
      %216 = dma.hbm_to_vmem [thread:$0]  %s16, 16, %s214, [#allocation29]
    $region69: #{tpu_custom_call.1} parent=1 // pred_fallthru
      _
    // Predicated region
    $region70: #{tpu_custom_call.1} parent=1 // pred_check
      _
    $region71: #{tpu_custom_call.1} parent=1 // pred_check_branch
      %218 = sbr.rel (0) target = $region73
    $region72: #{tpu_custom_call.1} parent=1 // pred_region
      _
    $region73: #{tpu_custom_call.1} parent=1 // pred_fallthru
      _
    // Predicated region
    $region74: #{tpu_custom_call.1} parent=1 // pred_check
      _
    $region75: #{tpu_custom_call.1} parent=1 // pred_check_branch
      %220 = sbr.rel (0) target = $region77
    $region76: #{tpu_custom_call.1} parent=1 // pred_region
      _
    $region77: #{tpu_custom_call.1} parent=1 // pred_fallthru
      _
    // Predicated region
    $region78: #{tpu_custom_call.1} parent=1 // pred_check
      _
    $region79: #{tpu_custom_call.1} parent=1 // pred_check_branch
      %222 = sbr.rel (0) target = $region81
    $region80: #{tpu_custom_call.1} parent=1 // pred_region
      _
    $region81: #{tpu_custom_call.1} parent=1 // pred_fallthru
      _
    // Predicated region
    $region82: #{tpu_custom_call.1} parent=1 // pred_check
      _
    $region83: #{tpu_custom_call.1} parent=1 // pred_check_branch
      %224 = sbr.rel (0) target = $region85
    $region84: #{tpu_custom_call.1} parent=1 // pred_region
      _
    $region85: #{tpu_custom_call.1} parent=1 // pred_fallthru
      _
    // Predicated region
    $region86: #{tpu_custom_call.1} parent=1 // pred_check
      _
    $region87: #{tpu_custom_call.1} parent=1 // pred_check_branch
      %226 = sbr.rel (0) target = $region89
    $region88: #{tpu_custom_call.1} parent=1 // pred_region
      _
    $region89: #{tpu_custom_call.1} parent=1 // pred_fallthru
      _
    // Predicated region
    $region90: #{tpu_custom_call.1} parent=1 // pred_check
      _
    $region91: #{tpu_custom_call.1} parent=1 // pred_check_branch
      %228 = sbr.rel (0) target = $region93
    $region92: #{tpu_custom_call.1} parent=1 // pred_region
      %229 = dma.done [#allocation5], 256
    $region93: #{tpu_custom_call.1} parent=1 // pred_fallthru
      _
    // Predicated region
    $region94: #{tpu_custom_call.1} parent=1 // pred_check
      _
    $region95: #{tpu_custom_call.1} parent=1 // pred_check_branch
      %231 = sbr.rel (0) target = $region97
    $region96: #{tpu_custom_call.1} parent=1 // pred_region
      %232 = dma.done [#allocation8], 16
    $region97: #{tpu_custom_call.1} parent=1 // pred_fallthru
      _
    // Predicated region
    $region98: #{tpu_custom_call.1} parent=1 // pred_check
      _
    $region99: #{tpu_custom_call.1} parent=1 // pred_check_branch
      %234 = sbr.rel (0) target = $region101
    $region100: #{tpu_custom_call.1} parent=1 // pred_region
      %235 = dma.done [#allocation8], 512
    $region101: #{tpu_custom_call.1} parent=1 // pred_fallthru
      _
    // Predicated region
    $region102: #{tpu_custom_call.1} parent=1 // pred_check
      _
    $region103: #{tpu_custom_call.1} parent=1 // pred_check_branch
      %237 = sbr.rel (0) target = $region105
    $region104: #{tpu_custom_call.1} parent=1 // pred_region
      %238 = dma.done [#allocation11], 512
    $region105: #{tpu_custom_call.1} parent=1 // pred_fallthru
      _
    // Predicated region
    $region106: #{tpu_custom_call.1} parent=1 // pred_check
      _
    $region107: #{tpu_custom_call.1} parent=1 // pred_check_branch
      %240 = sbr.rel (0) target = $region109
    $region108: #{tpu_custom_call.1} parent=1 // pred_region
      %241 = dma.done [#allocation11], 16
    $region109: #{tpu_custom_call.1} parent=1 // pred_fallthru
      _
    // Predicated region
    $region110: #{tpu_custom_call.1} parent=1 // pred_check
      _
    $region111: #{tpu_custom_call.1} parent=1 // pred_check_branch
      %243 = sbr.rel (0) target = $region113
    $region112: #{tpu_custom_call.1} parent=1 // pred_region
      %244 = dma.done [#allocation14], 256
    $region113: #{tpu_custom_call.1} parent=1 // pred_fallthru
      _
    // Predicated region
    $region114: #{tpu_custom_call.1} parent=1 // pred_check
      _
    $region115: #{tpu_custom_call.1} parent=1 // pred_check_branch
      %246 = sbr.rel (0) target = $region117
    $region116: #{tpu_custom_call.1} parent=1 // pred_region
      %247 = dma.done [#allocation14], 16
    $region117: #{tpu_custom_call.1} parent=1 // pred_fallthru
      _
    // Predicated region
    $region118: #{tpu_custom_call.1} parent=1 // pred_check
      _
    $region119: #{tpu_custom_call.1} parent=1 // pred_check_branch
      %249 = sbr.rel (0) target = $region121
    $region120: #{tpu_custom_call.1} parent=1 // pred_region
      %250 = dma.done [#allocation17], 512
    $region121: #{tpu_custom_call.1} parent=1 // pred_fallthru
      _
    // Predicated region
    $region122: #{tpu_custom_call.1} parent=1 // pred_check
      _
    $region123: #{tpu_custom_call.1} parent=1 // pred_check_branch
      %252 = sbr.rel (0) target = $region125
    $region124: #{tpu_custom_call.1} parent=1 // pred_region
      %253 = dma.done [#allocation17], 512
    $region125: #{tpu_custom_call.1} parent=1 // pred_fallthru
      _
    // Predicated region
    $region126: #{tpu_custom_call.1} parent=1 // pred_check
      _
    $region127: #{tpu_custom_call.1} parent=1 // pred_check_branch
      %255 = sbr.rel (0) target = $region129
    $region128: #{tpu_custom_call.1} parent=1 // pred_region
      %256 = dma.done [#allocation20], 16
    $region129: #{tpu_custom_call.1} parent=1 // pred_fallthru
      _
    // Predicated region
    $region130: #{tpu_custom_call.1} parent=1 // pred_check
      _
    $region131: #{tpu_custom_call.1} parent=1 // pred_check_branch
      %258 = sbr.rel (0) target = $region133
    $region132: #{tpu_custom_call.1} parent=1 // pred_region
      %259 = dma.done [#allocation20], 512
    $region133: #{tpu_custom_call.1} parent=1 // pred_fallthru
      _
    // Predicated region
    $region134: #{tpu_custom_call.1} parent=1 // pred_check
      _
    $region135: #{tpu_custom_call.1} parent=1 // pred_check_branch
      %261 = sbr.rel (0) target = $region137
    $region136: #{tpu_custom_call.1} parent=1 // pred_region
      %262 = dma.done [#allocation23], 16
    $region137: #{tpu_custom_call.1} parent=1 // pred_fallthru
      _
    // Predicated region
    $region138: #{tpu_custom_call.1} parent=1 // pred_check
      _
    $region139: #{tpu_custom_call.1} parent=1 // pred_check_branch
      %264 = sbr.rel (0) target = $region141
    $region140: #{tpu_custom_call.1} parent=1 // pred_region
      %265 = dma.done [#allocation23], 512
    $region141: #{tpu_custom_call.1} parent=1 // pred_fallthru
      _
    // Predicated region
    $region142: #{tpu_custom_call.1} parent=1 // pred_check
      _
    $region143: #{tpu_custom_call.1} parent=1 // pred_check_branch
      %267 = sbr.rel (0) target = $region145
    $region144: #{tpu_custom_call.1} parent=1 // pred_region
      %268 = dma.done [#allocation26], 16
    $region145: #{tpu_custom_call.1} parent=1 // pred_fallthru
      _
    // Predicated region
    $region146: #{tpu_custom_call.1} parent=1 // pred_check
      _
    $region147: #{tpu_custom_call.1} parent=1 // pred_check_branch
      %270 = sbr.rel (0) target = $region149
    $region148: #{tpu_custom_call.1} parent=1 // pred_region
      %271 = dma.done [#allocation26], 512
    $region149: #{tpu_custom_call.1} parent=1 // pred_fallthru
      _
    // Predicated region
    $region150: #{tpu_custom_call.1} parent=1 // pred_check
      _
    $region151: #{tpu_custom_call.1} parent=1 // pred_check_branch
      %273 = sbr.rel (0) target = $region153
    $region152: #{tpu_custom_call.1} parent=1 // pred_region
      %274 = dma.done [#allocation29], 16
    $region153: #{tpu_custom_call.1} parent=1 // pred_fallthru
      _
    %v276 = vld [vmem:[%s0] sm:$0xff]
    %v277 = vld [vmem:[%s0 + $0x8] sm:$0xff]
    %v278 = vld [vmem:[%s0 + $0x10] sm:$0xff]
    %v279 = vld [vmem:[%s0 + $0x18] sm:$0xff]
    %v280 = vld [vmem:[%s0 + $0x20] sm:$0xff]
    %v281 = vld [vmem:[%s0 + $0x28] sm:$0xff]
    %v282 = vld [vmem:[%s0 + $0x30] sm:$0xff]
    %v283 = vld [vmem:[%s0 + $0x38] sm:$0xff]
    %v284 = vld [vmem:[#allocation4] sm:$0xff]
    %v285 = vld [vmem:[#allocation4 + $0x8] sm:$0xff]
    %v286 = vpack.c.bf16 %v277, %v276
    %v287 = vpack.c.bf16 %v279, %v278
    %v288 = vpack.c.bf16 %v281, %v280
    %v289 = vpack.c.bf16 %v283, %v282
    %v290 = vpack.c.bf16 %v285, %v284
    %v291 = vld [vmem:[#allocation7] sm:$0x1]
    %v293 = vlaneseq
    %v294 = vshrl.u32 %v293, 7
    %v295 = vsub.s32 0, %v294
    %v296 = vrot.slane %v291, %v295
    %vm298 = vcmask 130048
    %v300 = vsel %vm298, %v286, 0
    %v303 = vsel %vm298, %v287, 0
    %v306 = vsel %vm298, %v288, 0
    %v309 = vsel %vm298, %v289, 0
    %311 = vmatprep.subr.bf16.mxu0 0
    %312 = vmatpush1.bf16.msra.mxu0 %v290
    %313 = vmatprep.subr.bf16.mxu0 0
    %314 = vmatpush1.bf16.msra.mxu0 0
    %315 = vmatprep.subr.bf16.mxu0 0
    %316 = vmatpush1.bf16.msra.mxu0 0
    %317 = vmatprep.subr.bf16.mxu0 0
    %318 = vmatpush1.bf16.msra.mxu0 0
    %319 = vmatprep.subr.bf16.mxu0 0
    %320 = vmatpush1.bf16.msra.mxu0 0
    %321 = vmatprep.subr.bf16.mxu0 0
    %322 = vmatpush1.bf16.msra.mxu0 0
    %323 = vmatprep.subr.bf16.mxu0 0
    %324 = vmatpush1.bf16.msra.mxu0 0
    %325 = vmatprep.subr.bf16.mxu0 0
    %326 = vmatpush1.bf16.msra.mxu0 0
    %327 = vmatprep.subr.bf16.mxu0 0
    %328 = vmatpush1.bf16.msra.mxu0 0
    %329 = vmatprep.subr.bf16.mxu0 0
    %330 = vmatpush1.bf16.msra.mxu0 0
    %331 = vmatprep.subr.bf16.mxu0 0
    %332 = vmatpush1.bf16.msra.mxu0 0
    %333 = vmatprep.subr.bf16.mxu0 0
    %334 = vmatpush1.bf16.msra.mxu0 0
    %335 = vmatprep.subr.bf16.mxu0 0
    %336 = vmatpush1.bf16.msra.mxu0 0
    %337 = vmatprep.subr.bf16.mxu0 0
    %338 = vmatpush1.bf16.msra.mxu0 0
    %339 = vmatprep.subr.bf16.mxu0 0
    %340 = vmatpush1.bf16.msra.mxu0 0
    %341 = vmatprep.subr.bf16.mxu0 0
    %342 = vmatpush1.bf16.msra.mxu0 0
    %343 = vmatprep.mubr.bf16.mxu0 0
    %344 = vmatmul.mubr.bf16.gmra.mrb[0].mxu0 %v300
    %v345 = vpop.f32.mrb[0].mxu0
    %v346 = vadd.f32 %v296, %v345
    %v347 = vpop.f32.mrb[0].mxu0
    %v348 = vpop.f32.mrb[0].mxu0
    %v349 = vadd.f32 %v296, %v348
    %v350 = vpop.f32.mrb[0].mxu0
    %351 = vmatprep.mubr.bf16.mxu0 0
    %352 = vmatmul.mubr.bf16.gmra.mrb[0].mxu0 %v303
    %v353 = vpop.f32.mrb[0].mxu0
    %v354 = vadd.f32 %v296, %v353
    %v355 = vpop.f32.mrb[0].mxu0
    %v356 = vpop.f32.mrb[0].mxu0
    %v357 = vadd.f32 %v296, %v356
    %v358 = vpop.f32.mrb[0].mxu0
    %359 = vmatprep.mubr.bf16.mxu0 0
    %360 = vmatmul.mubr.bf16.gmra.mrb[0].mxu0 %v306
    %v361 = vpop.f32.mrb[0].mxu0
    %v362 = vadd.f32 %v296, %v361
    %v363 = vpop.f32.mrb[0].mxu0
    %v364 = vpop.f32.mrb[0].mxu0
    %v365 = vadd.f32 %v296, %v364
    %v366 = vpop.f32.mrb[0].mxu0
    %367 = vmatprep.mubr.bf16.mxu0 0
    %368 = vmatmul.mubr.bf16.gmra.mrb[0].mxu0 %v309
    %v369 = vpop.f32.mrb[0].mxu0
    %v370 = vadd.f32 %v296, %v369
    %v371 = vpop.f32.mrb[0].mxu0
    %v372 = vpop.f32.mrb[0].mxu0
    %v373 = vadd.f32 %v296, %v372
    %v374 = vpop.f32.mrb[0].mxu0
    %375 = vdwg.mxu0
    %376 = vst [vmem:[#allocation2] sm:$0xff] %v346
    %377 = vst [vmem:[#allocation2 + $0x8] sm:$0xff] %v349
    %378 = vst [vmem:[#allocation2 + $0x10] sm:$0xff] %v354
    %379 = vst [vmem:[#allocation2 + $0x18] sm:$0xff] %v357
    %380 = vst [vmem:[#allocation2 + $0x20] sm:$0xff] %v362
    %381 = vst [vmem:[#allocation2 + $0x28] sm:$0xff] %v365
    %382 = vst [vmem:[#allocation2 + $0x30] sm:$0xff] %v370
    %383 = vst [vmem:[#allocation2 + $0x38] sm:$0xff] %v373
    %v384 = vld [vmem:[#allocation13] sm:$0xff]
    %v385 = vld [vmem:[#allocation13 + $0x8] sm:$0xff]
    %v386 = vpack.c.bf16 %v385, %v384
    %v387 = vld [vmem:[#allocation15] sm:$0x1]
    %v389 = vlaneseq
    %v390 = vshrl.u32 %v389, 7
    %v391 = vsub.s32 0, %v390
    %v392 = vrot.slane %v387, %v391
    %394 = vmatprep.subr.bf16.mxu0 0
    %395 = vmatpush1.bf16.msra.mxu0 %v386
    %396 = vmatprep.subr.bf16.mxu0 0
    %397 = vmatpush1.bf16.msra.mxu0 0
    %398 = vmatprep.subr.bf16.mxu0 0
    %399 = vmatpush1.bf16.msra.mxu0 0
    %400 = vmatprep.subr.bf16.mxu0 0
    %401 = vmatpush1.bf16.msra.mxu0 0
    %402 = vmatprep.subr.bf16.mxu0 0
    %403 = vmatpush1.bf16.msra.mxu0 0
    %404 = vmatprep.subr.bf16.mxu0 0
    %405 = vmatpush1.bf16.msra.mxu0 0
    %406 = vmatprep.subr.bf16.mxu0 0
    %407 = vmatpush1.bf16.msra.mxu0 0
    %408 = vmatprep.subr.bf16.mxu0 0
    %409 = vmatpush1.bf16.msra.mxu0 0
    %410 = vmatprep.subr.bf16.mxu0 0
    %411 = vmatpush1.bf16.msra.mxu0 0
    %412 = vmatprep.subr.bf16.mxu0 0
    %413 = vmatpush1.bf16.msra.mxu0 0
    %414 = vmatprep.subr.bf16.mxu0 0
    %415 = vmatpush1.bf16.msra.mxu0 0
    %416 = vmatprep.subr.bf16.mxu0 0
    %417 = vmatpush1.bf16.msra.mxu0 0
    %418 = vmatprep.subr.bf16.mxu0 0
    %419 = vmatpush1.bf16.msra.mxu0 0
    %420 = vmatprep.subr.bf16.mxu0 0
    %421 = vmatpush1.bf16.msra.mxu0 0
    %422 = vmatprep.subr.bf16.mxu0 0
    %423 = vmatpush1.bf16.msra.mxu0 0
    %424 = vmatprep.subr.bf16.mxu0 0
    %425 = vmatpush1.bf16.msra.mxu0 0
    %426 = vmatprep.mubr.bf16.mxu0 0
    %427 = vmatmul.mubr.bf16.gmra.mrb[0].mxu0 %v300
    %v428 = vpop.f32.mrb[0].mxu0
    %v429 = vadd.f32 %v392, %v428
    %v430 = vpop.f32.mrb[0].mxu0
    %v431 = vpop.f32.mrb[0].mxu0
    %v432 = vadd.f32 %v392, %v431
    %v433 = vpop.f32.mrb[0].mxu0
    %434 = vmatprep.mubr.bf16.mxu0 0
    %435 = vmatmul.mubr.bf16.gmra.mrb[0].mxu0 %v303
    %v436 = vpop.f32.mrb[0].mxu0
    %v437 = vadd.f32 %v392, %v436
    %v438 = vpop.f32.mrb[0].mxu0
    %v439 = vpop.f32.mrb[0].mxu0
    %v440 = vadd.f32 %v392, %v439
    %v441 = vpop.f32.mrb[0].mxu0
    %442 = vmatprep.mubr.bf16.mxu0 0
    %443 = vmatmul.mubr.bf16.gmra.mrb[0].mxu0 %v306
    %v444 = vpop.f32.mrb[0].mxu0
    %v445 = vadd.f32 %v392, %v444
    %v446 = vpop.f32.mrb[0].mxu0
    %v447 = vpop.f32.mrb[0].mxu0
    %v448 = vadd.f32 %v392, %v447
    %v449 = vpop.f32.mrb[0].mxu0
    %450 = vmatprep.mubr.bf16.mxu0 0
    %451 = vmatmul.mubr.bf16.gmra.mrb[0].mxu0 %v309
    %v452 = vpop.f32.mrb[0].mxu0
    %v453 = vadd.f32 %v392, %v452
    %v454 = vpop.f32.mrb[0].mxu0
    %v455 = vpop.f32.mrb[0].mxu0
    %v456 = vadd.f32 %v392, %v455
    %v457 = vpop.f32.mrb[0].mxu0
    %458 = vdwg.mxu0
    %459 = vst [vmem:[#allocation3] sm:$0xff] %v429
    %460 = vst [vmem:[#allocation3 + $0x8] sm:$0xff] %v432
    %461 = vst [vmem:[#allocation3 + $0x10] sm:$0xff] %v437
    %462 = vst [vmem:[#allocation3 + $0x18] sm:$0xff] %v440
    %463 = vst [vmem:[#allocation3 + $0x20] sm:$0xff] %v445
    %464 = vst [vmem:[#allocation3 + $0x28] sm:$0xff] %v448
    %465 = vst [vmem:[#allocation3 + $0x30] sm:$0xff] %v453
    %466 = vst [vmem:[#allocation3 + $0x38] sm:$0xff] %v456
    %v467 = vld [vmem:[#allocation9] sm:$0xff]
    %v468 = vld [vmem:[#allocation9 + $0x8] sm:$0xff]
    %v469 = vld [vmem:[#allocation9 + $0x10] sm:$0xff]
    %v470 = vld [vmem:[#allocation9 + $0x18] sm:$0xff]
    %v471 = vpack.c.bf16 %v468, %v467
    %v472 = vpack.c.bf16 %v470, %v469
    %v473 = vld [vmem:[#allocation10] sm:$0xff]
    %v474 = vld [vmem:[#allocation10 + $0x8] sm:$0xff]
    %v475 = vld [vmem:[#allocation10 + $0x10] sm:$0xff]
    %v476 = vld [vmem:[#allocation10 + $0x18] sm:$0xff]
    %v477 = vpack.c.bf16 %v474, %v473
    %v478 = vpack.c.bf16 %v476, %v475
    %v479 = vld [vmem:[#allocation12] sm:$0x1]
    %v480 = vld [vmem:[#allocation16] sm:$0xff]
    %v481 = vld [vmem:[#allocation16 + $0x8] sm:$0xff]
    %v482 = vld [vmem:[#allocation16 + $0x10] sm:$0xff]
    %v483 = vld [vmem:[#allocation16 + $0x18] sm:$0xff]
    %v484 = vpack.c.bf16 %v481, %v480
    %v485 = vpack.c.bf16 %v483, %v482
    %v486 = vld [vmem:[#allocation18] sm:$0xff]
    %v487 = vld [vmem:[#allocation18 + $0x8] sm:$0xff]
    %v488 = vld [vmem:[#allocation18 + $0x10] sm:$0xff]
    %v489 = vld [vmem:[#allocation18 + $0x18] sm:$0xff]
    %v490 = vpack.c.bf16 %v487, %v486
    %v491 = vpack.c.bf16 %v489, %v488
    %v492 = vld [vmem:[#allocation19] sm:$0x1]
    %v493 = vld [vmem:[#allocation2] sm:$0xff]
    %vm494 = vcmask 261120
    %v496 = vsel %vm494, 0, 0
    %498 = vmatprep.subr.bf16.mxu0 0
    %499 = vmatpush1.bf16.msra.mxu0 %v471
    %500 = vmatprep.subr.bf16.mxu0 0
    %501 = vmatpush1.bf16.msra.mxu0 %v472
    %502 = vmatprep.subr.bf16.mxu0 0
    %503 = vmatpush1.bf16.msra.mxu0 0
    %504 = vmatprep.subr.bf16.mxu0 0
    %505 = vmatpush1.bf16.msra.mxu0 0
    %506 = vmatprep.subr.bf16.mxu0 0
    %507 = vmatpush1.bf16.msra.mxu0 0
    %508 = vmatprep.subr.bf16.mxu0 0
    %509 = vmatpush1.bf16.msra.mxu0 0
    %510 = vmatprep.subr.bf16.mxu0 0
    %511 = vmatpush1.bf16.msra.mxu0 0
    %512 = vmatprep.subr.bf16.mxu0 0
    %513 = vmatpush1.bf16.msra.mxu0 0
    %514 = vmatprep.subr.bf16.mxu0 0
    %515 = vmatpush1.bf16.msra.mxu0 0
    %516 = vmatprep.subr.bf16.mxu0 0
    %517 = vmatpush1.bf16.msra.mxu0 0
    %518 = vmatprep.subr.bf16.mxu0 0
    %519 = vmatpush1.bf16.msra.mxu0 0
    %520 = vmatprep.subr.bf16.mxu0 0
    %521 = vmatpush1.bf16.msra.mxu0 0
    %522 = vmatprep.subr.bf16.mxu0 0
    %523 = vmatpush1.bf16.msra.mxu0 0
    %524 = vmatprep.subr.bf16.mxu0 0
    %525 = vmatpush1.bf16.msra.mxu0 0
    %526 = vmatprep.subr.bf16.mxu0 0
    %527 = vmatpush1.bf16.msra.mxu0 0
    %528 = vmatprep.subr.bf16.mxu0 0
    %529 = vmatpush1.bf16.msra.mxu0 0
    %530 = vmatprep.mubr.bf16.mxu0 0
    %531 = vmatmul.mubr.bf16.gmra.mrb[0].mxu0 %v496
    %v532 = vpop.f32.mrb[0].mxu0
    %v533 = vadd.f32 0.0, %v532
    %v534 = vpop.f32.mrb[0].mxu0
    %v535 = vpop.f32.mrb[0].mxu0
    %v536 = vpop.f32.mrb[0].mxu0
    %537 = vdwg.mxu0
    %v538 = vadd.f32 %v493, %v533
    %v539 = vxor.u32 %v538, 2147483648
    %v540 = vmul.f32 %v539, 1.442695
    %v541 = vpow.pop %v540
    %v542 = vadd.f32 %v541, 1.0
    %v543 = vrcp.pop %v542
    %v544 = vmul.f32 1.0, %v543
    %v546 = vlaneseq
    %v547 = vshrl.u32 %v546, 7
    %v548 = vsub.s32 0, %v547
    %v549 = vrot.slane %v479, %v548
    %551 = vmatprep.subr.bf16.mxu0 0
    %552 = vmatpush1.bf16.msra.mxu0 %v477
    %553 = vmatprep.subr.bf16.mxu0 0
    %554 = vmatpush1.bf16.msra.mxu0 %v478
    %555 = vmatprep.subr.bf16.mxu0 0
    %556 = vmatpush1.bf16.msra.mxu0 0
    %557 = vmatprep.subr.bf16.mxu0 0
    %558 = vmatpush1.bf16.msra.mxu0 0
    %559 = vmatprep.subr.bf16.mxu0 0
    %560 = vmatpush1.bf16.msra.mxu0 0
    %561 = vmatprep.subr.bf16.mxu0 0
    %562 = vmatpush1.bf16.msra.mxu0 0
    %563 = vmatprep.subr.bf16.mxu0 0
    %564 = vmatpush1.bf16.msra.mxu0 0
    %565 = vmatprep.subr.bf16.mxu0 0
    %566 = vmatpush1.bf16.msra.mxu0 0
    %567 = vmatprep.subr.bf16.mxu0 0
    %568 = vmatpush1.bf16.msra.mxu0 0
    %569 = vmatprep.subr.bf16.mxu0 0
    %570 = vmatpush1.bf16.msra.mxu0 0
    %571 = vmatprep.subr.bf16.mxu0 0
    %572 = vmatpush1.bf16.msra.mxu0 0
    %573 = vmatprep.subr.bf16.mxu0 0
    %574 = vmatpush1.bf16.msra.mxu0 0
    %575 = vmatprep.subr.bf16.mxu0 0
    %576 = vmatpush1.bf16.msra.mxu0 0
    %577 = vmatprep.subr.bf16.mxu0 0
    %578 = vmatpush1.bf16.msra.mxu0 0
    %579 = vmatprep.subr.bf16.mxu0 0
    %580 = vmatpush1.bf16.msra.mxu0 0
    %581 = vmatprep.subr.bf16.mxu0 0
    %582 = vmatpush1.bf16.msra.mxu0 0
    %583 = vmatprep.mubr.bf16.mxu0 0
    %584 = vmatmul.mubr.bf16.gmra.mrb[0].mxu0 %v496
    %v585 = vpop.f32.mrb[0].mxu0
    %v586 = vadd.f32 %v549, %v585
    %v587 = vpop.f32.mrb[0].mxu0
    %v588 = vpop.f32.mrb[0].mxu0
    %v589 = vpop.f32.mrb[0].mxu0
    %590 = vdwg.mxu0
    %v591 = vmul.f32 %v544, %v586
    %593 = vrot.lane.b32.xlu0 %v591, 64
    %v594 = vpop.permute.xlu0 %593
    %v596 = vadd.f32 %v493, %v594
    %v597 = vtanh.pop %v596
    %v598 = vsub.f32 1.0, %v544
    %600 = vrot.lane.b32.xlu0 %v597, 96
    %v601 = vpop.permute.xlu0 %600
    %v603 = vmul.f32 %v598, %v601
    %v604 = vmul.f32 %v544, 0.0
    %v605 = vadd.f32 %v603, %v604
    %s606 = scalar_lea.vmem [#allocation3], 56
    %v607 = vld [vmem:[%s606] sm:$0xff]
    %608 = vmatprep.subr.bf16.mxu0 0
    %609 = vmatpush1.bf16.msra.mxu0 %v484
    %610 = vmatprep.subr.bf16.mxu0 0
    %611 = vmatpush1.bf16.msra.mxu0 %v485
    %612 = vmatprep.subr.bf16.mxu0 0
    %613 = vmatpush1.bf16.msra.mxu0 0
    %614 = vmatprep.subr.bf16.mxu0 0
    %615 = vmatpush1.bf16.msra.mxu0 0
    %616 = vmatprep.subr.bf16.mxu0 0
    %617 = vmatpush1.bf16.msra.mxu0 0
    %618 = vmatprep.subr.bf16.mxu0 0
    %619 = vmatpush1.bf16.msra.mxu0 0
    %620 = vmatprep.subr.bf16.mxu0 0
    %621 = vmatpush1.bf16.msra.mxu0 0
    %622 = vmatprep.subr.bf16.mxu0 0
    %623 = vmatpush1.bf16.msra.mxu0 0
    %624 = vmatprep.subr.bf16.mxu0 0
    %625 = vmatpush1.bf16.msra.mxu0 0
    %626 = vmatprep.subr.bf16.mxu0 0
    %627 = vmatpush1.bf16.msra.mxu0 0
    %628 = vmatprep.subr.bf16.mxu0 0
    %629 = vmatpush1.bf16.msra.mxu0 0
    %630 = vmatprep.subr.bf16.mxu0 0
    %631 = vmatpush1.bf16.msra.mxu0 0
    %632 = vmatprep.subr.bf16.mxu0 0
    %633 = vmatpush1.bf16.msra.mxu0 0
    %634 = vmatprep.subr.bf16.mxu0 0
    %635 = vmatpush1.bf16.msra.mxu0 0
    %636 = vmatprep.subr.bf16.mxu0 0
    %637 = vmatpush1.bf16.msra.mxu0 0
    %638 = vmatprep.subr.bf16.mxu0 0
    %639 = vmatpush1.bf16.msra.mxu0 0
    %640 = vmatprep.mubr.bf16.mxu0 0
    %641 = vmatmul.mubr.bf16.gmra.mrb[0].mxu0 %v496
    %v642 = vpop.f32.mrb[0].mxu0
    %v643 = vadd.f32 0.0, %v642
    %v644 = vpop.f32.mrb[0].mxu0
    %v645 = vpop.f32.mrb[0].mxu0
    %v646 = vpop.f32.mrb[0].mxu0
    %647 = vdwg.mxu0
    %v648 = vadd.f32 %v607, %v643
    %v649 = vxor.u32 %v648, 2147483648
    %v650 = vmul.f32 %v649, 1.442695
    %v651 = vpow.pop %v650
    %v652 = vadd.f32 %v651, 1.0
    %v653 = vrcp.pop %v652
    %v654 = vmul.f32 1.0, %v653
    %v656 = vlaneseq
    %v657 = vshrl.u32 %v656, 7
    %v658 = vsub.s32 0, %v657
    %v659 = vrot.slane %v492, %v658
    %661 = vmatprep.subr.bf16.mxu0 0
    %662 = vmatpush1.bf16.msra.mxu0 %v490
    %663 = vmatprep.subr.bf16.mxu0 0
    %664 = vmatpush1.bf16.msra.mxu0 %v491
    %665 = vmatprep.subr.bf16.mxu0 0
    %666 = vmatpush1.bf16.msra.mxu0 0
    %667 = vmatprep.subr.bf16.mxu0 0
    %668 = vmatpush1.bf16.msra.mxu0 0
    %669 = vmatprep.subr.bf16.mxu0 0
    %670 = vmatpush1.bf16.msra.mxu0 0
    %671 = vmatprep.subr.bf16.mxu0 0
    %672 = vmatpush1.bf16.msra.mxu0 0
    %673 = vmatprep.subr.bf16.mxu0 0
    %674 = vmatpush1.bf16.msra.mxu0 0
    %675 = vmatprep.subr.bf16.mxu0 0
    %676 = vmatpush1.bf16.msra.mxu0 0
    %677 = vmatprep.subr.bf16.mxu0 0
    %678 = vmatpush1.bf16.msra.mxu0 0
    %679 = vmatprep.subr.bf16.mxu0 0
    %680 = vmatpush1.bf16.msra.mxu0 0
    %681 = vmatprep.subr.bf16.mxu0 0
    %682 = vmatpush1.bf16.msra.mxu0 0
    %683 = vmatprep.subr.bf16.mxu0 0
    %684 = vmatpush1.bf16.msra.mxu0 0
    %685 = vmatprep.subr.bf16.mxu0 0
    %686 = vmatpush1.bf16.msra.mxu0 0
    %687 = vmatprep.subr.bf16.mxu0 0
    %688 = vmatpush1.bf16.msra.mxu0 0
    %689 = vmatprep.subr.bf16.mxu0 0
    %690 = vmatpush1.bf16.msra.mxu0 0
    %691 = vmatprep.subr.bf16.mxu0 0
    %692 = vmatpush1.bf16.msra.mxu0 0
    %693 = vmatprep.mubr.bf16.mxu0 0
    %694 = vmatmul.mubr.bf16.gmra.mrb[0].mxu0 %v496
    %v695 = vpop.f32.mrb[0].mxu0
    %v696 = vadd.f32 %v659, %v695
    %v697 = vpop.f32.mrb[0].mxu0
    %v698 = vpop.f32.mrb[0].mxu0
    %v699 = vpop.f32.mrb[0].mxu0
    %700 = vdwg.mxu0
    %v701 = vmul.f32 %v654, %v696
    %703 = vrot.lane.b32.xlu0 %v701, 64
    %v704 = vpop.permute.xlu0 %703
    %v706 = vadd.f32 %v607, %v704
    %v707 = vtanh.pop %v706
    %v708 = vsub.f32 1.0, %v654
    %710 = vrot.lane.b32.xlu0 %v707, 96
    %v711 = vpop.permute.xlu0 %710
    %v713 = vmul.f32 %v708, %v711
    %v714 = vmul.f32 %v654, 0.0
    %v715 = vadd.f32 %v713, %v714
    %s716 = scalar_lea.vmem [#allocation2], 8
    %v717 = vld [vmem:[%s716] sm:$0xff]
    %v718 = vpack.c.bf16 %v605, %v605
    %720 = vrot.lane.b32.xlu0 %v718, 96
    %v721 = vpop.permute.xlu0 %720
    %v723 = vsel %vm494, %v721, 0
    %725 = vmatprep.subr.bf16.mxu0 0
    %726 = vmatpush1.bf16.msra.mxu0 %v471
    %727 = vmatprep.subr.bf16.mxu0 0
    %728 = vmatpush1.bf16.msra.mxu0 %v472
    %729 = vmatprep.subr.bf16.mxu0 0
    %730 = vmatpush1.bf16.msra.mxu0 0
    %731 = vmatprep.subr.bf16.mxu0 0
    %732 = vmatpush1.bf16.msra.mxu0 0
    %733 = vmatprep.subr.bf16.mxu0 0
    %734 = vmatpush1.bf16.msra.mxu0 0
    %735 = vmatprep.subr.bf16.mxu0 0
    %736 = vmatpush1.bf16.msra.mxu0 0
    %737 = vmatprep.subr.bf16.mxu0 0
    %738 = vmatpush1.bf16.msra.mxu0 0
    %739 = vmatprep.subr.bf16.mxu0 0
    %740 = vmatpush1.bf16.msra.mxu0 0
    %741 = vmatprep.subr.bf16.mxu0 0
    %742 = vmatpush1.bf16.msra.mxu0 0
    %743 = vmatprep.subr.bf16.mxu0 0
    %744 = vmatpush1.bf16.msra.mxu0 0
    %745 = vmatprep.subr.bf16.mxu0 0
    %746 = vmatpush1.bf16.msra.mxu0 0
    %747 = vmatprep.subr.bf16.mxu0 0
    %748 = vmatpush1.bf16.msra.mxu0 0
    %749 = vmatprep.subr.bf16.mxu0 0
    %750 = vmatpush1.bf16.msra.mxu0 0
    %751 = vmatprep.subr.bf16.mxu0 0
    %752 = vmatpush1.bf16.msra.mxu0 0
    %753 = vmatprep.subr.bf16.mxu0 0
    %754 = vmatpush1.bf16.msra.mxu0 0
    %755 = vmatprep.subr.bf16.mxu0 0
    %756 = vmatpush1.bf16.msra.mxu0 0
    %757 = vmatprep.mubr.bf16.mxu0 0
    %758 = vmatmul.mubr.bf16.gmra.mrb[0].mxu0 %v723
    %v759 = vpop.f32.mrb[0].mxu0
    %v760 = vadd.f32 0.0, %v759
    %v761 = vpop.f32.mrb[0].mxu0
    %v762 = vpop.f32.mrb[0].mxu0
    %v763 = vpop.f32.mrb[0].mxu0
    %764 = vdwg.mxu0
    %v765 = vadd.f32 %v717, %v760
    %v766 = vxor.u32 %v765, 2147483648
    %v767 = vmul.f32 %v766, 1.442695
    %v768 = vpow.pop %v767
    %v769 = vadd.f32 %v768, 1.0
    %v770 = vrcp.pop %v769
    %v771 = vmul.f32 1.0, %v770
    %772 = vmatprep.subr.bf16.mxu0 0
    %773 = vmatpush1.bf16.msra.mxu0 %v477
    %774 = vmatprep.subr.bf16.mxu0 0
    %775 = vmatpush1.bf16.msra.mxu0 %v478
    %776 = vmatprep.subr.bf16.mxu0 0
    %777 = vmatpush1.bf16.msra.mxu0 0
    %778 = vmatprep.subr.bf16.mxu0 0
    %779 = vmatpush1.bf16.msra.mxu0 0
    %780 = vmatprep.subr.bf16.mxu0 0
    %781 = vmatpush1.bf16.msra.mxu0 0
    %782 = vmatprep.subr.bf16.mxu0 0
    %783 = vmatpush1.bf16.msra.mxu0 0
    %784 = vmatprep.subr.bf16.mxu0 0
    %785 = vmatpush1.bf16.msra.mxu0 0
    %786 = vmatprep.subr.bf16.mxu0 0
    %787 = vmatpush1.bf16.msra.mxu0 0
    %788 = vmatprep.subr.bf16.mxu0 0
    %789 = vmatpush1.bf16.msra.mxu0 0
    %790 = vmatprep.subr.bf16.mxu0 0
    %791 = vmatpush1.bf16.msra.mxu0 0
    %792 = vmatprep.subr.bf16.mxu0 0
    %793 = vmatpush1.bf16.msra.mxu0 0
    %794 = vmatprep.subr.bf16.mxu0 0
    %795 = vmatpush1.bf16.msra.mxu0 0
    %796 = vmatprep.subr.bf16.mxu0 0
    %797 = vmatpush1.bf16.msra.mxu0 0
    %798 = vmatprep.subr.bf16.mxu0 0
    %799 = vmatpush1.bf16.msra.mxu0 0
    %800 = vmatprep.subr.bf16.mxu0 0
    %801 = vmatpush1.bf16.msra.mxu0 0
    %802 = vmatprep.subr.bf16.mxu0 0
    %803 = vmatpush1.bf16.msra.mxu0 0
    %804 = vmatprep.mubr.bf16.mxu0 0
    %805 = vmatmul.mubr.bf16.gmra.mrb[0].mxu0 %v723
    %v806 = vpop.f32.mrb[0].mxu0
    %v807 = vadd.f32 %v549, %v806
    %v808 = vpop.f32.mrb[0].mxu0
    %v809 = vpop.f32.mrb[0].mxu0
    %v810 = vpop.f32.mrb[0].mxu0
    %811 = vdwg.mxu0
    %v812 = vmul.f32 %v771, %v807
    %814 = vrot.lane.b32.xlu0 %v812, 64
    %v815 = vpop.permute.xlu0 %814
    %v817 = vadd.f32 %v717, %v815
    %v818 = vtanh.pop %v817
    %v819 = vsub.f32 1.0, %v771
    %821 = vrot.lane.b32.xlu0 %v818, 96
    %v822 = vpop.permute.xlu0 %821
    %v824 = vmul.f32 %v819, %v822
    %v825 = vmul.f32 %v771, %v605
    %v826 = vadd.f32 %v824, %v825
    %s827 = scalar_lea.vmem [#allocation3], 48
    %v828 = vld [vmem:[%s827] sm:$0xff]
    %v829 = vpack.c.bf16 %v715, %v715
    %831 = vrot.lane.b32.xlu0 %v829, 96
    %v832 = vpop.permute.xlu0 %831
    %v834 = vsel %vm494, %v832, 0
    %836 = vmatprep.subr.bf16.mxu0 0
    %837 = vmatpush1.bf16.msra.mxu0 %v484
    %838 = vmatprep.subr.bf16.mxu0 0
    %839 = vmatpush1.bf16.msra.mxu0 %v485
    %840 = vmatprep.subr.bf16.mxu0 0
    %841 = vmatpush1.bf16.msra.mxu0 0
    %842 = vmatprep.subr.bf16.mxu0 0
    %843 = vmatpush1.bf16.msra.mxu0 0
    %844 = vmatprep.subr.bf16.mxu0 0
    %845 = vmatpush1.bf16.msra.mxu0 0
    %846 = vmatprep.subr.bf16.mxu0 0
    %847 = vmatpush1.bf16.msra.mxu0 0
    %848 = vmatprep.subr.bf16.mxu0 0
    %849 = vmatpush1.bf16.msra.mxu0 0
    %850 = vmatprep.subr.bf16.mxu0 0
    %851 = vmatpush1.bf16.msra.mxu0 0
    %852 = vmatprep.subr.bf16.mxu0 0
    %853 = vmatpush1.bf16.msra.mxu0 0
    %854 = vmatprep.subr.bf16.mxu0 0
    %855 = vmatpush1.bf16.msra.mxu0 0
    %856 = vmatprep.subr.bf16.mxu0 0
    %857 = vmatpush1.bf16.msra.mxu0 0
    %858 = vmatprep.subr.bf16.mxu0 0
    %859 = vmatpush1.bf16.msra.mxu0 0
    %860 = vmatprep.subr.bf16.mxu0 0
    %861 = vmatpush1.bf16.msra.mxu0 0
    %862 = vmatprep.subr.bf16.mxu0 0
    %863 = vmatpush1.bf16.msra.mxu0 0
    %864 = vmatprep.subr.bf16.mxu0 0
    %865 = vmatpush1.bf16.msra.mxu0 0
    %866 = vmatprep.subr.bf16.mxu0 0
    %867 = vmatpush1.bf16.msra.mxu0 0
    %868 = vmatprep.mubr.bf16.mxu0 0
    %869 = vmatmul.mubr.bf16.gmra.mrb[0].mxu0 %v834
    %v870 = vpop.f32.mrb[0].mxu0
    %v871 = vadd.f32 0.0, %v870
    %v872 = vpop.f32.mrb[0].mxu0
    %v873 = vpop.f32.mrb[0].mxu0
    %v874 = vpop.f32.mrb[0].mxu0
    %875 = vdwg.mxu0
    %v876 = vadd.f32 %v828, %v871
    %v877 = vxor.u32 %v876, 2147483648
    %v878 = vmul.f32 %v877, 1.442695
    %v879 = vpow.pop %v878
    %v880 = vadd.f32 %v879, 1.0
    %v881 = vrcp.pop %v880
    %v882 = vmul.f32 1.0, %v881
    %883 = vmatprep.subr.bf16.mxu0 0
    %884 = vmatpush1.bf16.msra.mxu0 %v490
    %885 = vmatprep.subr.bf16.mxu0 0
    %886 = vmatpush1.bf16.msra.mxu0 %v491
    %887 = vmatprep.subr.bf16.mxu0 0
    %888 = vmatpush1.bf16.msra.mxu0 0
    %889 = vmatprep.subr.bf16.mxu0 0
    %890 = vmatpush1.bf16.msra.mxu0 0
    %891 = vmatprep.subr.bf16.mxu0 0
    %892 = vmatpush1.bf16.msra.mxu0 0
    %893 = vmatprep.subr.bf16.mxu0 0
    %894 = vmatpush1.bf16.msra.mxu0 0
    %895 = vmatprep.subr.bf16.mxu0 0
    %896 = vmatpush1.bf16.msra.mxu0 0
    %897 = vmatprep.subr.bf16.mxu0 0
    %898 = vmatpush1.bf16.msra.mxu0 0
    %899 = vmatprep.subr.bf16.mxu0 0
    %900 = vmatpush1.bf16.msra.mxu0 0
    %901 = vmatprep.subr.bf16.mxu0 0
    %902 = vmatpush1.bf16.msra.mxu0 0
    %903 = vmatprep.subr.bf16.mxu0 0
    %904 = vmatpush1.bf16.msra.mxu0 0
    %905 = vmatprep.subr.bf16.mxu0 0
    %906 = vmatpush1.bf16.msra.mxu0 0
    %907 = vmatprep.subr.bf16.mxu0 0
    %908 = vmatpush1.bf16.msra.mxu0 0
    %909 = vmatprep.subr.bf16.mxu0 0
    %910 = vmatpush1.bf16.msra.mxu0 0
    %911 = vmatprep.subr.bf16.mxu0 0
    %912 = vmatpush1.bf16.msra.mxu0 0
    %913 = vmatprep.subr.bf16.mxu0 0
    %914 = vmatpush1.bf16.msra.mxu0 0
    %915 = vmatprep.mubr.bf16.mxu0 0
    %916 = vmatmul.mubr.bf16.gmra.mrb[0].mxu0 %v834
    %v917 = vpop.f32.mrb[0].mxu0
    %v918 = vadd.f32 %v659, %v917
    %v919 = vpop.f32.mrb[0].mxu0
    %v920 = vpop.f32.mrb[0].mxu0
    %v921 = vpop.f32.mrb[0].mxu0
    %922 = vdwg.mxu0
    %v923 = vmul.f32 %v882, %v918
    %925 = vrot.lane.b32.xlu0 %v923, 64
    %v926 = vpop.permute.xlu0 %925
    %v928 = vadd.f32 %v828, %v926
    %v929 = vtanh.pop %v928
    %v930 = vsub.f32 1.0, %v882
    %932 = vrot.lane.b32.xlu0 %v929, 96
    %v933 = vpop.permute.xlu0 %932
    %v935 = vmul.f32 %v930, %v933
    %v936 = vmul.f32 %v882, %v715
    %v937 = vadd.f32 %v935, %v936
    %s938 = scalar_lea.vmem [#allocation2], 16
    %v939 = vld [vmem:[%s938] sm:$0xff]
    %v940 = vpack.c.bf16 %v826, %v826
    %942 = vrot.lane.b32.xlu0 %v940, 96
    %v943 = vpop.permute.xlu0 %942
    %v945 = vsel %vm494, %v943, 0
    %947 = vmatprep.subr.bf16.mxu0 0
    %948 = vmatpush1.bf16.msra.mxu0 %v471
    %949 = vmatprep.subr.bf16.mxu0 0
    %950 = vmatpush1.bf16.msra.mxu0 %v472
    %951 = vmatprep.subr.bf16.mxu0 0
    %952 = vmatpush1.bf16.msra.mxu0 0
    %953 = vmatprep.subr.bf16.mxu0 0
    %954 = vmatpush1.bf16.msra.mxu0 0
    %955 = vmatprep.subr.bf16.mxu0 0
    %956 = vmatpush1.bf16.msra.mxu0 0
    %957 = vmatprep.subr.bf16.mxu0 0
    %958 = vmatpush1.bf16.msra.mxu0 0
    %959 = vmatprep.subr.bf16.mxu0 0
    %960 = vmatpush1.bf16.msra.mxu0 0
    %961 = vmatprep.subr.bf16.mxu0 0
    %962 = vmatpush1.bf16.msra.mxu0 0
    %963 = vmatprep.subr.bf16.mxu0 0
    %964 = vmatpush1.bf16.msra.mxu0 0
    %965 = vmatprep.subr.bf16.mxu0 0
    %966 = vmatpush1.bf16.msra.mxu0 0
    %967 = vmatprep.subr.bf16.mxu0 0
    %968 = vmatpush1.bf16.msra.mxu0 0
    %969 = vmatprep.subr.bf16.mxu0 0
    %970 = vmatpush1.bf16.msra.mxu0 0
    %971 = vmatprep.subr.bf16.mxu0 0
    %972 = vmatpush1.bf16.msra.mxu0 0
    %973 = vmatprep.subr.bf16.mxu0 0
    %974 = vmatpush1.bf16.msra.mxu0 0
    %975 = vmatprep.subr.bf16.mxu0 0
    %976 = vmatpush1.bf16.msra.mxu0 0
    %977 = vmatprep.subr.bf16.mxu0 0
    %978 = vmatpush1.bf16.msra.mxu0 0
    %979 = vmatprep.mubr.bf16.mxu0 0
    %980 = vmatmul.mubr.bf16.gmra.mrb[0].mxu0 %v945
    %v981 = vpop.f32.mrb[0].mxu0
    %v982 = vadd.f32 0.0, %v981
    %v983 = vpop.f32.mrb[0].mxu0
    %v984 = vpop.f32.mrb[0].mxu0
    %v985 = vpop.f32.mrb[0].mxu0
    %986 = vdwg.mxu0
    %v987 = vadd.f32 %v939, %v982
    %v988 = vxor.u32 %v987, 2147483648
    %v989 = vmul.f32 %v988, 1.442695
    %v990 = vpow.pop %v989
    %v991 = vadd.f32 %v990, 1.0
    %v992 = vrcp.pop %v991
    %v993 = vmul.f32 1.0, %v992
    %994 = vmatprep.subr.bf16.mxu0 0
    %995 = vmatpush1.bf16.msra.mxu0 %v477
    %996 = vmatprep.subr.bf16.mxu0 0
    %997 = vmatpush1.bf16.msra.mxu0 %v478
    %998 = vmatprep.subr.bf16.mxu0 0
    %999 = vmatpush1.bf16.msra.mxu0 0
    %1000 = vmatprep.subr.bf16.mxu0 0
    %1001 = vmatpush1.bf16.msra.mxu0 0
    %1002 = vmatprep.subr.bf16.mxu0 0
    %1003 = vmatpush1.bf16.msra.mxu0 0
    %1004 = vmatprep.subr.bf16.mxu0 0
    %1005 = vmatpush1.bf16.msra.mxu0 0
    %1006 = vmatprep.subr.bf16.mxu0 0
    %1007 = vmatpush1.bf16.msra.mxu0 0
    %1008 = vmatprep.subr.bf16.mxu0 0
    %1009 = vmatpush1.bf16.msra.mxu0 0
    %1010 = vmatprep.subr.bf16.mxu0 0
    %1011 = vmatpush1.bf16.msra.mxu0 0
    %1012 = vmatprep.subr.bf16.mxu0 0
    %1013 = vmatpush1.bf16.msra.mxu0 0
    %1014 = vmatprep.subr.bf16.mxu0 0
    %1015 = vmatpush1.bf16.msra.mxu0 0
    %1016 = vmatprep.subr.bf16.mxu0 0
    %1017 = vmatpush1.bf16.msra.mxu0 0
    %1018 = vmatprep.subr.bf16.mxu0 0
    %1019 = vmatpush1.bf16.msra.mxu0 0
    %1020 = vmatprep.subr.bf16.mxu0 0
    %1021 = vmatpush1.bf16.msra.mxu0 0
    %1022 = vmatprep.subr.bf16.mxu0 0
    %1023 = vmatpush1.bf16.msra.mxu0 0
    %1024 = vmatprep.subr.bf16.mxu0 0
    %1025 = vmatpush1.bf16.msra.mxu0 0
    %1026 = vmatprep.mubr.bf16.mxu0 0
    %1027 = vmatmul.mubr.bf16.gmra.mrb[0].mxu0 %v945
    %v1028 = vpop.f32.mrb[0].mxu0
    %v1029 = vadd.f32 %v549, %v1028
    %v1030 = vpop.f32.mrb[0].mxu0
    %v1031 = vpop.f32.mrb[0].mxu0
    %v1032 = vpop.f32.mrb[0].mxu0
    %1033 = vdwg.mxu0
    %v1034 = vmul.f32 %v993, %v1029
    %1036 = vrot.lane.b32.xlu0 %v1034, 64
    %v1037 = vpop.permute.xlu0 %1036
    %v1039 = vadd.f32 %v939, %v1037
    %v1040 = vtanh.pop %v1039
    %v1041 = vsub.f32 1.0, %v993
    %1043 = vrot.lane.b32.xlu0 %v1040, 96
    %v1044 = vpop.permute.xlu0 %1043
    %v1046 = vmul.f32 %v1041, %v1044
    %v1047 = vmul.f32 %v993, %v826
    %v1048 = vadd.f32 %v1046, %v1047
    %s1049 = scalar_lea.vmem [#allocation3], 40
    %v1050 = vld [vmem:[%s1049] sm:$0xff]
    %v1051 = vpack.c.bf16 %v937, %v937
    %1053 = vrot.lane.b32.xlu0 %v1051, 96
    %v1054 = vpop.permute.xlu0 %1053
    %v1056 = vsel %vm494, %v1054, 0
    %1058 = vmatprep.subr.bf16.mxu0 0
    %1059 = vmatpush1.bf16.msra.mxu0 %v484
    %1060 = vmatprep.subr.bf16.mxu0 0
    %1061 = vmatpush1.bf16.msra.mxu0 %v485
    %1062 = vmatprep.subr.bf16.mxu0 0
    %1063 = vmatpush1.bf16.msra.mxu0 0
    %1064 = vmatprep.subr.bf16.mxu0 0
    %1065 = vmatpush1.bf16.msra.mxu0 0
    %1066 = vmatprep.subr.bf16.mxu0 0
    %1067 = vmatpush1.bf16.msra.mxu0 0
    %1068 = vmatprep.subr.bf16.mxu0 0
    %1069 = vmatpush1.bf16.msra.mxu0 0
    %1070 = vmatprep.subr.bf16.mxu0 0
    %1071 = vmatpush1.bf16.msra.mxu0 0
    %1072 = vmatprep.subr.bf16.mxu0 0
    %1073 = vmatpush1.bf16.msra.mxu0 0
    %1074 = vmatprep.subr.bf16.mxu0 0
    %1075 = vmatpush1.bf16.msra.mxu0 0
    %1076 = vmatprep.subr.bf16.mxu0 0
    %1077 = vmatpush1.bf16.msra.mxu0 0
    %1078 = vmatprep.subr.bf16.mxu0 0
    %1079 = vmatpush1.bf16.msra.mxu0 0
    %1080 = vmatprep.subr.bf16.mxu0 0
    %1081 = vmatpush1.bf16.msra.mxu0 0
    %1082 = vmatprep.subr.bf16.mxu0 0
    %1083 = vmatpush1.bf16.msra.mxu0 0
    %1084 = vmatprep.subr.bf16.mxu0 0
    %1085 = vmatpush1.bf16.msra.mxu0 0
    %1086 = vmatprep.subr.bf16.mxu0 0
    %1087 = vmatpush1.bf16.msra.mxu0 0
    %1088 = vmatprep.subr.bf16.mxu0 0
    %1089 = vmatpush1.bf16.msra.mxu0 0
    %1090 = vmatprep.mubr.bf16.mxu0 0
    %1091 = vmatmul.mubr.bf16.gmra.mrb[0].mxu0 %v1056
    %v1092 = vpop.f32.mrb[0].mxu0
    %v1093 = vadd.f32 0.0, %v1092
    %v1094 = vpop.f32.mrb[0].mxu0
    %v1095 = vpop.f32.mrb[0].mxu0
    %v1096 = vpop.f32.mrb[0].mxu0
    %1097 = vdwg.mxu0
    %v1098 = vadd.f32 %v1050, %v1093
    %v1099 = vxor.u32 %v1098, 2147483648
    %v1100 = vmul.f32 %v1099, 1.442695
    %v1101 = vpow.pop %v1100
    %v1102 = vadd.f32 %v1101, 1.0
    %v1103 = vrcp.pop %v1102
    %v1104 = vmul.f32 1.0, %v1103
    %1105 = vmatprep.subr.bf16.mxu0 0
    %1106 = vmatpush1.bf16.msra.mxu0 %v490
    %1107 = vmatprep.subr.bf16.mxu0 0
    %1108 = vmatpush1.bf16.msra.mxu0 %v491
    %1109 = vmatprep.subr.bf16.mxu0 0
    %1110 = vmatpush1.bf16.msra.mxu0 0
    %1111 = vmatprep.subr.bf16.mxu0 0
    %1112 = vmatpush1.bf16.msra.mxu0 0
    %1113 = vmatprep.subr.bf16.mxu0 0
    %1114 = vmatpush1.bf16.msra.mxu0 0
    %1115 = vmatprep.subr.bf16.mxu0 0
    %1116 = vmatpush1.bf16.msra.mxu0 0
    %1117 = vmatprep.subr.bf16.mxu0 0
    %1118 = vmatpush1.bf16.msra.mxu0 0
    %1119 = vmatprep.subr.bf16.mxu0 0
    %1120 = vmatpush1.bf16.msra.mxu0 0
    %1121 = vmatprep.subr.bf16.mxu0 0
    %1122 = vmatpush1.bf16.msra.mxu0 0
    %1123 = vmatprep.subr.bf16.mxu0 0
    %1124 = vmatpush1.bf16.msra.mxu0 0
    %1125 = vmatprep.subr.bf16.mxu0 0
    %1126 = vmatpush1.bf16.msra.mxu0 0
    %1127 = vmatprep.subr.bf16.mxu0 0
    %1128 = vmatpush1.bf16.msra.mxu0 0
    %1129 = vmatprep.subr.bf16.mxu0 0
    %1130 = vmatpush1.bf16.msra.mxu0 0
    %1131 = vmatprep.subr.bf16.mxu0 0
    %1132 = vmatpush1.bf16.msra.mxu0 0
    %1133 = vmatprep.subr.bf16.mxu0 0
    %1134 = vmatpush1.bf16.msra.mxu0 0
    %1135 = vmatprep.subr.bf16.mxu0 0
    %1136 = vmatpush1.bf16.msra.mxu0 0
    %1137 = vmatprep.mubr.bf16.mxu0 0
    %1138 = vmatmul.mubr.bf16.gmra.mrb[0].mxu0 %v1056
    %v1139 = vpop.f32.mrb[0].mxu0
    %v1140 = vadd.f32 %v659, %v1139
    %v1141 = vpop.f32.mrb[0].mxu0
    %v1142 = vpop.f32.mrb[0].mxu0
    %v1143 = vpop.f32.mrb[0].mxu0
    %1144 = vdwg.mxu0
    %v1145 = vmul.f32 %v1104, %v1140
    %1147 = vrot.lane.b32.xlu0 %v1145, 64
    %v1148 = vpop.permute.xlu0 %1147
    %v1150 = vadd.f32 %v1050, %v1148
    %v1151 = vtanh.pop %v1150
    %v1152 = vsub.f32 1.0, %v1104
    %1154 = vrot.lane.b32.xlu0 %v1151, 96
    %v1155 = vpop.permute.xlu0 %1154
    %v1157 = vmul.f32 %v1152, %v1155
    %v1158 = vmul.f32 %v1104, %v937
    %v1159 = vadd.f32 %v1157, %v1158
    %s1160 = scalar_lea.vmem [#allocation2], 24
    %v1161 = vld [vmem:[%s1160] sm:$0xff]
    %v1162 = vpack.c.bf16 %v1048, %v1048
    %1164 = vrot.lane.b32.xlu0 %v1162, 96
    %v1165 = vpop.permute.xlu0 %1164
    %v1167 = vsel %vm494, %v1165, 0
    %1169 = vmatprep.subr.bf16.mxu0 0
    %1170 = vmatpush1.bf16.msra.mxu0 %v471
    %1171 = vmatprep.subr.bf16.mxu0 0
    %1172 = vmatpush1.bf16.msra.mxu0 %v472
    %1173 = vmatprep.subr.bf16.mxu0 0
    %1174 = vmatpush1.bf16.msra.mxu0 0
    %1175 = vmatprep.subr.bf16.mxu0 0
    %1176 = vmatpush1.bf16.msra.mxu0 0
    %1177 = vmatprep.subr.bf16.mxu0 0
    %1178 = vmatpush1.bf16.msra.mxu0 0
    %1179 = vmatprep.subr.bf16.mxu0 0
    %1180 = vmatpush1.bf16.msra.mxu0 0
    %1181 = vmatprep.subr.bf16.mxu0 0
    %1182 = vmatpush1.bf16.msra.mxu0 0
    %1183 = vmatprep.subr.bf16.mxu0 0
    %1184 = vmatpush1.bf16.msra.mxu0 0
    %1185 = vmatprep.subr.bf16.mxu0 0
    %1186 = vmatpush1.bf16.msra.mxu0 0
    %1187 = vmatprep.subr.bf16.mxu0 0
    %1188 = vmatpush1.bf16.msra.mxu0 0
    %1189 = vmatprep.subr.bf16.mxu0 0
    %1190 = vmatpush1.bf16.msra.mxu0 0
    %1191 = vmatprep.subr.bf16.mxu0 0
    %1192 = vmatpush1.bf16.msra.mxu0 0
    %1193 = vmatprep.subr.bf16.mxu0 0
    %1194 = vmatpush1.bf16.msra.mxu0 0
    %1195 = vmatprep.subr.bf16.mxu0 0
    %1196 = vmatpush1.bf16.msra.mxu0 0
    %1197 = vmatprep.subr.bf16.mxu0 0
    %1198 = vmatpush1.bf16.msra.mxu0 0
    %1199 = vmatprep.subr.bf16.mxu0 0
    %1200 = vmatpush1.bf16.msra.mxu0 0
    %1201 = vmatprep.mubr.bf16.mxu0 0
    %1202 = vmatmul.mubr.bf16.gmra.mrb[0].mxu0 %v1167
    %v1203 = vpop.f32.mrb[0].mxu0
    %v1204 = vadd.f32 0.0, %v1203
    %v1205 = vpop.f32.mrb[0].mxu0
    %v1206 = vpop.f32.mrb[0].mxu0
    %v1207 = vpop.f32.mrb[0].mxu0
    %1208 = vdwg.mxu0
    %v1209 = vadd.f32 %v1161, %v1204
    %v1210 = vxor.u32 %v1209, 2147483648
    %v1211 = vmul.f32 %v1210, 1.442695
    %v1212 = vpow.pop %v1211
    %v1213 = vadd.f32 %v1212, 1.0
    %v1214 = vrcp.pop %v1213
    %v1215 = vmul.f32 1.0, %v1214
    %1216 = vmatprep.subr.bf16.mxu0 0
    %1217 = vmatpush1.bf16.msra.mxu0 %v477
    %1218 = vmatprep.subr.bf16.mxu0 0
    %1219 = vmatpush1.bf16.msra.mxu0 %v478
    %1220 = vmatprep.subr.bf16.mxu0 0
    %1221 = vmatpush1.bf16.msra.mxu0 0
    %1222 = vmatprep.subr.bf16.mxu0 0
    %1223 = vmatpush1.bf16.msra.mxu0 0
    %1224 = vmatprep.subr.bf16.mxu0 0
    %1225 = vmatpush1.bf16.msra.mxu0 0
    %1226 = vmatprep.subr.bf16.mxu0 0
    %1227 = vmatpush1.bf16.msra.mxu0 0
    %1228 = vmatprep.subr.bf16.mxu0 0
    %1229 = vmatpush1.bf16.msra.mxu0 0
    %1230 = vmatprep.subr.bf16.mxu0 0
    %1231 = vmatpush1.bf16.msra.mxu0 0
    %1232 = vmatprep.subr.bf16.mxu0 0
    %1233 = vmatpush1.bf16.msra.mxu0 0
    %1234 = vmatprep.subr.bf16.mxu0 0
    %1235 = vmatpush1.bf16.msra.mxu0 0
    %1236 = vmatprep.subr.bf16.mxu0 0
    %1237 = vmatpush1.bf16.msra.mxu0 0
    %1238 = vmatprep.subr.bf16.mxu0 0
    %1239 = vmatpush1.bf16.msra.mxu0 0
    %1240 = vmatprep.subr.bf16.mxu0 0
    %1241 = vmatpush1.bf16.msra.mxu0 0
    %1242 = vmatprep.subr.bf16.mxu0 0
    %1243 = vmatpush1.bf16.msra.mxu0 0
    %1244 = vmatprep.subr.bf16.mxu0 0
    %1245 = vmatpush1.bf16.msra.mxu0 0
    %1246 = vmatprep.subr.bf16.mxu0 0
    %1247 = vmatpush1.bf16.msra.mxu0 0
    %1248 = vmatprep.mubr.bf16.mxu0 0
    %1249 = vmatmul.mubr.bf16.gmra.mrb[0].mxu0 %v1167
    %v1250 = vpop.f32.mrb[0].mxu0
    %v1251 = vadd.f32 %v549, %v1250
    %v1252 = vpop.f32.mrb[0].mxu0
    %v1253 = vpop.f32.mrb[0].mxu0
    %v1254 = vpop.f32.mrb[0].mxu0
    %1255 = vdwg.mxu0
    %v1256 = vmul.f32 %v1215, %v1251
    %1258 = vrot.lane.b32.xlu0 %v1256, 64
    %v1259 = vpop.permute.xlu0 %1258
    %v1261 = vadd.f32 %v1161, %v1259
    %v1262 = vtanh.pop %v1261
    %v1263 = vsub.f32 1.0, %v1215
    %1265 = vrot.lane.b32.xlu0 %v1262, 96
    %v1266 = vpop.permute.xlu0 %1265
    %v1268 = vmul.f32 %v1263, %v1266
    %v1269 = vmul.f32 %v1215, %v1048
    %v1270 = vadd.f32 %v1268, %v1269
    %s1271 = scalar_lea.vmem [#allocation3], 32
    %v1272 = vld [vmem:[%s1271] sm:$0xff]
    %v1273 = vpack.c.bf16 %v1159, %v1159
    %1275 = vrot.lane.b32.xlu0 %v1273, 96
    %v1276 = vpop.permute.xlu0 %1275
    %v1278 = vsel %vm494, %v1276, 0
    %1280 = vmatprep.subr.bf16.mxu0 0
    %1281 = vmatpush1.bf16.msra.mxu0 %v484
    %1282 = vmatprep.subr.bf16.mxu0 0
    %1283 = vmatpush1.bf16.msra.mxu0 %v485
    %1284 = vmatprep.subr.bf16.mxu0 0
    %1285 = vmatpush1.bf16.msra.mxu0 0
    %1286 = vmatprep.subr.bf16.mxu0 0
    %1287 = vmatpush1.bf16.msra.mxu0 0
    %1288 = vmatprep.subr.bf16.mxu0 0
    %1289 = vmatpush1.bf16.msra.mxu0 0
    %1290 = vmatprep.subr.bf16.mxu0 0
    %1291 = vmatpush1.bf16.msra.mxu0 0
    %1292 = vmatprep.subr.bf16.mxu0 0
    %1293 = vmatpush1.bf16.msra.mxu0 0
    %1294 = vmatprep.subr.bf16.mxu0 0
    %1295 = vmatpush1.bf16.msra.mxu0 0
    %1296 = vmatprep.subr.bf16.mxu0 0
    %1297 = vmatpush1.bf16.msra.mxu0 0
    %1298 = vmatprep.subr.bf16.mxu0 0
    %1299 = vmatpush1.bf16.msra.mxu0 0
    %1300 = vmatprep.subr.bf16.mxu0 0
    %1301 = vmatpush1.bf16.msra.mxu0 0
    %1302 = vmatprep.subr.bf16.mxu0 0
    %1303 = vmatpush1.bf16.msra.mxu0 0
    %1304 = vmatprep.subr.bf16.mxu0 0
    %1305 = vmatpush1.bf16.msra.mxu0 0
    %1306 = vmatprep.subr.bf16.mxu0 0
    %1307 = vmatpush1.bf16.msra.mxu0 0
    %1308 = vmatprep.subr.bf16.mxu0 0
    %1309 = vmatpush1.bf16.msra.mxu0 0
    %1310 = vmatprep.subr.bf16.mxu0 0
    %1311 = vmatpush1.bf16.msra.mxu0 0
    %1312 = vmatprep.mubr.bf16.mxu0 0
    %1313 = vmatmul.mubr.bf16.gmra.mrb[0].mxu0 %v1278
    %v1314 = vpop.f32.mrb[0].mxu0
    %v1315 = vadd.f32 0.0, %v1314
    %v1316 = vpop.f32.mrb[0].mxu0
    %v1317 = vpop.f32.mrb[0].mxu0
    %v1318 = vpop.f32.mrb[0].mxu0
    %1319 = vdwg.mxu0
    %v1320 = vadd.f32 %v1272, %v1315
    %v1321 = vxor.u32 %v1320, 2147483648
    %v1322 = vmul.f32 %v1321, 1.442695
    %v1323 = vpow.pop %v1322
    %v1324 = vadd.f32 %v1323, 1.0
    %v1325 = vrcp.pop %v1324
    %v1326 = vmul.f32 1.0, %v1325
    %1327 = vmatprep.subr.bf16.mxu0 0
    %1328 = vmatpush1.bf16.msra.mxu0 %v490
    %1329 = vmatprep.subr.bf16.mxu0 0
    %1330 = vmatpush1.bf16.msra.mxu0 %v491
    %1331 = vmatprep.subr.bf16.mxu0 0
    %1332 = vmatpush1.bf16.msra.mxu0 0
    %1333 = vmatprep.subr.bf16.mxu0 0
    %1334 = vmatpush1.bf16.msra.mxu0 0
    %1335 = vmatprep.subr.bf16.mxu0 0
    %1336 = vmatpush1.bf16.msra.mxu0 0
    %1337 = vmatprep.subr.bf16.mxu0 0
    %1338 = vmatpush1.bf16.msra.mxu0 0
    %1339 = vmatprep.subr.bf16.mxu0 0
    %1340 = vmatpush1.bf16.msra.mxu0 0
    %1341 = vmatprep.subr.bf16.mxu0 0
    %1342 = vmatpush1.bf16.msra.mxu0 0
    %1343 = vmatprep.subr.bf16.mxu0 0
    %1344 = vmatpush1.bf16.msra.mxu0 0
    %1345 = vmatprep.subr.bf16.mxu0 0
    %1346 = vmatpush1.bf16.msra.mxu0 0
    %1347 = vmatprep.subr.bf16.mxu0 0
    %1348 = vmatpush1.bf16.msra.mxu0 0
    %1349 = vmatprep.subr.bf16.mxu0 0
    %1350 = vmatpush1.bf16.msra.mxu0 0
    %1351 = vmatprep.subr.bf16.mxu0 0
    %1352 = vmatpush1.bf16.msra.mxu0 0
    %1353 = vmatprep.subr.bf16.mxu0 0
    %1354 = vmatpush1.bf16.msra.mxu0 0
    %1355 = vmatprep.subr.bf16.mxu0 0
    %1356 = vmatpush1.bf16.msra.mxu0 0
    %1357 = vmatprep.subr.bf16.mxu0 0
    %1358 = vmatpush1.bf16.msra.mxu0 0
    %1359 = vmatprep.mubr.bf16.mxu0 0
    %1360 = vmatmul.mubr.bf16.gmra.mrb[0].mxu0 %v1278
    %v1361 = vpop.f32.mrb[0].mxu0
    %v1362 = vadd.f32 %v659, %v1361
    %v1363 = vpop.f32.mrb[0].mxu0
    %v1364 = vpop.f32.mrb[0].mxu0
    %v1365 = vpop.f32.mrb[0].mxu0
    %1366 = vdwg.mxu0
    %v1367 = vmul.f32 %v1326, %v1362
    %1369 = vrot.lane.b32.xlu0 %v1367, 64
    %v1370 = vpop.permute.xlu0 %1369
    %v1372 = vadd.f32 %v1272, %v1370
    %v1373 = vtanh.pop %v1372
    %v1374 = vsub.f32 1.0, %v1326
    %1376 = vrot.lane.b32.xlu0 %v1373, 96
    %v1377 = vpop.permute.xlu0 %1376
    %v1379 = vmul.f32 %v1374, %v1377
    %v1380 = vmul.f32 %v1326, %v1159
    %v1381 = vadd.f32 %v1379, %v1380
    %s1382 = scalar_lea.vmem [#allocation2], 32
    %v1383 = vld [vmem:[%s1382] sm:$0xff]
    %v1384 = vpack.c.bf16 %v1270, %v1270
    %1386 = vrot.lane.b32.xlu0 %v1384, 96
    %v1387 = vpop.permute.xlu0 %1386
    %v1389 = vsel %vm494, %v1387, 0
    %1391 = vmatprep.subr.bf16.mxu0 0
    %1392 = vmatpush1.bf16.msra.mxu0 %v471
    %1393 = vmatprep.subr.bf16.mxu0 0
    %1394 = vmatpush1.bf16.msra.mxu0 %v472
    %1395 = vmatprep.subr.bf16.mxu0 0
    %1396 = vmatpush1.bf16.msra.mxu0 0
    %1397 = vmatprep.subr.bf16.mxu0 0
    %1398 = vmatpush1.bf16.msra.mxu0 0
    %1399 = vmatprep.subr.bf16.mxu0 0
    %1400 = vmatpush1.bf16.msra.mxu0 0
    %1401 = vmatprep.subr.bf16.mxu0 0
    %1402 = vmatpush1.bf16.msra.mxu0 0
    %1403 = vmatprep.subr.bf16.mxu0 0
    %1404 = vmatpush1.bf16.msra.mxu0 0
    %1405 = vmatprep.subr.bf16.mxu0 0
    %1406 = vmatpush1.bf16.msra.mxu0 0
    %1407 = vmatprep.subr.bf16.mxu0 0
    %1408 = vmatpush1.bf16.msra.mxu0 0
    %1409 = vmatprep.subr.bf16.mxu0 0
    %1410 = vmatpush1.bf16.msra.mxu0 0
    %1411 = vmatprep.subr.bf16.mxu0 0
    %1412 = vmatpush1.bf16.msra.mxu0 0
    %1413 = vmatprep.subr.bf16.mxu0 0
    %1414 = vmatpush1.bf16.msra.mxu0 0
    %1415 = vmatprep.subr.bf16.mxu0 0
    %1416 = vmatpush1.bf16.msra.mxu0 0
    %1417 = vmatprep.subr.bf16.mxu0 0
    %1418 = vmatpush1.bf16.msra.mxu0 0
    %1419 = vmatprep.subr.bf16.mxu0 0
    %1420 = vmatpush1.bf16.msra.mxu0 0
    %1421 = vmatprep.subr.bf16.mxu0 0
    %1422 = vmatpush1.bf16.msra.mxu0 0
    %1423 = vmatprep.mubr.bf16.mxu0 0
    %1424 = vmatmul.mubr.bf16.gmra.mrb[0].mxu0 %v1389
    %v1425 = vpop.f32.mrb[0].mxu0
    %v1426 = vadd.f32 0.0, %v1425
    %v1427 = vpop.f32.mrb[0].mxu0
    %v1428 = vpop.f32.mrb[0].mxu0
    %v1429 = vpop.f32.mrb[0].mxu0
    %1430 = vdwg.mxu0
    %v1431 = vadd.f32 %v1383, %v1426
    %v1432 = vxor.u32 %v1431, 2147483648
    %v1433 = vmul.f32 %v1432, 1.442695
    %v1434 = vpow.pop %v1433
    %v1435 = vadd.f32 %v1434, 1.0
    %v1436 = vrcp.pop %v1435
    %v1437 = vmul.f32 1.0, %v1436
    %1438 = vmatprep.subr.bf16.mxu0 0
    %1439 = vmatpush1.bf16.msra.mxu0 %v477
    %1440 = vmatprep.subr.bf16.mxu0 0
    %1441 = vmatpush1.bf16.msra.mxu0 %v478
    %1442 = vmatprep.subr.bf16.mxu0 0
    %1443 = vmatpush1.bf16.msra.mxu0 0
    %1444 = vmatprep.subr.bf16.mxu0 0
    %1445 = vmatpush1.bf16.msra.mxu0 0
    %1446 = vmatprep.subr.bf16.mxu0 0
    %1447 = vmatpush1.bf16.msra.mxu0 0
    %1448 = vmatprep.subr.bf16.mxu0 0
    %1449 = vmatpush1.bf16.msra.mxu0 0
    %1450 = vmatprep.subr.bf16.mxu0 0
    %1451 = vmatpush1.bf16.msra.mxu0 0
    %1452 = vmatprep.subr.bf16.mxu0 0
    %1453 = vmatpush1.bf16.msra.mxu0 0
    %1454 = vmatprep.subr.bf16.mxu0 0
    %1455 = vmatpush1.bf16.msra.mxu0 0
    %1456 = vmatprep.subr.bf16.mxu0 0
    %1457 = vmatpush1.bf16.msra.mxu0 0
    %1458 = vmatprep.subr.bf16.mxu0 0
    %1459 = vmatpush1.bf16.msra.mxu0 0
    %1460 = vmatprep.subr.bf16.mxu0 0
    %1461 = vmatpush1.bf16.msra.mxu0 0
    %1462 = vmatprep.subr.bf16.mxu0 0
    %1463 = vmatpush1.bf16.msra.mxu0 0
    %1464 = vmatprep.subr.bf16.mxu0 0
    %1465 = vmatpush1.bf16.msra.mxu0 0
    %1466 = vmatprep.subr.bf16.mxu0 0
    %1467 = vmatpush1.bf16.msra.mxu0 0
    %1468 = vmatprep.subr.bf16.mxu0 0
    %1469 = vmatpush1.bf16.msra.mxu0 0
    %1470 = vmatprep.mubr.bf16.mxu0 0
    %1471 = vmatmul.mubr.bf16.gmra.mrb[0].mxu0 %v1389
    %v1472 = vpop.f32.mrb[0].mxu0
    %v1473 = vadd.f32 %v549, %v1472
    %v1474 = vpop.f32.mrb[0].mxu0
    %v1475 = vpop.f32.mrb[0].mxu0
    %v1476 = vpop.f32.mrb[0].mxu0
    %1477 = vdwg.mxu0
    %v1478 = vmul.f32 %v1437, %v1473
    %1480 = vrot.lane.b32.xlu0 %v1478, 64
    %v1481 = vpop.permute.xlu0 %1480
    %v1483 = vadd.f32 %v1383, %v1481
    %v1484 = vtanh.pop %v1483
    %v1485 = vsub.f32 1.0, %v1437
    %1487 = vrot.lane.b32.xlu0 %v1484, 96
    %v1488 = vpop.permute.xlu0 %1487
    %v1490 = vmul.f32 %v1485, %v1488
    %v1491 = vmul.f32 %v1437, %v1270
    %v1492 = vadd.f32 %v1490, %v1491
    %s1493 = scalar_lea.vmem [#allocation3], 24
    %v1494 = vld [vmem:[%s1493] sm:$0xff]
    %v1495 = vpack.c.bf16 %v1381, %v1381
    %1497 = vrot.lane.b32.xlu0 %v1495, 96
    %v1498 = vpop.permute.xlu0 %1497
    %v1500 = vsel %vm494, %v1498, 0
    %1502 = vmatprep.subr.bf16.mxu0 0
    %1503 = vmatpush1.bf16.msra.mxu0 %v484
    %1504 = vmatprep.subr.bf16.mxu0 0
    %1505 = vmatpush1.bf16.msra.mxu0 %v485
    %1506 = vmatprep.subr.bf16.mxu0 0
    %1507 = vmatpush1.bf16.msra.mxu0 0
    %1508 = vmatprep.subr.bf16.mxu0 0
    %1509 = vmatpush1.bf16.msra.mxu0 0
    %1510 = vmatprep.subr.bf16.mxu0 0
    %1511 = vmatpush1.bf16.msra.mxu0 0
    %1512 = vmatprep.subr.bf16.mxu0 0
    %1513 = vmatpush1.bf16.msra.mxu0 0
    %1514 = vmatprep.subr.bf16.mxu0 0
    %1515 = vmatpush1.bf16.msra.mxu0 0
    %1516 = vmatprep.subr.bf16.mxu0 0
    %1517 = vmatpush1.bf16.msra.mxu0 0
    %1518 = vmatprep.subr.bf16.mxu0 0
    %1519 = vmatpush1.bf16.msra.mxu0 0
    %1520 = vmatprep.subr.bf16.mxu0 0
    %1521 = vmatpush1.bf16.msra.mxu0 0
    %1522 = vmatprep.subr.bf16.mxu0 0
    %1523 = vmatpush1.bf16.msra.mxu0 0
    %1524 = vmatprep.subr.bf16.mxu0 0
    %1525 = vmatpush1.bf16.msra.mxu0 0
    %1526 = vmatprep.subr.bf16.mxu0 0
    %1527 = vmatpush1.bf16.msra.mxu0 0
    %1528 = vmatprep.subr.bf16.mxu0 0
    %1529 = vmatpush1.bf16.msra.mxu0 0
    %1530 = vmatprep.subr.bf16.mxu0 0
    %1531 = vmatpush1.bf16.msra.mxu0 0
    %1532 = vmatprep.subr.bf16.mxu0 0
    %1533 = vmatpush1.bf16.msra.mxu0 0
    %1534 = vmatprep.mubr.bf16.mxu0 0
    %1535 = vmatmul.mubr.bf16.gmra.mrb[0].mxu0 %v1500
    %v1536 = vpop.f32.mrb[0].mxu0
    %v1537 = vadd.f32 0.0, %v1536
    %v1538 = vpop.f32.mrb[0].mxu0
    %v1539 = vpop.f32.mrb[0].mxu0
    %v1540 = vpop.f32.mrb[0].mxu0
    %1541 = vdwg.mxu0
    %v1542 = vadd.f32 %v1494, %v1537
    %v1543 = vxor.u32 %v1542, 2147483648
    %v1544 = vmul.f32 %v1543, 1.442695
    %v1545 = vpow.pop %v1544
    %v1546 = vadd.f32 %v1545, 1.0
    %v1547 = vrcp.pop %v1546
    %v1548 = vmul.f32 1.0, %v1547
    %1549 = vmatprep.subr.bf16.mxu0 0
    %1550 = vmatpush1.bf16.msra.mxu0 %v490
    %1551 = vmatprep.subr.bf16.mxu0 0
    %1552 = vmatpush1.bf16.msra.mxu0 %v491
    %1553 = vmatprep.subr.bf16.mxu0 0
    %1554 = vmatpush1.bf16.msra.mxu0 0
    %1555 = vmatprep.subr.bf16.mxu0 0
    %1556 = vmatpush1.bf16.msra.mxu0 0
    %1557 = vmatprep.subr.bf16.mxu0 0
    %1558 = vmatpush1.bf16.msra.mxu0 0
    %1559 = vmatprep.subr.bf16.mxu0 0
    %1560 = vmatpush1.bf16.msra.mxu0 0
    %1561 = vmatprep.subr.bf16.mxu0 0
    %1562 = vmatpush1.bf16.msra.mxu0 0
    %1563 = vmatprep.subr.bf16.mxu0 0
    %1564 = vmatpush1.bf16.msra.mxu0 0
    %1565 = vmatprep.subr.bf16.mxu0 0
    %1566 = vmatpush1.bf16.msra.mxu0 0
    %1567 = vmatprep.subr.bf16.mxu0 0
    %1568 = vmatpush1.bf16.msra.mxu0 0
    %1569 = vmatprep.subr.bf16.mxu0 0
    %1570 = vmatpush1.bf16.msra.mxu0 0
    %1571 = vmatprep.subr.bf16.mxu0 0
    %1572 = vmatpush1.bf16.msra.mxu0 0
    %1573 = vmatprep.subr.bf16.mxu0 0
    %1574 = vmatpush1.bf16.msra.mxu0 0
    %1575 = vmatprep.subr.bf16.mxu0 0
    %1576 = vmatpush1.bf16.msra.mxu0 0
    %1577 = vmatprep.subr.bf16.mxu0 0
    %1578 = vmatpush1.bf16.msra.mxu0 0
    %1579 = vmatprep.subr.bf16.mxu0 0
    %1580 = vmatpush1.bf16.msra.mxu0 0
    %1581 = vmatprep.mubr.bf16.mxu0 0
    %1582 = vmatmul.mubr.bf16.gmra.mrb[0].mxu0 %v1500
    %v1583 = vpop.f32.mrb[0].mxu0
    %v1584 = vadd.f32 %v659, %v1583
    %v1585 = vpop.f32.mrb[0].mxu0
    %v1586 = vpop.f32.mrb[0].mxu0
    %v1587 = vpop.f32.mrb[0].mxu0
    %1588 = vdwg.mxu0
    %v1589 = vmul.f32 %v1548, %v1584
    %1591 = vrot.lane.b32.xlu0 %v1589, 64
    %v1592 = vpop.permute.xlu0 %1591
    %v1594 = vadd.f32 %v1494, %v1592
    %v1595 = vtanh.pop %v1594
    %v1596 = vsub.f32 1.0, %v1548
    %1598 = vrot.lane.b32.xlu0 %v1595, 96
    %v1599 = vpop.permute.xlu0 %1598
    %v1601 = vmul.f32 %v1596, %v1599
    %v1602 = vmul.f32 %v1548, %v1381
    %v1603 = vadd.f32 %v1601, %v1602
    %s1604 = scalar_lea.vmem [#allocation2], 40
    %v1605 = vld [vmem:[%s1604] sm:$0xff]
    %v1606 = vpack.c.bf16 %v1492, %v1492
    %1608 = vrot.lane.b32.xlu0 %v1606, 96
    %v1609 = vpop.permute.xlu0 %1608
    %v1611 = vsel %vm494, %v1609, 0
    %1613 = vmatprep.subr.bf16.mxu0 0
    %1614 = vmatpush1.bf16.msra.mxu0 %v471
    %1615 = vmatprep.subr.bf16.mxu0 0
    %1616 = vmatpush1.bf16.msra.mxu0 %v472
    %1617 = vmatprep.subr.bf16.mxu0 0
    %1618 = vmatpush1.bf16.msra.mxu0 0
    %1619 = vmatprep.subr.bf16.mxu0 0
    %1620 = vmatpush1.bf16.msra.mxu0 0
    %1621 = vmatprep.subr.bf16.mxu0 0
    %1622 = vmatpush1.bf16.msra.mxu0 0
    %1623 = vmatprep.subr.bf16.mxu0 0
    %1624 = vmatpush1.bf16.msra.mxu0 0
    %1625 = vmatprep.subr.bf16.mxu0 0
    %1626 = vmatpush1.bf16.msra.mxu0 0
    %1627 = vmatprep.subr.bf16.mxu0 0
    %1628 = vmatpush1.bf16.msra.mxu0 0
    %1629 = vmatprep.subr.bf16.mxu0 0
    %1630 = vmatpush1.bf16.msra.mxu0 0
    %1631 = vmatprep.subr.bf16.mxu0 0
    %1632 = vmatpush1.bf16.msra.mxu0 0
    %1633 = vmatprep.subr.bf16.mxu0 0
    %1634 = vmatpush1.bf16.msra.mxu0 0
    %1635 = vmatprep.subr.bf16.mxu0 0
    %1636 = vmatpush1.bf16.msra.mxu0 0
    %1637 = vmatprep.subr.bf16.mxu0 0
    %1638 = vmatpush1.bf16.msra.mxu0 0
    %1639 = vmatprep.subr.bf16.mxu0 0
    %1640 = vmatpush1.bf16.msra.mxu0 0
    %1641 = vmatprep.subr.bf16.mxu0 0
    %1642 = vmatpush1.bf16.msra.mxu0 0
    %1643 = vmatprep.subr.bf16.mxu0 0
    %1644 = vmatpush1.bf16.msra.mxu0 0
    %1645 = vmatprep.mubr.bf16.mxu0 0
    %1646 = vmatmul.mubr.bf16.gmra.mrb[0].mxu0 %v1611
    %v1647 = vpop.f32.mrb[0].mxu0
    %v1648 = vadd.f32 0.0, %v1647
    %v1649 = vpop.f32.mrb[0].mxu0
    %v1650 = vpop.f32.mrb[0].mxu0
    %v1651 = vpop.f32.mrb[0].mxu0
    %1652 = vdwg.mxu0
    %v1653 = vadd.f32 %v1605, %v1648
    %v1654 = vxor.u32 %v1653, 2147483648
    %v1655 = vmul.f32 %v1654, 1.442695
    %v1656 = vpow.pop %v1655
    %v1657 = vadd.f32 %v1656, 1.0
    %v1658 = vrcp.pop %v1657
    %v1659 = vmul.f32 1.0, %v1658
    %1660 = vmatprep.subr.bf16.mxu0 0
    %1661 = vmatpush1.bf16.msra.mxu0 %v477
    %1662 = vmatprep.subr.bf16.mxu0 0
    %1663 = vmatpush1.bf16.msra.mxu0 %v478
    %1664 = vmatprep.subr.bf16.mxu0 0
    %1665 = vmatpush1.bf16.msra.mxu0 0
    %1666 = vmatprep.subr.bf16.mxu0 0
    %1667 = vmatpush1.bf16.msra.mxu0 0
    %1668 = vmatprep.subr.bf16.mxu0 0
    %1669 = vmatpush1.bf16.msra.mxu0 0
    %1670 = vmatprep.subr.bf16.mxu0 0
    %1671 = vmatpush1.bf16.msra.mxu0 0
    %1672 = vmatprep.subr.bf16.mxu0 0
    %1673 = vmatpush1.bf16.msra.mxu0 0
    %1674 = vmatprep.subr.bf16.mxu0 0
    %1675 = vmatpush1.bf16.msra.mxu0 0
    %1676 = vmatprep.subr.bf16.mxu0 0
    %1677 = vmatpush1.bf16.msra.mxu0 0
    %1678 = vmatprep.subr.bf16.mxu0 0
    %1679 = vmatpush1.bf16.msra.mxu0 0
    %1680 = vmatprep.subr.bf16.mxu0 0
    %1681 = vmatpush1.bf16.msra.mxu0 0
    %1682 = vmatprep.subr.bf16.mxu0 0
    %1683 = vmatpush1.bf16.msra.mxu0 0
    %1684 = vmatprep.subr.bf16.mxu0 0
    %1685 = vmatpush1.bf16.msra.mxu0 0
    %1686 = vmatprep.subr.bf16.mxu0 0
    %1687 = vmatpush1.bf16.msra.mxu0 0
    %1688 = vmatprep.subr.bf16.mxu0 0
    %1689 = vmatpush1.bf16.msra.mxu0 0
    %1690 = vmatprep.subr.bf16.mxu0 0
    %1691 = vmatpush1.bf16.msra.mxu0 0
    %1692 = vmatprep.mubr.bf16.mxu0 0
    %1693 = vmatmul.mubr.bf16.gmra.mrb[0].mxu0 %v1611
    %v1694 = vpop.f32.mrb[0].mxu0
    %v1695 = vadd.f32 %v549, %v1694
    %v1696 = vpop.f32.mrb[0].mxu0
    %v1697 = vpop.f32.mrb[0].mxu0
    %v1698 = vpop.f32.mrb[0].mxu0
    %1699 = vdwg.mxu0
    %v1700 = vmul.f32 %v1659, %v1695
    %1702 = vrot.lane.b32.xlu0 %v1700, 64
    %v1703 = vpop.permute.xlu0 %1702
    %v1705 = vadd.f32 %v1605, %v1703
    %v1706 = vtanh.pop %v1705
    %v1707 = vsub.f32 1.0, %v1659
    %1709 = vrot.lane.b32.xlu0 %v1706, 96
    %v1710 = vpop.permute.xlu0 %1709
    %v1712 = vmul.f32 %v1707, %v1710
    %v1713 = vmul.f32 %v1659, %v1492
    %v1714 = vadd.f32 %v1712, %v1713
    %s1715 = scalar_lea.vmem [#allocation3], 16
    %v1716 = vld [vmem:[%s1715] sm:$0xff]
    %v1717 = vpack.c.bf16 %v1603, %v1603
    %1719 = vrot.lane.b32.xlu0 %v1717, 96
    %v1720 = vpop.permute.xlu0 %1719
    %v1722 = vsel %vm494, %v1720, 0
    %1724 = vmatprep.subr.bf16.mxu0 0
    %1725 = vmatpush1.bf16.msra.mxu0 %v484
    %1726 = vmatprep.subr.bf16.mxu0 0
    %1727 = vmatpush1.bf16.msra.mxu0 %v485
    %1728 = vmatprep.subr.bf16.mxu0 0
    %1729 = vmatpush1.bf16.msra.mxu0 0
    %1730 = vmatprep.subr.bf16.mxu0 0
    %1731 = vmatpush1.bf16.msra.mxu0 0
    %1732 = vmatprep.subr.bf16.mxu0 0
    %1733 = vmatpush1.bf16.msra.mxu0 0
    %1734 = vmatprep.subr.bf16.mxu0 0
    %1735 = vmatpush1.bf16.msra.mxu0 0
    %1736 = vmatprep.subr.bf16.mxu0 0
    %1737 = vmatpush1.bf16.msra.mxu0 0
    %1738 = vmatprep.subr.bf16.mxu0 0
    %1739 = vmatpush1.bf16.msra.mxu0 0
    %1740 = vmatprep.subr.bf16.mxu0 0
    %1741 = vmatpush1.bf16.msra.mxu0 0
    %1742 = vmatprep.subr.bf16.mxu0 0
    %1743 = vmatpush1.bf16.msra.mxu0 0
    %1744 = vmatprep.subr.bf16.mxu0 0
    %1745 = vmatpush1.bf16.msra.mxu0 0
    %1746 = vmatprep.subr.bf16.mxu0 0
    %1747 = vmatpush1.bf16.msra.mxu0 0
    %1748 = vmatprep.subr.bf16.mxu0 0
    %1749 = vmatpush1.bf16.msra.mxu0 0
    %1750 = vmatprep.subr.bf16.mxu0 0
    %1751 = vmatpush1.bf16.msra.mxu0 0
    %1752 = vmatprep.subr.bf16.mxu0 0
    %1753 = vmatpush1.bf16.msra.mxu0 0
    %1754 = vmatprep.subr.bf16.mxu0 0
    %1755 = vmatpush1.bf16.msra.mxu0 0
    %1756 = vmatprep.mubr.bf16.mxu0 0
    %1757 = vmatmul.mubr.bf16.gmra.mrb[0].mxu0 %v1722
    %v1758 = vpop.f32.mrb[0].mxu0
    %v1759 = vadd.f32 0.0, %v1758
    %v1760 = vpop.f32.mrb[0].mxu0
    %v1761 = vpop.f32.mrb[0].mxu0
    %v1762 = vpop.f32.mrb[0].mxu0
    %1763 = vdwg.mxu0
    %v1764 = vadd.f32 %v1716, %v1759
    %v1765 = vxor.u32 %v1764, 2147483648
    %v1766 = vmul.f32 %v1765, 1.442695
    %v1767 = vpow.pop %v1766
    %v1768 = vadd.f32 %v1767, 1.0
    %v1769 = vrcp.pop %v1768
    %v1770 = vmul.f32 1.0, %v1769
    %1771 = vmatprep.subr.bf16.mxu0 0
    %1772 = vmatpush1.bf16.msra.mxu0 %v490
    %1773 = vmatprep.subr.bf16.mxu0 0
    %1774 = vmatpush1.bf16.msra.mxu0 %v491
    %1775 = vmatprep.subr.bf16.mxu0 0
    %1776 = vmatpush1.bf16.msra.mxu0 0
    %1777 = vmatprep.subr.bf16.mxu0 0
    %1778 = vmatpush1.bf16.msra.mxu0 0
    %1779 = vmatprep.subr.bf16.mxu0 0
    %1780 = vmatpush1.bf16.msra.mxu0 0
    %1781 = vmatprep.subr.bf16.mxu0 0
    %1782 = vmatpush1.bf16.msra.mxu0 0
    %1783 = vmatprep.subr.bf16.mxu0 0
    %1784 = vmatpush1.bf16.msra.mxu0 0
    %1785 = vmatprep.subr.bf16.mxu0 0
    %1786 = vmatpush1.bf16.msra.mxu0 0
    %1787 = vmatprep.subr.bf16.mxu0 0
    %1788 = vmatpush1.bf16.msra.mxu0 0
    %1789 = vmatprep.subr.bf16.mxu0 0
    %1790 = vmatpush1.bf16.msra.mxu0 0
    %1791 = vmatprep.subr.bf16.mxu0 0
    %1792 = vmatpush1.bf16.msra.mxu0 0
    %1793 = vmatprep.subr.bf16.mxu0 0
    %1794 = vmatpush1.bf16.msra.mxu0 0
    %1795 = vmatprep.subr.bf16.mxu0 0
    %1796 = vmatpush1.bf16.msra.mxu0 0
    %1797 = vmatprep.subr.bf16.mxu0 0
    %1798 = vmatpush1.bf16.msra.mxu0 0
    %1799 = vmatprep.subr.bf16.mxu0 0
    %1800 = vmatpush1.bf16.msra.mxu0 0
    %1801 = vmatprep.subr.bf16.mxu0 0
    %1802 = vmatpush1.bf16.msra.mxu0 0
    %1803 = vmatprep.mubr.bf16.mxu0 0
    %1804 = vmatmul.mubr.bf16.gmra.mrb[0].mxu0 %v1722
    %v1805 = vpop.f32.mrb[0].mxu0
    %v1806 = vadd.f32 %v659, %v1805
    %v1807 = vpop.f32.mrb[0].mxu0
    %v1808 = vpop.f32.mrb[0].mxu0
    %v1809 = vpop.f32.mrb[0].mxu0
    %1810 = vdwg.mxu0
    %v1811 = vmul.f32 %v1770, %v1806
    %1813 = vrot.lane.b32.xlu0 %v1811, 64
    %v1814 = vpop.permute.xlu0 %1813
    %v1816 = vadd.f32 %v1716, %v1814
    %v1817 = vtanh.pop %v1816
    %v1818 = vsub.f32 1.0, %v1770
    %1820 = vrot.lane.b32.xlu0 %v1817, 96
    %v1821 = vpop.permute.xlu0 %1820
    %v1823 = vmul.f32 %v1818, %v1821
    %v1824 = vmul.f32 %v1770, %v1603
    %v1825 = vadd.f32 %v1823, %v1824
    %s1826 = scalar_lea.vmem [#allocation2], 48
    %v1827 = vld [vmem:[%s1826] sm:$0xff]
    %v1828 = vpack.c.bf16 %v1714, %v1714
    %1830 = vrot.lane.b32.xlu0 %v1828, 96
    %v1831 = vpop.permute.xlu0 %1830
    %v1833 = vsel %vm494, %v1831, 0
    %1835 = vmatprep.subr.bf16.mxu0 0
    %1836 = vmatpush1.bf16.msra.mxu0 %v471
    %1837 = vmatprep.subr.bf16.mxu0 0
    %1838 = vmatpush1.bf16.msra.mxu0 %v472
    %1839 = vmatprep.subr.bf16.mxu0 0
    %1840 = vmatpush1.bf16.msra.mxu0 0
    %1841 = vmatprep.subr.bf16.mxu0 0
    %1842 = vmatpush1.bf16.msra.mxu0 0
    %1843 = vmatprep.subr.bf16.mxu0 0
    %1844 = vmatpush1.bf16.msra.mxu0 0
    %1845 = vmatprep.subr.bf16.mxu0 0
    %1846 = vmatpush1.bf16.msra.mxu0 0
    %1847 = vmatprep.subr.bf16.mxu0 0
    %1848 = vmatpush1.bf16.msra.mxu0 0
    %1849 = vmatprep.subr.bf16.mxu0 0
    %1850 = vmatpush1.bf16.msra.mxu0 0
    %1851 = vmatprep.subr.bf16.mxu0 0
    %1852 = vmatpush1.bf16.msra.mxu0 0
    %1853 = vmatprep.subr.bf16.mxu0 0
    %1854 = vmatpush1.bf16.msra.mxu0 0
    %1855 = vmatprep.subr.bf16.mxu0 0
    %1856 = vmatpush1.bf16.msra.mxu0 0
    %1857 = vmatprep.subr.bf16.mxu0 0
    %1858 = vmatpush1.bf16.msra.mxu0 0
    %1859 = vmatprep.subr.bf16.mxu0 0
    %1860 = vmatpush1.bf16.msra.mxu0 0
    %1861 = vmatprep.subr.bf16.mxu0 0
    %1862 = vmatpush1.bf16.msra.mxu0 0
    %1863 = vmatprep.subr.bf16.mxu0 0
    %1864 = vmatpush1.bf16.msra.mxu0 0
    %1865 = vmatprep.subr.bf16.mxu0 0
    %1866 = vmatpush1.bf16.msra.mxu0 0
    %1867 = vmatprep.mubr.bf16.mxu0 0
    %1868 = vmatmul.mubr.bf16.gmra.mrb[0].mxu0 %v1833
    %v1869 = vpop.f32.mrb[0].mxu0
    %v1870 = vadd.f32 0.0, %v1869
    %v1871 = vpop.f32.mrb[0].mxu0
    %v1872 = vpop.f32.mrb[0].mxu0
    %v1873 = vpop.f32.mrb[0].mxu0
    %1874 = vdwg.mxu0
    %v1875 = vadd.f32 %v1827, %v1870
    %v1876 = vxor.u32 %v1875, 2147483648
    %v1877 = vmul.f32 %v1876, 1.442695
    %v1878 = vpow.pop %v1877
    %v1879 = vadd.f32 %v1878, 1.0
    %v1880 = vrcp.pop %v1879
    %v1881 = vmul.f32 1.0, %v1880
    %1882 = vmatprep.subr.bf16.mxu0 0
    %1883 = vmatpush1.bf16.msra.mxu0 %v477
    %1884 = vmatprep.subr.bf16.mxu0 0
    %1885 = vmatpush1.bf16.msra.mxu0 %v478
    %1886 = vmatprep.subr.bf16.mxu0 0
    %1887 = vmatpush1.bf16.msra.mxu0 0
    %1888 = vmatprep.subr.bf16.mxu0 0
    %1889 = vmatpush1.bf16.msra.mxu0 0
    %1890 = vmatprep.subr.bf16.mxu0 0
    %1891 = vmatpush1.bf16.msra.mxu0 0
    %1892 = vmatprep.subr.bf16.mxu0 0
    %1893 = vmatpush1.bf16.msra.mxu0 0
    %1894 = vmatprep.subr.bf16.mxu0 0
    %1895 = vmatpush1.bf16.msra.mxu0 0
    %1896 = vmatprep.subr.bf16.mxu0 0
    %1897 = vmatpush1.bf16.msra.mxu0 0
    %1898 = vmatprep.subr.bf16.mxu0 0
    %1899 = vmatpush1.bf16.msra.mxu0 0
    %1900 = vmatprep.subr.bf16.mxu0 0
    %1901 = vmatpush1.bf16.msra.mxu0 0
    %1902 = vmatprep.subr.bf16.mxu0 0
    %1903 = vmatpush1.bf16.msra.mxu0 0
    %1904 = vmatprep.subr.bf16.mxu0 0
    %1905 = vmatpush1.bf16.msra.mxu0 0
    %1906 = vmatprep.subr.bf16.mxu0 0
    %1907 = vmatpush1.bf16.msra.mxu0 0
    %1908 = vmatprep.subr.bf16.mxu0 0
    %1909 = vmatpush1.bf16.msra.mxu0 0
    %1910 = vmatprep.subr.bf16.mxu0 0
    %1911 = vmatpush1.bf16.msra.mxu0 0
    %1912 = vmatprep.subr.bf16.mxu0 0
    %1913 = vmatpush1.bf16.msra.mxu0 0
    %1914 = vmatprep.mubr.bf16.mxu0 0
    %1915 = vmatmul.mubr.bf16.gmra.mrb[0].mxu0 %v1833
    %v1916 = vpop.f32.mrb[0].mxu0
    %v1917 = vadd.f32 %v549, %v1916
    %v1918 = vpop.f32.mrb[0].mxu0
    %v1919 = vpop.f32.mrb[0].mxu0
    %v1920 = vpop.f32.mrb[0].mxu0
    %1921 = vdwg.mxu0
    %v1922 = vmul.f32 %v1881, %v1917
    %1924 = vrot.lane.b32.xlu0 %v1922, 64
    %v1925 = vpop.permute.xlu0 %1924
    %v1927 = vadd.f32 %v1827, %v1925
    %v1928 = vtanh.pop %v1927
    %v1929 = vsub.f32 1.0, %v1881
    %1931 = vrot.lane.b32.xlu0 %v1928, 96
    %v1932 = vpop.permute.xlu0 %1931
    %v1934 = vmul.f32 %v1929, %v1932
    %v1935 = vmul.f32 %v1881, %v1714
    %v1936 = vadd.f32 %v1934, %v1935
    %s1937 = scalar_lea.vmem [#allocation3], 8
    %v1938 = vld [vmem:[%s1937] sm:$0xff]
    %v1939 = vpack.c.bf16 %v1825, %v1825
    %1941 = vrot.lane.b32.xlu0 %v1939, 96
    %v1942 = vpop.permute.xlu0 %1941
    %v1944 = vsel %vm494, %v1942, 0
    %1946 = vmatprep.subr.bf16.mxu0 0
    %1947 = vmatpush1.bf16.msra.mxu0 %v484
    %1948 = vmatprep.subr.bf16.mxu0 0
    %1949 = vmatpush1.bf16.msra.mxu0 %v485
    %1950 = vmatprep.subr.bf16.mxu0 0
    %1951 = vmatpush1.bf16.msra.mxu0 0
    %1952 = vmatprep.subr.bf16.mxu0 0
    %1953 = vmatpush1.bf16.msra.mxu0 0
    %1954 = vmatprep.subr.bf16.mxu0 0
    %1955 = vmatpush1.bf16.msra.mxu0 0
    %1956 = vmatprep.subr.bf16.mxu0 0
    %1957 = vmatpush1.bf16.msra.mxu0 0
    %1958 = vmatprep.subr.bf16.mxu0 0
    %1959 = vmatpush1.bf16.msra.mxu0 0
    %1960 = vmatprep.subr.bf16.mxu0 0
    %1961 = vmatpush1.bf16.msra.mxu0 0
    %1962 = vmatprep.subr.bf16.mxu0 0
    %1963 = vmatpush1.bf16.msra.mxu0 0
    %1964 = vmatprep.subr.bf16.mxu0 0
    %1965 = vmatpush1.bf16.msra.mxu0 0
    %1966 = vmatprep.subr.bf16.mxu0 0
    %1967 = vmatpush1.bf16.msra.mxu0 0
    %1968 = vmatprep.subr.bf16.mxu0 0
    %1969 = vmatpush1.bf16.msra.mxu0 0
    %1970 = vmatprep.subr.bf16.mxu0 0
    %1971 = vmatpush1.bf16.msra.mxu0 0
    %1972 = vmatprep.subr.bf16.mxu0 0
    %1973 = vmatpush1.bf16.msra.mxu0 0
    %1974 = vmatprep.subr.bf16.mxu0 0
    %1975 = vmatpush1.bf16.msra.mxu0 0
    %1976 = vmatprep.subr.bf16.mxu0 0
    %1977 = vmatpush1.bf16.msra.mxu0 0
    %1978 = vmatprep.mubr.bf16.mxu0 0
    %1979 = vmatmul.mubr.bf16.gmra.mrb[0].mxu0 %v1944
    %v1980 = vpop.f32.mrb[0].mxu0
    %v1981 = vadd.f32 0.0, %v1980
    %v1982 = vpop.f32.mrb[0].mxu0
    %v1983 = vpop.f32.mrb[0].mxu0
    %v1984 = vpop.f32.mrb[0].mxu0
    %1985 = vdwg.mxu0
    %v1986 = vadd.f32 %v1938, %v1981
    %v1987 = vxor.u32 %v1986, 2147483648
    %v1988 = vmul.f32 %v1987, 1.442695
    %v1989 = vpow.pop %v1988
    %v1990 = vadd.f32 %v1989, 1.0
    %v1991 = vrcp.pop %v1990
    %v1992 = vmul.f32 1.0, %v1991
    %1993 = vmatprep.subr.bf16.mxu0 0
    %1994 = vmatpush1.bf16.msra.mxu0 %v490
    %1995 = vmatprep.subr.bf16.mxu0 0
    %1996 = vmatpush1.bf16.msra.mxu0 %v491
    %1997 = vmatprep.subr.bf16.mxu0 0
    %1998 = vmatpush1.bf16.msra.mxu0 0
    %1999 = vmatprep.subr.bf16.mxu0 0
    %2000 = vmatpush1.bf16.msra.mxu0 0
    %2001 = vmatprep.subr.bf16.mxu0 0
    %2002 = vmatpush1.bf16.msra.mxu0 0
    %2003 = vmatprep.subr.bf16.mxu0 0
    %2004 = vmatpush1.bf16.msra.mxu0 0
    %2005 = vmatprep.subr.bf16.mxu0 0
    %2006 = vmatpush1.bf16.msra.mxu0 0
    %2007 = vmatprep.subr.bf16.mxu0 0
    %2008 = vmatpush1.bf16.msra.mxu0 0
    %2009 = vmatprep.subr.bf16.mxu0 0
    %2010 = vmatpush1.bf16.msra.mxu0 0
    %2011 = vmatprep.subr.bf16.mxu0 0
    %2012 = vmatpush1.bf16.msra.mxu0 0
    %2013 = vmatprep.subr.bf16.mxu0 0
    %2014 = vmatpush1.bf16.msra.mxu0 0
    %2015 = vmatprep.subr.bf16.mxu0 0
    %2016 = vmatpush1.bf16.msra.mxu0 0
    %2017 = vmatprep.subr.bf16.mxu0 0
    %2018 = vmatpush1.bf16.msra.mxu0 0
    %2019 = vmatprep.subr.bf16.mxu0 0
    %2020 = vmatpush1.bf16.msra.mxu0 0
    %2021 = vmatprep.subr.bf16.mxu0 0
    %2022 = vmatpush1.bf16.msra.mxu0 0
    %2023 = vmatprep.subr.bf16.mxu0 0
    %2024 = vmatpush1.bf16.msra.mxu0 0
    %2025 = vmatprep.mubr.bf16.mxu0 0
    %2026 = vmatmul.mubr.bf16.gmra.mrb[0].mxu0 %v1944
    %v2027 = vpop.f32.mrb[0].mxu0
    %v2028 = vadd.f32 %v659, %v2027
    %v2029 = vpop.f32.mrb[0].mxu0
    %v2030 = vpop.f32.mrb[0].mxu0
    %v2031 = vpop.f32.mrb[0].mxu0
    %2032 = vdwg.mxu0
    %v2033 = vmul.f32 %v1992, %v2028
    %2035 = vrot.lane.b32.xlu0 %v2033, 64
    %v2036 = vpop.permute.xlu0 %2035
    %v2038 = vadd.f32 %v1938, %v2036
    %v2039 = vtanh.pop %v2038
    %v2040 = vsub.f32 1.0, %v1992
    %2042 = vrot.lane.b32.xlu0 %v2039, 96
    %v2043 = vpop.permute.xlu0 %2042
    %v2045 = vmul.f32 %v2040, %v2043
    %v2046 = vmul.f32 %v1992, %v1825
    %v2047 = vadd.f32 %v2045, %v2046
    %s2048 = scalar_lea.vmem [#allocation2], 56
    %v2049 = vld [vmem:[%s2048] sm:$0xff]
    %v2050 = vpack.c.bf16 %v1936, %v1936
    %2052 = vrot.lane.b32.xlu0 %v2050, 96
    %v2053 = vpop.permute.xlu0 %2052
    %v2055 = vsel %vm494, %v2053, 0
    %2057 = vmatprep.subr.bf16.mxu0 0
    %2058 = vmatpush1.bf16.msra.mxu0 %v471
    %2059 = vmatprep.subr.bf16.mxu0 0
    %2060 = vmatpush1.bf16.msra.mxu0 %v472
    %2061 = vmatprep.subr.bf16.mxu0 0
    %2062 = vmatpush1.bf16.msra.mxu0 0
    %2063 = vmatprep.subr.bf16.mxu0 0
    %2064 = vmatpush1.bf16.msra.mxu0 0
    %2065 = vmatprep.subr.bf16.mxu0 0
    %2066 = vmatpush1.bf16.msra.mxu0 0
    %2067 = vmatprep.subr.bf16.mxu0 0
    %2068 = vmatpush1.bf16.msra.mxu0 0
    %2069 = vmatprep.subr.bf16.mxu0 0
    %2070 = vmatpush1.bf16.msra.mxu0 0
    %2071 = vmatprep.subr.bf16.mxu0 0
    %2072 = vmatpush1.bf16.msra.mxu0 0
    %2073 = vmatprep.subr.bf16.mxu0 0
    %2074 = vmatpush1.bf16.msra.mxu0 0
    %2075 = vmatprep.subr.bf16.mxu0 0
    %2076 = vmatpush1.bf16.msra.mxu0 0
    %2077 = vmatprep.subr.bf16.mxu0 0
    %2078 = vmatpush1.bf16.msra.mxu0 0
    %2079 = vmatprep.subr.bf16.mxu0 0
    %2080 = vmatpush1.bf16.msra.mxu0 0
    %2081 = vmatprep.subr.bf16.mxu0 0
    %2082 = vmatpush1.bf16.msra.mxu0 0
    %2083 = vmatprep.subr.bf16.mxu0 0
    %2084 = vmatpush1.bf16.msra.mxu0 0
    %2085 = vmatprep.subr.bf16.mxu0 0
    %2086 = vmatpush1.bf16.msra.mxu0 0
    %2087 = vmatprep.subr.bf16.mxu0 0
    %2088 = vmatpush1.bf16.msra.mxu0 0
    %2089 = vmatprep.mubr.bf16.mxu0 0
    %2090 = vmatmul.mubr.bf16.gmra.mrb[0].mxu0 %v2055
    %v2091 = vpop.f32.mrb[0].mxu0
    %v2092 = vadd.f32 0.0, %v2091
    %v2093 = vpop.f32.mrb[0].mxu0
    %v2094 = vpop.f32.mrb[0].mxu0
    %v2095 = vpop.f32.mrb[0].mxu0
    %2096 = vdwg.mxu0
    %v2097 = vadd.f32 %v2049, %v2092
    %v2098 = vxor.u32 %v2097, 2147483648
    %v2099 = vmul.f32 %v2098, 1.442695
    %v2100 = vpow.pop %v2099
    %v2101 = vadd.f32 %v2100, 1.0
    %v2102 = vrcp.pop %v2101
    %v2103 = vmul.f32 1.0, %v2102
    %2104 = vmatprep.subr.bf16.mxu0 0
    %2105 = vmatpush1.bf16.msra.mxu0 %v477
    %2106 = vmatprep.subr.bf16.mxu0 0
    %2107 = vmatpush1.bf16.msra.mxu0 %v478
    %2108 = vmatprep.subr.bf16.mxu0 0
    %2109 = vmatpush1.bf16.msra.mxu0 0
    %2110 = vmatprep.subr.bf16.mxu0 0
    %2111 = vmatpush1.bf16.msra.mxu0 0
    %2112 = vmatprep.subr.bf16.mxu0 0
    %2113 = vmatpush1.bf16.msra.mxu0 0
    %2114 = vmatprep.subr.bf16.mxu0 0
    %2115 = vmatpush1.bf16.msra.mxu0 0
    %2116 = vmatprep.subr.bf16.mxu0 0
    %2117 = vmatpush1.bf16.msra.mxu0 0
    %2118 = vmatprep.subr.bf16.mxu0 0
    %2119 = vmatpush1.bf16.msra.mxu0 0
    %2120 = vmatprep.subr.bf16.mxu0 0
    %2121 = vmatpush1.bf16.msra.mxu0 0
    %2122 = vmatprep.subr.bf16.mxu0 0
    %2123 = vmatpush1.bf16.msra.mxu0 0
    %2124 = vmatprep.subr.bf16.mxu0 0
    %2125 = vmatpush1.bf16.msra.mxu0 0
    %2126 = vmatprep.subr.bf16.mxu0 0
    %2127 = vmatpush1.bf16.msra.mxu0 0
    %2128 = vmatprep.subr.bf16.mxu0 0
    %2129 = vmatpush1.bf16.msra.mxu0 0
    %2130 = vmatprep.subr.bf16.mxu0 0
    %2131 = vmatpush1.bf16.msra.mxu0 0
    %2132 = vmatprep.subr.bf16.mxu0 0
    %2133 = vmatpush1.bf16.msra.mxu0 0
    %2134 = vmatprep.subr.bf16.mxu0 0
    %2135 = vmatpush1.bf16.msra.mxu0 0
    %2136 = vmatprep.mubr.bf16.mxu0 0
    %2137 = vmatmul.mubr.bf16.gmra.mrb[0].mxu0 %v2055
    %v2138 = vpop.f32.mrb[0].mxu0
    %v2139 = vadd.f32 %v549, %v2138
    %v2140 = vpop.f32.mrb[0].mxu0
    %v2141 = vpop.f32.mrb[0].mxu0
    %v2142 = vpop.f32.mrb[0].mxu0
    %2143 = vdwg.mxu0
    %v2144 = vmul.f32 %v2103, %v2139
    %2146 = vrot.lane.b32.xlu0 %v2144, 64
    %v2147 = vpop.permute.xlu0 %2146
    %v2149 = vadd.f32 %v2049, %v2147
    %v2150 = vtanh.pop %v2149
    %v2151 = vsub.f32 1.0, %v2103
    %2153 = vrot.lane.b32.xlu0 %v2150, 96
    %v2154 = vpop.permute.xlu0 %2153
    %v2156 = vmul.f32 %v2151, %v2154
    %v2157 = vmul.f32 %v2103, %v1936
    %v2158 = vadd.f32 %v2156, %v2157
    %v2159 = vld [vmem:[#allocation3] sm:$0xff]
    %v2160 = vpack.c.bf16 %v2047, %v2047
    %2162 = vrot.lane.b32.xlu0 %v2160, 96
    %v2163 = vpop.permute.xlu0 %2162
    %v2165 = vsel %vm494, %v2163, 0
    %2167 = vmatprep.subr.bf16.mxu0 0
    %2168 = vmatpush1.bf16.msra.mxu0 %v484
    %2169 = vmatprep.subr.bf16.mxu0 0
    %2170 = vmatpush1.bf16.msra.mxu0 %v485
    %2171 = vmatprep.subr.bf16.mxu0 0
    %2172 = vmatpush1.bf16.msra.mxu0 0
    %2173 = vmatprep.subr.bf16.mxu0 0
    %2174 = vmatpush1.bf16.msra.mxu0 0
    %2175 = vmatprep.subr.bf16.mxu0 0
    %2176 = vmatpush1.bf16.msra.mxu0 0
    %2177 = vmatprep.subr.bf16.mxu0 0
    %2178 = vmatpush1.bf16.msra.mxu0 0
    %2179 = vmatprep.subr.bf16.mxu0 0
    %2180 = vmatpush1.bf16.msra.mxu0 0
    %2181 = vmatprep.subr.bf16.mxu0 0
    %2182 = vmatpush1.bf16.msra.mxu0 0
    %2183 = vmatprep.subr.bf16.mxu0 0
    %2184 = vmatpush1.bf16.msra.mxu0 0
    %2185 = vmatprep.subr.bf16.mxu0 0
    %2186 = vmatpush1.bf16.msra.mxu0 0
    %2187 = vmatprep.subr.bf16.mxu0 0
    %2188 = vmatpush1.bf16.msra.mxu0 0
    %2189 = vmatprep.subr.bf16.mxu0 0
    %2190 = vmatpush1.bf16.msra.mxu0 0
    %2191 = vmatprep.subr.bf16.mxu0 0
    %2192 = vmatpush1.bf16.msra.mxu0 0
    %2193 = vmatprep.subr.bf16.mxu0 0
    %2194 = vmatpush1.bf16.msra.mxu0 0
    %2195 = vmatprep.subr.bf16.mxu0 0
    %2196 = vmatpush1.bf16.msra.mxu0 0
    %2197 = vmatprep.subr.bf16.mxu0 0
    %2198 = vmatpush1.bf16.msra.mxu0 0
    %2199 = vmatprep.mubr.bf16.mxu0 0
    %2200 = vmatmul.mubr.bf16.gmra.mrb[0].mxu0 %v2165
    %v2201 = vpop.f32.mrb[0].mxu0
    %v2202 = vadd.f32 0.0, %v2201
    %v2203 = vpop.f32.mrb[0].mxu0
    %v2204 = vpop.f32.mrb[0].mxu0
    %v2205 = vpop.f32.mrb[0].mxu0
    %2206 = vdwg.mxu0
    %v2207 = vadd.f32 %v2159, %v2202
    %v2208 = vxor.u32 %v2207, 2147483648
    %v2209 = vmul.f32 %v2208, 1.442695
    %v2210 = vpow.pop %v2209
    %v2211 = vadd.f32 %v2210, 1.0
    %v2212 = vrcp.pop %v2211
    %v2213 = vmul.f32 1.0, %v2212
    %2214 = vmatprep.subr.bf16.mxu0 0
    %2215 = vmatpush1.bf16.msra.mxu0 %v490
    %2216 = vmatprep.subr.bf16.mxu0 0
    %2217 = vmatpush1.bf16.msra.mxu0 %v491
    %2218 = vmatprep.subr.bf16.mxu0 0
    %2219 = vmatpush1.bf16.msra.mxu0 0
    %2220 = vmatprep.subr.bf16.mxu0 0
    %2221 = vmatpush1.bf16.msra.mxu0 0
    %2222 = vmatprep.subr.bf16.mxu0 0
    %2223 = vmatpush1.bf16.msra.mxu0 0
    %2224 = vmatprep.subr.bf16.mxu0 0
    %2225 = vmatpush1.bf16.msra.mxu0 0
    %2226 = vmatprep.subr.bf16.mxu0 0
    %2227 = vmatpush1.bf16.msra.mxu0 0
    %2228 = vmatprep.subr.bf16.mxu0 0
    %2229 = vmatpush1.bf16.msra.mxu0 0
    %2230 = vmatprep.subr.bf16.mxu0 0
    %2231 = vmatpush1.bf16.msra.mxu0 0
    %2232 = vmatprep.subr.bf16.mxu0 0
    %2233 = vmatpush1.bf16.msra.mxu0 0
    %2234 = vmatprep.subr.bf16.mxu0 0
    %2235 = vmatpush1.bf16.msra.mxu0 0
    %2236 = vmatprep.subr.bf16.mxu0 0
    %2237 = vmatpush1.bf16.msra.mxu0 0
    %2238 = vmatprep.subr.bf16.mxu0 0
    %2239 = vmatpush1.bf16.msra.mxu0 0
    %2240 = vmatprep.subr.bf16.mxu0 0
    %2241 = vmatpush1.bf16.msra.mxu0 0
    %2242 = vmatprep.subr.bf16.mxu0 0
    %2243 = vmatpush1.bf16.msra.mxu0 0
    %2244 = vmatprep.subr.bf16.mxu0 0
    %2245 = vmatpush1.bf16.msra.mxu0 0
    %2246 = vmatprep.mubr.bf16.mxu0 0
    %2247 = vmatmul.mubr.bf16.gmra.mrb[0].mxu0 %v2165
    %v2248 = vpop.f32.mrb[0].mxu0
    %v2249 = vadd.f32 %v659, %v2248
    %v2250 = vpop.f32.mrb[0].mxu0
    %v2251 = vpop.f32.mrb[0].mxu0
    %v2252 = vpop.f32.mrb[0].mxu0
    %2253 = vdwg.mxu0
    %v2254 = vmul.f32 %v2213, %v2249
    %2256 = vrot.lane.b32.xlu0 %v2254, 64
    %v2257 = vpop.permute.xlu0 %2256
    %v2259 = vadd.f32 %v2159, %v2257
    %v2260 = vtanh.pop %v2259
    %v2261 = vsub.f32 1.0, %v2213
    %2263 = vrot.lane.b32.xlu0 %v2260, 96
    %v2264 = vpop.permute.xlu0 %2263
    %v2266 = vmul.f32 %v2261, %v2264
    %v2267 = vmul.f32 %v2213, %v2047
    %v2268 = vadd.f32 %v2266, %v2267
    %v2269 = vld [vmem:[#allocation21] sm:$0xff]
    %v2270 = vld [vmem:[#allocation21 + $0x8] sm:$0xff]
    %v2271 = vld [vmem:[#allocation21 + $0x10] sm:$0xff]
    %v2272 = vld [vmem:[#allocation21 + $0x18] sm:$0xff]
    %v2273 = vpack.c.bf16 %v2158, %v2158
    %v2274 = vpack.c.bf16 %v2270, %v2269
    %v2275 = vpack.c.bf16 %v2272, %v2271
    %v2276 = vld [vmem:[#allocation22] sm:$0x1]
    %v2278 = vlaneseq
    %v2279 = vshrl.u32 %v2278, 7
    %v2280 = vsub.s32 0, %v2279
    %v2281 = vrot.slane %v2276, %v2280
    %2284 = vrot.lane.b32.xlu0 %v2273, 96
    %v2285 = vpop.permute.xlu0 %2284
    %v2287 = vsel %vm494, %v2285, 0
    %2289 = vmatprep.subr.bf16.mxu0 0
    %2290 = vmatpush1.bf16.msra.mxu0 %v2274
    %2291 = vmatprep.subr.bf16.mxu0 0
    %2292 = vmatpush1.bf16.msra.mxu0 %v2275
    %2293 = vmatprep.subr.bf16.mxu0 0
    %2294 = vmatpush1.bf16.msra.mxu0 0
    %2295 = vmatprep.subr.bf16.mxu0 0
    %2296 = vmatpush1.bf16.msra.mxu0 0
    %2297 = vmatprep.subr.bf16.mxu0 0
    %2298 = vmatpush1.bf16.msra.mxu0 0
    %2299 = vmatprep.subr.bf16.mxu0 0
    %2300 = vmatpush1.bf16.msra.mxu0 0
    %2301 = vmatprep.subr.bf16.mxu0 0
    %2302 = vmatpush1.bf16.msra.mxu0 0
    %2303 = vmatprep.subr.bf16.mxu0 0
    %2304 = vmatpush1.bf16.msra.mxu0 0
    %2305 = vmatprep.subr.bf16.mxu0 0
    %2306 = vmatpush1.bf16.msra.mxu0 0
    %2307 = vmatprep.subr.bf16.mxu0 0
    %2308 = vmatpush1.bf16.msra.mxu0 0
    %2309 = vmatprep.subr.bf16.mxu0 0
    %2310 = vmatpush1.bf16.msra.mxu0 0
    %2311 = vmatprep.subr.bf16.mxu0 0
    %2312 = vmatpush1.bf16.msra.mxu0 0
    %2313 = vmatprep.subr.bf16.mxu0 0
    %2314 = vmatpush1.bf16.msra.mxu0 0
    %2315 = vmatprep.subr.bf16.mxu0 0
    %2316 = vmatpush1.bf16.msra.mxu0 0
    %2317 = vmatprep.subr.bf16.mxu0 0
    %2318 = vmatpush1.bf16.msra.mxu0 0
    %2319 = vmatprep.subr.bf16.mxu0 0
    %2320 = vmatpush1.bf16.msra.mxu0 0
    %2321 = vmatprep.mubr.bf16.mxu0 0
    %2322 = vmatmul.mubr.bf16.gmra.mrb[0].mxu0 %v2287
    %v2323 = vpop.f32.mrb[0].mxu0
    %v2324 = vadd.f32 %v2281, %v2323
    %v2325 = vpop.f32.mrb[0].mxu0
    %v2326 = vpop.f32.mrb[0].mxu0
    %v2327 = vpop.f32.mrb[0].mxu0
    %2328 = vdwg.mxu0
    %v2329 = vmax.f32 %v2324, 0.0
    %v2330 = vld [vmem:[#allocation24] sm:$0xff]
    %v2331 = vld [vmem:[#allocation24 + $0x8] sm:$0xff]
    %v2332 = vld [vmem:[#allocation24 + $0x10] sm:$0xff]
    %v2333 = vld [vmem:[#allocation24 + $0x18] sm:$0xff]
    %v2334 = vpack.c.bf16 %v2329, %v2329
    %v2335 = vpack.c.bf16 %v2331, %v2330
    %v2336 = vpack.c.bf16 %v2333, %v2332
    %v2337 = vld [vmem:[#allocation25] sm:$0x1]
    %v2339 = vlaneseq
    %v2340 = vshrl.u32 %v2339, 7
    %v2341 = vsub.s32 0, %v2340
    %v2342 = vrot.slane %v2337, %v2341
    %v2345 = vsel %vm494, %v2334, 0
    %2347 = vmatprep.subr.bf16.mxu0 0
    %2348 = vmatpush1.bf16.msra.mxu0 %v2335
    %2349 = vmatprep.subr.bf16.mxu0 0
    %2350 = vmatpush1.bf16.msra.mxu0 %v2336
    %2351 = vmatprep.subr.bf16.mxu0 0
    %2352 = vmatpush1.bf16.msra.mxu0 0
    %2353 = vmatprep.subr.bf16.mxu0 0
    %2354 = vmatpush1.bf16.msra.mxu0 0
    %2355 = vmatprep.subr.bf16.mxu0 0
    %2356 = vmatpush1.bf16.msra.mxu0 0
    %2357 = vmatprep.subr.bf16.mxu0 0
    %2358 = vmatpush1.bf16.msra.mxu0 0
    %2359 = vmatprep.subr.bf16.mxu0 0
    %2360 = vmatpush1.bf16.msra.mxu0 0
    %2361 = vmatprep.subr.bf16.mxu0 0
    %2362 = vmatpush1.bf16.msra.mxu0 0
    %2363 = vmatprep.subr.bf16.mxu0 0
    %2364 = vmatpush1.bf16.msra.mxu0 0
    %2365 = vmatprep.subr.bf16.mxu0 0
    %2366 = vmatpush1.bf16.msra.mxu0 0
    %2367 = vmatprep.subr.bf16.mxu0 0
    %2368 = vmatpush1.bf16.msra.mxu0 0
    %2369 = vmatprep.subr.bf16.mxu0 0
    %2370 = vmatpush1.bf16.msra.mxu0 0
    %2371 = vmatprep.subr.bf16.mxu0 0
    %2372 = vmatpush1.bf16.msra.mxu0 0
    %2373 = vmatprep.subr.bf16.mxu0 0
    %2374 = vmatpush1.bf16.msra.mxu0 0
    %2375 = vmatprep.subr.bf16.mxu0 0
    %2376 = vmatpush1.bf16.msra.mxu0 0
    %2377 = vmatprep.subr.bf16.mxu0 0
    %2378 = vmatpush1.bf16.msra.mxu0 0
    %2379 = vmatprep.mubr.bf16.mxu0 0
    %2380 = vmatmul.mubr.bf16.gmra.mrb[0].mxu0 %v2345
    %v2381 = vpop.f32.mrb[0].mxu0
    %v2382 = vadd.f32 %v2342, %v2381
    %v2383 = vpop.f32.mrb[0].mxu0
    %v2384 = vpop.f32.mrb[0].mxu0
    %v2385 = vpop.f32.mrb[0].mxu0
    %2386 = vdwg.mxu0
    %v2387 = vld [vmem:[#allocation27] sm:$0xff]
    %v2388 = vld [vmem:[#allocation27 + $0x8] sm:$0xff]
    %v2389 = vld [vmem:[#allocation27 + $0x10] sm:$0xff]
    %v2390 = vld [vmem:[#allocation27 + $0x18] sm:$0xff]
    %v2391 = vpack.c.bf16 %v2268, %v2268
    %v2392 = vpack.c.bf16 %v2388, %v2387
    %v2393 = vpack.c.bf16 %v2390, %v2389
    %v2394 = vld [vmem:[#allocation28] sm:$0x1]
    %v2396 = vlaneseq
    %v2397 = vshrl.u32 %v2396, 7
    %v2398 = vsub.s32 0, %v2397
    %v2399 = vrot.slane %v2394, %v2398
    %2402 = vrot.lane.b32.xlu0 %v2391, 96
    %v2403 = vpop.permute.xlu0 %2402
    %v2405 = vsel %vm494, %v2403, 0
    %2407 = vmatprep.subr.bf16.mxu0 0
    %2408 = vmatpush1.bf16.msra.mxu0 %v2392
    %2409 = vmatprep.subr.bf16.mxu0 0
    %2410 = vmatpush1.bf16.msra.mxu0 %v2393
    %2411 = vmatprep.subr.bf16.mxu0 0
    %2412 = vmatpush1.bf16.msra.mxu0 0
    %2413 = vmatprep.subr.bf16.mxu0 0
    %2414 = vmatpush1.bf16.msra.mxu0 0
    %2415 = vmatprep.subr.bf16.mxu0 0
    %2416 = vmatpush1.bf16.msra.mxu0 0
    %2417 = vmatprep.subr.bf16.mxu0 0
    %2418 = vmatpush1.bf16.msra.mxu0 0
    %2419 = vmatprep.subr.bf16.mxu0 0
    %2420 = vmatpush1.bf16.msra.mxu0 0
    %2421 = vmatprep.subr.bf16.mxu0 0
    %2422 = vmatpush1.bf16.msra.mxu0 0
    %2423 = vmatprep.subr.bf16.mxu0 0
    %2424 = vmatpush1.bf16.msra.mxu0 0
    %2425 = vmatprep.subr.bf16.mxu0 0
    %2426 = vmatpush1.bf16.msra.mxu0 0
    %2427 = vmatprep.subr.bf16.mxu0 0
    %2428 = vmatpush1.bf16.msra.mxu0 0
    %2429 = vmatprep.subr.bf16.mxu0 0
    %2430 = vmatpush1.bf16.msra.mxu0 0
    %2431 = vmatprep.subr.bf16.mxu0 0
    %2432 = vmatpush1.bf16.msra.mxu0 0
    %2433 = vmatprep.subr.bf16.mxu0 0
    %2434 = vmatpush1.bf16.msra.mxu0 0
    %2435 = vmatprep.subr.bf16.mxu0 0
    %2436 = vmatpush1.bf16.msra.mxu0 0
    %2437 = vmatprep.subr.bf16.mxu0 0
    %2438 = vmatpush1.bf16.msra.mxu0 0
    %2439 = vmatprep.mubr.bf16.mxu0 0
    %2440 = vmatmul.mubr.bf16.gmra.mrb[0].mxu0 %v2405
    %v2441 = vpop.f32.mrb[0].mxu0
    %v2442 = vadd.f32 %v2399, %v2441
    %v2443 = vpop.f32.mrb[0].mxu0
    %v2444 = vpop.f32.mrb[0].mxu0
    %v2445 = vpop.f32.mrb[0].mxu0
    %2446 = vdwg.mxu0
    %v2447 = vmax.f32 %v2442, 0.0
    %v2448 = vld [vmem:[%s17] sm:$0xff]
    %v2449 = vld [vmem:[%s17 + $0x8] sm:$0xff]
    %v2450 = vld [vmem:[%s17 + $0x10] sm:$0xff]
    %v2451 = vld [vmem:[%s17 + $0x18] sm:$0xff]
    %v2452 = vpack.c.bf16 %v2447, %v2447
    %v2453 = vpack.c.bf16 %v2449, %v2448
    %v2454 = vpack.c.bf16 %v2451, %v2450
    %v2455 = vld [vmem:[%s18] sm:$0x1]
    %v2457 = vlaneseq
    %v2458 = vshrl.u32 %v2457, 7
    %v2459 = vsub.s32 0, %v2458
    %v2460 = vrot.slane %v2455, %v2459
    %v2463 = vsel %vm494, %v2452, 0
    %2465 = vmatprep.subr.bf16.mxu0 0
    %2466 = vmatpush1.bf16.msra.mxu0 %v2453
    %2467 = vmatprep.subr.bf16.mxu0 0
    %2468 = vmatpush1.bf16.msra.mxu0 %v2454
    %2469 = vmatprep.subr.bf16.mxu0 0
    %2470 = vmatpush1.bf16.msra.mxu0 0
    %2471 = vmatprep.subr.bf16.mxu0 0
    %2472 = vmatpush1.bf16.msra.mxu0 0
    %2473 = vmatprep.subr.bf16.mxu0 0
    %2474 = vmatpush1.bf16.msra.mxu0 0
    %2475 = vmatprep.subr.bf16.mxu0 0
    %2476 = vmatpush1.bf16.msra.mxu0 0
    %2477 = vmatprep.subr.bf16.mxu0 0
    %2478 = vmatpush1.bf16.msra.mxu0 0
    %2479 = vmatprep.subr.bf16.mxu0 0
    %2480 = vmatpush1.bf16.msra.mxu0 0
    %2481 = vmatprep.subr.bf16.mxu0 0
    %2482 = vmatpush1.bf16.msra.mxu0 0
    %2483 = vmatprep.subr.bf16.mxu0 0
    %2484 = vmatpush1.bf16.msra.mxu0 0
    %2485 = vmatprep.subr.bf16.mxu0 0
    %2486 = vmatpush1.bf16.msra.mxu0 0
    %2487 = vmatprep.subr.bf16.mxu0 0
    %2488 = vmatpush1.bf16.msra.mxu0 0
    %2489 = vmatprep.subr.bf16.mxu0 0
    %2490 = vmatpush1.bf16.msra.mxu0 0
    %2491 = vmatprep.subr.bf16.mxu0 0
    %2492 = vmatpush1.bf16.msra.mxu0 0
    %2493 = vmatprep.subr.bf16.mxu0 0
    %2494 = vmatpush1.bf16.msra.mxu0 0
    %2495 = vmatprep.subr.bf16.mxu0 0
    %2496 = vmatpush1.bf16.msra.mxu0 0
    %2497 = vmatprep.mubr.bf16.mxu0 0
    %2498 = vmatmul.mubr.bf16.gmra.mrb[0].mxu0 %v2463
    %v2499 = vpop.f32.mrb[0].mxu0
    %v2500 = vadd.f32 %v2460, %v2499
    %v2501 = vpop.f32.mrb[0].mxu0
    %v2502 = vpop.f32.mrb[0].mxu0
    %v2503 = vpop.f32.mrb[0].mxu0
    %2504 = vdwg.mxu0
    %v2505 = vld [vmem:[%s19] sm:$0xff]
    %v2506 = vld [vmem:[%s19 + $0x8] sm:$0xff]
    %v2507 = vld [vmem:[%s19 + $0x10] sm:$0xff]
    %v2508 = vld [vmem:[%s19 + $0x18] sm:$0xff]
    %v2509 = vld [vmem:[%s19 + $0x20] sm:$0xff]
    %v2510 = vld [vmem:[%s19 + $0x28] sm:$0xff]
    %v2511 = vld [vmem:[%s19 + $0x30] sm:$0x3]
    %v2512 = vpack.c.bf16 %v2382, %v2382
    %v2513 = vpack.c.bf16 %v2506, %v2505
    %v2514 = vpack.c.bf16 %v2508, %v2507
    %v2515 = vpack.c.bf16 %v2510, %v2509
    %v2516 = vpack.c.bf16 %v2511, %v2511
    %v2517 = vld [vmem:[%s20] sm:$0xff]
    %v2518 = vld [vmem:[%s20 + $0x8] sm:$0xff]
    %v2519 = vld [vmem:[%s20 + $0x10] sm:$0xff]
    %v2520 = vld [vmem:[%s20 + $0x18] sm:$0xff]
    %v2521 = vld [vmem:[%s20 + $0x20] sm:$0xff]
    %v2522 = vld [vmem:[%s20 + $0x28] sm:$0xff]
    %v2523 = vld [vmem:[%s20 + $0x30] sm:$0x3]
    %v2524 = vpack.c.bf16 %v2500, %v2500
    %v2525 = vpack.c.bf16 %v2518, %v2517
    %v2526 = vpack.c.bf16 %v2520, %v2519
    %v2527 = vpack.c.bf16 %v2522, %v2521
    %v2528 = vpack.c.bf16 %v2523, %v2523
    %vm2529 = vcmask 408576
    %v2531 = vsel %vm2529, %v2524, 0
    %vm2533 = vcmask 1040384
    %v2535 = vsel %vm2533, %v2528, 0
    %2537 = vmatprep.subr.bf16.mxu0 0
    %2538 = vmatpush1.bf16.msra.mxu0 %v2525
    %2539 = vmatprep.subr.bf16.mxu0 0
    %2540 = vmatpush1.bf16.msra.mxu0 %v2526
    %2541 = vmatprep.subr.bf16.mxu0 0
    %2542 = vmatpush1.bf16.msra.mxu0 %v2527
    %2543 = vmatprep.subr.bf16.mxu0 0
    %2544 = vmatpush1.bf16.msra.mxu0 %v2535
    %2545 = vmatprep.subr.bf16.mxu0 0
    %2546 = vmatpush1.bf16.msra.mxu0 0
    %2547 = vmatprep.subr.bf16.mxu0 0
    %2548 = vmatpush1.bf16.msra.mxu0 0
    %2549 = vmatprep.subr.bf16.mxu0 0
    %2550 = vmatpush1.bf16.msra.mxu0 0
    %2551 = vmatprep.subr.bf16.mxu0 0
    %2552 = vmatpush1.bf16.msra.mxu0 0
    %2553 = vmatprep.subr.bf16.mxu0 0
    %2554 = vmatpush1.bf16.msra.mxu0 0
    %2555 = vmatprep.subr.bf16.mxu0 0
    %2556 = vmatpush1.bf16.msra.mxu0 0
    %2557 = vmatprep.subr.bf16.mxu0 0
    %2558 = vmatpush1.bf16.msra.mxu0 0
    %2559 = vmatprep.subr.bf16.mxu0 0
    %2560 = vmatpush1.bf16.msra.mxu0 0
    %2561 = vmatprep.subr.bf16.mxu0 0
    %2562 = vmatpush1.bf16.msra.mxu0 0
    %2563 = vmatprep.subr.bf16.mxu0 0
    %2564 = vmatpush1.bf16.msra.mxu0 0
    %2565 = vmatprep.subr.bf16.mxu0 0
    %2566 = vmatpush1.bf16.msra.mxu0 0
    %2567 = vmatprep.subr.bf16.mxu0 0
    %2568 = vmatpush1.bf16.msra.mxu0 0
    %2569 = vmatprep.mubr.bf16.mxu0 0
    %2570 = vmatmul.mubr.bf16.gmra.mrb[0].mxu0 %v2531
    %v2571 = vpop.f32.mrb[0].mxu0
    %v2572 = vadd.f32 0.0, %v2571
    %v2573 = vpop.f32.mrb[0].mxu0
    %v2574 = vpop.f32.mrb[0].mxu0
    %v2575 = vpop.f32.mrb[0].mxu0
    %2576 = vdwg.mxu0
    %v2578 = vsel %vm2529, %v2512, 0
    %v2581 = vsel %vm2533, %v2516, 0
    %2583 = vmatprep.subr.bf16.mxu0 0
    %2584 = vmatpush1.bf16.msra.mxu0 %v2513
    %2585 = vmatprep.subr.bf16.mxu0 0
    %2586 = vmatpush1.bf16.msra.mxu0 %v2514
    %2587 = vmatprep.subr.bf16.mxu0 0
    %2588 = vmatpush1.bf16.msra.mxu0 %v2515
    %2589 = vmatprep.subr.bf16.mxu0 0
    %2590 = vmatpush1.bf16.msra.mxu0 %v2581
    %2591 = vmatprep.subr.bf16.mxu0 0
    %2592 = vmatpush1.bf16.msra.mxu0 0
    %2593 = vmatprep.subr.bf16.mxu0 0
    %2594 = vmatpush1.bf16.msra.mxu0 0
    %2595 = vmatprep.subr.bf16.mxu0 0
    %2596 = vmatpush1.bf16.msra.mxu0 0
    %2597 = vmatprep.subr.bf16.mxu0 0
    %2598 = vmatpush1.bf16.msra.mxu0 0
    %2599 = vmatprep.subr.bf16.mxu0 0
    %2600 = vmatpush1.bf16.msra.mxu0 0
    %2601 = vmatprep.subr.bf16.mxu0 0
    %2602 = vmatpush1.bf16.msra.mxu0 0
    %2603 = vmatprep.subr.bf16.mxu0 0
    %2604 = vmatpush1.bf16.msra.mxu0 0
    %2605 = vmatprep.subr.bf16.mxu0 0
    %2606 = vmatpush1.bf16.msra.mxu0 0
    %2607 = vmatprep.subr.bf16.mxu0 0
    %2608 = vmatpush1.bf16.msra.mxu0 0
    %2609 = vmatprep.subr.bf16.mxu0 0
    %2610 = vmatpush1.bf16.msra.mxu0 0
    %2611 = vmatprep.subr.bf16.mxu0 0
    %2612 = vmatpush1.bf16.msra.mxu0 0
    %2613 = vmatprep.subr.bf16.mxu0 0
    %2614 = vmatpush1.bf16.msra.mxu0 0
    %2615 = vmatprep.mubr.bf16.mxu0 0
    %2616 = vmatmul.mubr.bf16.gmra.mrb[0].mxu0 %v2578
    %v2617 = vpop.f32.mrb[0].mxu0
    %v2618 = vadd.f32 %v2572, %v2617
    %v2619 = vpop.f32.mrb[0].mxu0
    %v2620 = vpop.f32.mrb[0].mxu0
    %v2621 = vpop.f32.mrb[0].mxu0
    %2622 = vdwg.mxu0
    %v2623 = vld [vmem:[%s21] sm:$0x1]
    %v2625 = vlaneseq
    %v2626 = vshrl.u32 %v2625, 7
    %v2627 = vsub.s32 0, %v2626
    %v2628 = vrot.slane %v2623, %v2627
    %v2630 = vadd.f32 %v2618, %v2628
    %2631 = vmax.xlane.f32.xlu0 %v2630
    %v2632 = vpop.xlane.xlu0 %2631
    %v2633 = vsub.f32 %v2630, %v2632
    %v2634 = vmul.f32 %v2633, 1.442695
    %v2635 = vpow.pop %v2634
    %2636 = vadd.xlane.f32.xlu0 %v2635
    %v2637 = vpop.xlane.xlu0 %2636
    %v2638 = vlog2.pop %v2637
    %v2639 = vmul.f32 %v2638, 0.6931472
    %v2640 = vadd.f32 %v2639, %v2632
    %v2641 = vsub.f32 %v2630, %v2640
    %2642 = vst [vmem:[#allocation30] sm:$0xff] %v2641
    // Predicated region
    $region154: #{tpu_custom_call.1} parent=1 // pred_check
      _
    $region155: #{tpu_custom_call.1} parent=1 // pred_check_branch
      %2644 = sbr.rel (0) target = $region157
    $region156: #{tpu_custom_call.1} parent=1 // pred_region
      %s2646 = ssub.s32 128, 128
      %2647 = vsyncadd [#allocation6], %s2646
      %s2649 = sshll.u32 [#allocation30], 4
      %s2650 = int_to_ptr.vmem [resolvable:$true] %s2649
      %2652 = dma.vmem_to_hbm [thread:$0]  %s2650, 128, %s22, [#allocation6]
    $region157: #{tpu_custom_call.1} parent=1 // pred_fallthru
      _
    // Predicated region
    $region158: #{tpu_custom_call.1} parent=1 // pred_check
      _
    $region159: #{tpu_custom_call.1} parent=1 // pred_check_branch
      %2654 = sbr.rel (0) target = $region161
    $region160: #{tpu_custom_call.1} parent=1 // pred_region
      %2655 = dma.done [#allocation6], 128
    $region161: #{tpu_custom_call.1} parent=1 // pred_fallthru
      _
    %2656 = vsyncpa [#allocation5], 1
    %2657 = vsyncpa [#allocation8], 1
    %2658 = vsyncpa [#allocation11], 1
    %2659 = vsyncpa [#allocation14], 1
    %2660 = vsyncpa [#allocation17], 1
    %2661 = vsyncpa [#allocation20], 1
    %2662 = vsyncpa [#allocation23], 1
    %2663 = vsyncpa [#allocation26], 1
    %2664 = vsyncpa [#allocation29], 1
    %2665 = vsyncpa [#allocation6], 1

</llo_original>
